<compile_context>
chip_gen: v7x
topology: tpu7x:2x2x1
jax: 0.10.0
libtpu: 0.0.40
codegen_flags: <defaults>
</compile_context>

<pallas_src>
import math
from functools import partial

import numpy as np
import jax
import jax.numpy as jnp
from jax.experimental import pallas as pl
from jax.experimental.pallas import tpu as pltpu


_KSZ = 5          # Conv2d kernel_size (module spec)
_STRIDE = 3       # Conv2d stride (module spec)
_SPP_LEVEL = 3    # SPPLayer levels (module default)
_NUM_GRIDS = 21   # 1 + 4 + 16
_K2 = _KSZ * _KSZ # 25 taps
_K2P = 32         # taps zero-padded to an MXU/DMA friendly width


def _largest_divisor_leq(n, cap):
    cap = max(1, min(n, cap))
    for d in range(cap, 0, -1):
        if n % d == 0:
            return d
    return 1


# ---------------------------------------------------------------------------
# Kernel A: conv (patches @ weight) + bias + ReLU + SPP max pooling for a
# batch of G images per grid step.
# ---------------------------------------------------------------------------
def _conv_spp_kernel(x_ref, wct_ref, bc_ref, o_ref, *, g, pos, cell2):
    # x_ref  : (G*pos, 32)  im2col rows for G images, hierarchical order
    # wct_ref: (32, CO)     conv weight, taps x out-channels (zero-padded taps)
    # bc_ref : (1, CO)      conv bias
    # o_ref  : (G, 21, CO)  SPP features: row0=1x1, rows1:5=2x2, rows5:21=4x4
    conv = jnp.dot(x_ref[...], wct_ref[...], preferred_element_type=jnp.float32)
    conv = jnp.maximum(conv + bc_ref[...], 0.0)          # (G*pos, CO)
    co = conv.shape[-1]
    conv3 = conv.reshape(g, pos, co)                     # aligned regroup (pos % 16 == 0)

    # Level 2 (4x4 grid).  Positions are ordered (dy, dx, sy, sx, cy1, cx1),
    # so every contiguous 16-row run holds all 16 grid cells for one (dy, dx)
    # offset -> the per-cell max is an elementwise max across those runs.
    lvl2 = conv3[:, 0:16, :]
    for d in range(1, cell2):
        lvl2 = jnp.maximum(lvl2, conv3[:, d * 16:(d + 1) * 16, :])   # (G,16,CO)

    # Level 1 (2x2) folds the sy then sx bits; level 0 folds the rest.
    t8 = jnp.maximum(lvl2[:, 0:8, :], lvl2[:, 8:16, :])              # (G, 8,CO)
    lvl1 = jnp.maximum(t8[:, 0:4, :], t8[:, 4:8, :])                 # (G, 4,CO)
    t2 = jnp.maximum(lvl1[:, 0:2, :], lvl1[:, 2:4, :])               # (G, 2,CO)
    lvl0 = jnp.maximum(t2[:, 0:1, :], t2[:, 1:2, :])                 # (G, 1,CO)

    o_ref[...] = jnp.concatenate([lvl0, lvl1, lvl2], axis=1).astype(o_ref.dtype)


# ---------------------------------------------------------------------------
# Kernel B: Linear(1344->1024) + ReLU + Linear(1024->1) + Sigmoid.
# Grid: (row blocks "parallel", hidden chunks "arbitrary"/reduction).
# ---------------------------------------------------------------------------
def _mlp_kernel(f_ref, w1t_ref, b1_ref, w2t_ref, b2_ref, o_ref, acc_ref):
    j = pl.program_id(1)

    @pl.when(j == 0)
    def _():
        acc_ref[...] = jnp.zeros_like(acc_ref)

    h = jnp.dot(f_ref[...], w1t_ref[...], preferred_element_type=jnp.float32)
    h = jnp.maximum(h + b1_ref[...], 0.0)                             # (TN, TH)
    acc_ref[...] += jnp.dot(h, w2t_ref[...], preferred_element_type=jnp.float32)

    @pl.when(j == pl.num_programs(1) - 1)
    def _():
        y = acc_ref[...] + b2_ref[...]                                # (TN, 1)
        o_ref[...] = (1.0 / (1.0 + jnp.exp(-y))).astype(o_ref.dtype)  # sigmoid


# ---------------------------------------------------------------------------
# Static index bookkeeping (numpy, prepare-time only).
# ---------------------------------------------------------------------------
def _w1_column_perm(co):
    """Map our (21, co) feature layout -> PyTorch's SPP flatten order."""
    perm = np.empty((_NUM_GRIDS, co), dtype=np.int32)
    ch = np.arange(co)
    perm[0, :] = ch                                   # level 0 (1x1), ch-major
    for q in range(4):                                # level 1 (2x2), q = cy1*2+cx1
        perm[1 + q, :] = co + ch * 4 + q
    for c4 in range(16):                              # level 2 (4x4), c4 = (sy,sx,cy1,cx1)
        sy, sx = (c4 >> 3) & 1, (c4 >> 2) & 1
        cy1, cx1 = (c4 >> 1) & 1, c4 & 1
        gy, gx = 2 * cy1 + sy, 2 * cx1 + sx
        perm[5 + c4, :] = 5 * co + ch * 16 + gy * 4 + gx
    return perm.reshape(-1)


# ---------------------------------------------------------------------------
# One-time weight re-layout (NOT per-forward work).
# ---------------------------------------------------------------------------
def prepare_params(conv_w, conv_b, w1, b1, w2, b2):
    co = conv_w.shape[0]
    hidden = w1.shape[0]
    k1 = _NUM_GRIDS * co
    assert conv_w.shape == (co, 1, _KSZ, _KSZ)
    assert w1.shape == (hidden, k1) and w2.shape == (1, hidden)

    wct = jnp.transpose(conv_w.reshape(co, _K2))      # (25, co), tap order ky*5+kx
    wct = jnp.pad(wct, ((0, _K2P - _K2), (0, 0)))     # (32, co)
    bc2 = conv_b.reshape(1, co)

    w1t = jnp.transpose(w1[:, _w1_column_perm(co)])   # (1344, hidden), our order
    b1_2d = b1.reshape(1, hidden)
    w2t = jnp.transpose(w2)                           # (hidden, 1)
    b2_2d = b2.reshape(1, 1)
    return dict(wct=wct, bc=bc2, w1t=w1t, b1=b1_2d, w2t=w2t, b2=b2_2d)


# ---------------------------------------------------------------------------
# Forward pass.
# ---------------------------------------------------------------------------
@jax.jit
def weigh_estimator6_fwd(I, params):
    bs, one, c, h, w = I.shape
    assert one == 1
    n = bs * c

    wct, bc = params["wct"], params["bc"]
    w1t, b1, w2t, b2 = params["w1t"], params["b1"], params["w2t"], params["b2"]
    k2p, co = wct.shape
    k1, hidden = w1t.shape

    hc = (h - _KSZ) // _STRIDE + 1
    wc = (w - _KSZ) // _STRIDE + 1
    assert hc == wc and hc % 4 == 0, (
        "WeighEstimator6's SPP/Linear sizes require a square conv output "
        "divisible by 4 (e.g. h = w = 14, 26, 38, ...)")
    pos = hc * wc
    sy2, sx2 = hc // 4, wc // 4
    cell2 = sy2 * sx2
    assert k1 == _NUM_GRIDS * co

    # --- im2col, fused in XLA (single pass over I, no separate gather/pad) --
    # TODO(synk): the strided 5x5/stride-3 window extraction stays in XLA; the
    # conv matmul, ReLU, SPP pooling and both Linear layers run in Pallas.
    x2 = I.reshape(n, h, w).astype(jnp.float32)
    taps = [x2[:, ky::_STRIDE, kx::_STRIDE][:, :hc, :wc]
            for ky in range(_KSZ) for kx in range(_KSZ)]
    taps += [jnp.zeros_like(taps[0])] * (k2p - _K2)         # pad K: 25 -> 32
    pt = jnp.stack(taps, axis=-1)                           # (n, hc, wc, 32)
    # Hierarchical reorder: y=(cy1,sy,dy), x=(cx1,sx,dx) -> (dy,dx,sy,sx,cy1,cx1)
    pt = pt.reshape(n, 2, 2, sy2, 2, 2, sx2, k2p)           # (n,cy1,sy,dy,cx1,sx,dx,k)
    pt = pt.transpose(0, 3, 6, 2, 5, 1, 4, 7)               # (n,dy,dx,sy,sx,cy1,cx1,k)
    patches = pt.reshape(n * pos, k2p)

    # --- Kernel A: conv + ReLU + SPP, G images per grid step ----------------
    g = _largest_divisor_leq(n, max(1, 4096 // pos))        # keep block ~<= 2 MiB
    feats = pl.pallas_call(
        partial(_conv_spp_kernel, g=g, pos=pos, cell2=cell2),
        out_shape=jax.ShapeDtypeStruct((n, _NUM_GRIDS, co), jnp.float32),
        grid_spec=pltpu.PrefetchScalarGridSpec(
            num_scalar_prefetch=0,
            grid=(n // g,),
            in_specs=[
                pl.BlockSpec((g * pos, k2p), lambda i: (i, 0)),
                pl.BlockSpec((k2p, co), lambda i: (0, 0)),
                pl.BlockSpec((1, co), lambda i: (0, 0)),
            ],
            out_specs=pl.BlockSpec((g, _NUM_GRIDS, co), lambda i: (i, 0, 0)),
        ),
        compiler_params=pltpu.CompilerParams(
            dimension_semantics=("parallel",)),
    )(patches, wct, bc)

    # --- Kernel B: MLP head --------------------------------------------------
    f = feats.reshape(n, _NUM_GRIDS * co)   # contiguous collapse: free, no pad

    tn = n if n <= 256 else _largest_divisor_leq(n, 256)
    if tn % 8 != 0 and tn != n:
        tn = n                              # fall back to resident rows
    th = min(512, hidden)
    assert hidden % th == 0

    beta = pl.pallas_call(
        _mlp_kernel,
        out_shape=jax.ShapeDtypeStruct((n, 1), jnp.float32),
        grid_spec=pltpu.PrefetchScalarGridSpec(
            num_scalar_prefetch=0,
            grid=(n // tn, hidden // th),
            in_specs=[
                pl.BlockSpec((tn, k1), lambda i, j: (i, 0)),   # feature rows
                pl.BlockSpec((k1, th), lambda i, j: (0, j)),   # W1^T chunk (streamed)
                pl.BlockSpec((1, th), lambda i, j: (0, j)),    # b1 chunk
                pl.BlockSpec((th, 1), lambda i, j: (j, 0)),    # W2^T chunk
                pl.BlockSpec((1, 1), lambda i, j: (0, 0)),     # b2
            ],
            out_specs=pl.BlockSpec((tn, 1), lambda i, j: (i, 0)),
            scratch_shapes=[pltpu.VMEM((tn, 1), jnp.float32)],
        ),
        compiler_params=pltpu.CompilerParams(
            dimension_semantics=("parallel", "arbitrary")),
    )(f, w1t, b1, w2t, b2)

    return beta.reshape(bs, 1, c, 1, 1)


# ---------------------------------------------------------------------------
# Pure-JAX reference mirroring the PyTorch forward.
# ---------------------------------------------------------------------------
def weigh_estimator6_ref(I, conv_w, conv_b, w1, b1, w2, b2, spp_level=_SPP_LEVEL):
    bs, _, c, h, w = I.shape
    x = I.reshape(bs * c, 1, h, w)
    y = jax.lax.conv_general_dilated(
        x, conv_w, window_strides=(_STRIDE, _STRIDE), padding="VALID",
        dimension_numbers=("NCHW", "OIHW", "NCHW"),
        precision=jax.lax.Precision.HIGHEST)
    y = jnp.maximum(y + conv_b.reshape(1, -1, 1, 1), 0.0)
    n, co, hc, _ = y.shape
    feats = []
    for i in range(spp_level):
        k = hc // (2 ** i)
        pooled = jax.lax.reduce_window(
            y, -jnp.inf, jax.lax.max,
            window_dimensions=(1, 1, k, k), window_strides=(1, 1, k, k),
            padding="VALID")
        feats.append(pooled.reshape(n, -1))
    f = jnp.concatenate(feats, axis=-1)
    hdn = jnp.maximum(
        jnp.dot(f, w1.T, precision=jax.lax.Precision.HIGHEST) + b1, 0.0)
    beta = jax.nn.sigmoid(
        jnp.dot(hdn, w2.T, precision=jax.lax.Precision.HIGHEST) + b2)
    return beta.reshape(bs, 1, c, 1, 1)


if __name__ == "__main__":
    # Small shapes consistent with the module: bs=2, c=4, h=w=26
    # -> conv output 8x8, SPP grids 1+4+16=21, Linear(21*64 -> 1024 -> 1).
    bs, c, h, w = 2, 4, 26, 26
    co, hidden = 64, 1024
    feat_in = _NUM_GRIDS * co

    key = jax.random.PRNGKey(0)
    kI, kcw, kcb, k1w, k1b, k2w, k2b = jax.random.split(key, 7)

    I = jax.random.normal(kI, (bs, 1, c, h, w), dtype=jnp.float32)

    b_conv = 1.0 / math.sqrt(1 * _KSZ * _KSZ)
    conv_w = jax.random.uniform(kcw, (co, 1, _KSZ, _KSZ), jnp.float32, -b_conv, b_conv)
    conv_b = jax.random.uniform(kcb, (co,), jnp.float32, -b_conv, b_conv)

    b_l1 = 1.0 / math.sqrt(feat_in)
    w1 = jax.random.uniform(k1w, (hidden, feat_in), jnp.float32, -b_l1, b_l1)
    b1 = jax.random.uniform(k1b, (hidden,), jnp.float32, -b_l1, b_l1)

    b_l2 = 1.0 / math.sqrt(hidden)
    w2 = jax.random.uniform(k2w, (1, hidden), jnp.float32, -b_l2, b_l2)
    b2 = jax.random.uniform(k2b, (1,), jnp.float32, -b_l2, b_l2)

    params = prepare_params(conv_w, conv_b, w1, b1, w2, b2)

    out = jax.block_until_ready(weigh_estimator6_fwd(I, params))

    ref = weigh_estimator6_ref(I, conv_w, conv_b, w1, b1, w2, b2)
    assert out.shape == (bs, 1, c, 1, 1)
    max_err = float(jnp.max(jnp.abs(out - ref)))
    assert jnp.allclose(out, ref, atol=1e-4, rtol=1e-4), f"max abs err {max_err}"

    print("KERNEL_OK")
</pallas_src>

<mosaic_0001>
module attributes {stable_mosaic.version = 11 : i64} {
  func.func @_conv_spp_kernel(%arg0: i32, %arg1: memref<512x32xf32, #tpu.memory_space<vmem>>, %arg2: memref<32x64xf32, #tpu.memory_space<vmem>>, %arg3: memref<1x64xf32, #tpu.memory_space<vmem>>, %arg4: memref<8x21x64xf32, #tpu.memory_space<vmem>>) attributes {dimension_semantics = [#tpu.dimension_semantics<parallel>], iteration_bounds = array<i64: 1>, scalar_prefetch = 0 : i64, scratch_operands = 0 : i64, tpu.core_type = #tpu.core_type<tc>, window_params = [{transform_indices = @transform_0, window_bounds = array<i64: 512, 32>}, {pipeline_mode = #tpu.pipeline_mode<synchronous>, transform_indices = @transform_1, window_bounds = array<i64: 32, 64>}, {pipeline_mode = #tpu.pipeline_mode<synchronous>, transform_indices = @transform_2, window_bounds = array<i64: 1, 64>}, {transform_indices = @transform_3, window_bounds = array<i64: 8, 21, 64>}]} {
    %c0 = arith.constant 0 : index
    %c0_0 = arith.constant 0 : index
    %0 = vector.load %arg1[%c0, %c0_0] : memref<512x32xf32, #tpu.memory_space<vmem>>, vector<512x32xf32>
    %c0_1 = arith.constant 0 : index
    %c0_2 = arith.constant 0 : index
    %1 = vector.load %arg2[%c0_1, %c0_2] : memref<32x64xf32, #tpu.memory_space<vmem>>, vector<32x64xf32>
    %cst = arith.constant dense<0.000000e+00> : vector<512x64xf32>
    %2 = tpu.matmul %0, %1, %cst {dimension_numbers = #tpu.dot_dimension_numbers<[1], [0], [0], [1], [0, 0, 1, 1], [], []>} : vector<512x32xf32>, vector<32x64xf32>, vector<512x64xf32> -> vector<512x64xf32>
    %c0_3 = arith.constant 0 : index
    %c0_4 = arith.constant 0 : index
    %3 = vector.load %arg3[%c0_3, %c0_4] : memref<1x64xf32, #tpu.memory_space<vmem>>, vector<1x64xf32>
    %4 = vector.broadcast %3 : vector<1x64xf32> to vector<512x64xf32>
    %5 = arith.addf %2, %4 : vector<512x64xf32>
    %cst_5 = arith.constant 0.000000e+00 : f32
    %6 = vector.broadcast %cst_5 : f32 to vector<512x64xf32>
    %7 = arith.maximumf %5, %6 : vector<512x64xf32>
    %8 = vector.shape_cast %7 : vector<512x64xf32> to vector<8x64x64xf32>
    %9 = vector.extract_strided_slice %8 {offsets = [0, 0, 0], sizes = [8, 16, 64], strides = [1, 1, 1]} : vector<8x64x64xf32> to vector<8x16x64xf32>
    %10 = vector.extract_strided_slice %8 {offsets = [0, 16, 0], sizes = [8, 16, 64], strides = [1, 1, 1]} : vector<8x64x64xf32> to vector<8x16x64xf32>
    %11 = arith.maximumf %9, %10 : vector<8x16x64xf32>
    %12 = vector.extract_strided_slice %8 {offsets = [0, 32, 0], sizes = [8, 16, 64], strides = [1, 1, 1]} : vector<8x64x64xf32> to vector<8x16x64xf32>
    %13 = arith.maximumf %11, %12 : vector<8x16x64xf32>
    %14 = vector.extract_strided_slice %8 {offsets = [0, 48, 0], sizes = [8, 16, 64], strides = [1, 1, 1]} : vector<8x64x64xf32> to vector<8x16x64xf32>
    %15 = arith.maximumf %13, %14 : vector<8x16x64xf32>
    %16 = vector.extract_strided_slice %15 {offsets = [0, 0, 0], sizes = [8, 8, 64], strides = [1, 1, 1]} : vector<8x16x64xf32> to vector<8x8x64xf32>
    %17 = vector.extract_strided_slice %15 {offsets = [0, 8, 0], sizes = [8, 8, 64], strides = [1, 1, 1]} : vector<8x16x64xf32> to vector<8x8x64xf32>
    %18 = arith.maximumf %16, %17 : vector<8x8x64xf32>
    %19 = vector.extract_strided_slice %18 {offsets = [0, 0, 0], sizes = [8, 4, 64], strides = [1, 1, 1]} : vector<8x8x64xf32> to vector<8x4x64xf32>
    %20 = vector.extract_strided_slice %18 {offsets = [0, 4, 0], sizes = [8, 4, 64], strides = [1, 1, 1]} : vector<8x8x64xf32> to vector<8x4x64xf32>
    %21 = arith.maximumf %19, %20 : vector<8x4x64xf32>
    %22 = vector.extract_strided_slice %21 {offsets = [0, 0, 0], sizes = [8, 2, 64], strides = [1, 1, 1]} : vector<8x4x64xf32> to vector<8x2x64xf32>
    %23 = vector.extract_strided_slice %21 {offsets = [0, 2, 0], sizes = [8, 2, 64], strides = [1, 1, 1]} : vector<8x4x64xf32> to vector<8x2x64xf32>
    %24 = arith.maximumf %22, %23 : vector<8x2x64xf32>
    %25 = vector.extract_strided_slice %24 {offsets = [0, 0, 0], sizes = [8, 1, 64], strides = [1, 1, 1]} : vector<8x2x64xf32> to vector<8x1x64xf32>
    %26 = vector.extract_strided_slice %24 {offsets = [0, 1, 0], sizes = [8, 1, 64], strides = [1, 1, 1]} : vector<8x2x64xf32> to vector<8x1x64xf32>
    %27 = arith.maximumf %25, %26 : vector<8x1x64xf32>
    %28 = tpu.concatenate %27, %21, %15 in 1 : vector<8x1x64xf32>, vector<8x4x64xf32>, vector<8x16x64xf32> -> vector<8x21x64xf32>
    %c0_6 = arith.constant 0 : index
    %c0_7 = arith.constant 0 : index
    %c0_8 = arith.constant 0 : index
    %29 = vector.load %arg4[%c0_6, %c0_7, %c0_8] : memref<8x21x64xf32, #tpu.memory_space<vmem>>, vector<8x21x64xf32>
    tpu.vector_store %arg4[%c0_6, %c0_7, %c0_8], %28 {strides = array<i32>} : memref<8x21x64xf32, #tpu.memory_space<vmem>>, vector<8x21x64xf32>,
    return
  }
  func.func @transform_0(%arg0: i32) -> (i32, i32) {
    %c0_i32 = arith.constant 0 : i32
    %c0_i32_0 = arith.constant 0 : i32
    return %arg0, %c0_i32 : i32, i32
  }
  func.func @transform_1(%arg0: i32) -> (i32, i32) {
    %c0_i32 = arith.constant 0 : i32
    %c0_i32_0 = arith.constant 0 : i32
    %c0_i32_1 = arith.constant 0 : i32
    return %c0_i32, %c0_i32_0 : i32, i32
  }
  func.func @transform_2(%arg0: i32) -> (i32, i32) {
    %c0_i32 = arith.constant 0 : i32
    %c0_i32_0 = arith.constant 0 : i32
    %c0_i32_1 = arith.constant 0 : i32
    return %c0_i32, %c0_i32_0 : i32, i32
  }
  func.func @transform_3(%arg0: i32) -> (i32, i32, i32) {
    %c0_i32 = arith.constant 0 : i32
    %c0_i32_0 = arith.constant 0 : i32
    %c0_i32_1 = arith.constant 0 : i32
    return %arg0, %c0_i32, %c0_i32_0 : i32, i32, i32
  }
}

module attributes {stable_mosaic.version = 11 : i64} {
  func.func @_mlp_kernel(%arg0: i32, %arg1: i32, %arg2: memref<8x1344xf32, #tpu.memory_space<vmem>>, %arg3: memref<1344x512xf32, #tpu.memory_space<vmem>>, %arg4: memref<1x512xf32, #tpu.memory_space<vmem>>, %arg5: memref<512x1xf32, #tpu.memory_space<vmem>>, %arg6: memref<1x1xf32, #tpu.memory_space<vmem>>, %arg7: memref<8x1xf32, #tpu.memory_space<vmem>>, %arg8: memref<8x1xf32, #tpu.memory_space<vmem>>) attributes {dimension_semantics = [#tpu.dimension_semantics<parallel>, #tpu.dimension_semantics<arbitrary>], iteration_bounds = array<i64: 1, 2>, scalar_prefetch = 0 : i64, scratch_operands = 1 : i64, tpu.core_type = #tpu.core_type<tc>, window_params = [{transform_indices = @transform_0, window_bounds = array<i64: 8, 1344>}, {transform_indices = @transform_1, window_bounds = array<i64: 1344, 512>}, {transform_indices = @transform_2, window_bounds = array<i64: 1, 512>}, {transform_indices = @transform_3, window_bounds = array<i64: 512, 1>}, {pipeline_mode = #tpu.pipeline_mode<synchronous>, transform_indices = @transform_4, window_bounds = array<i64: 1, 1>}, {transform_indices = @transform_5, window_bounds = array<i64: 8, 1>}]} {
    %c0_i32 = arith.constant 0 : i32
    %0 = arith.cmpi eq, %arg1, %c0_i32 : i32
    %1 = arith.extui %0 : i1 to i32
    %c0_i32_0 = arith.constant 0 : i32
    %2 = arith.cmpi ne, %1, %c0_i32_0 : i32
    scf.if %2 {
      %cst_15 = arith.constant 0.000000e+00 : f32
      %19 = vector.broadcast %cst_15 : f32 to vector<8x1xf32>
      %c0_16 = arith.constant 0 : index
      %c0_17 = arith.constant 0 : index
      %20 = vector.load %arg8[%c0_16, %c0_17] : memref<8x1xf32, #tpu.memory_space<vmem>>, vector<8x1xf32>
      tpu.vector_store %arg8[%c0_16, %c0_17], %19 {strides = array<i32>} : memref<8x1xf32, #tpu.memory_space<vmem>>, vector<8x1xf32>,
    } else {
    }
    %c0 = arith.constant 0 : index
    %c0_1 = arith.constant 0 : index
    %3 = vector.load %arg2[%c0, %c0_1] : memref<8x1344xf32, #tpu.memory_space<vmem>>, vector<8x1344xf32>
    %c0_2 = arith.constant 0 : index
    %c0_3 = arith.constant 0 : index
    %4 = vector.load %arg3[%c0_2, %c0_3] : memref<1344x512xf32, #tpu.memory_space<vmem>>, vector<1344x512xf32>
    %cst = arith.constant dense<0.000000e+00> : vector<8x512xf32>
    %5 = tpu.matmul %3, %4, %cst {dimension_numbers = #tpu.dot_dimension_numbers<[1], [0], [0], [1], [0, 0, 1, 1], [], []>} : vector<8x1344xf32>, vector<1344x512xf32>, vector<8x512xf32> -> vector<8x512xf32>
    %c0_4 = arith.constant 0 : index
    %c0_5 = arith.constant 0 : index
    %6 = vector.load %arg4[%c0_4, %c0_5] : memref<1x512xf32, #tpu.memory_space<vmem>>, vector<1x512xf32>
    %7 = vector.broadcast %6 : vector<1x512xf32> to vector<8x512xf32>
    %8 = arith.addf %5, %7 : vector<8x512xf32>
    %cst_6 = arith.constant 0.000000e+00 : f32
    %9 = vector.broadcast %cst_6 : f32 to vector<8x512xf32>
    %10 = arith.maximumf %8, %9 : vector<8x512xf32>
    %c0_7 = arith.constant 0 : index
    %c0_8 = arith.constant 0 : index
    %11 = vector.load %arg8[%c0_7, %c0_8] : memref<8x1xf32, #tpu.memory_space<vmem>>, vector<8x1xf32>
    %c0_9 = arith.constant 0 : index
    %c0_10 = arith.constant 0 : index
    %12 = vector.load %arg5[%c0_9, %c0_10] : memref<512x1xf32, #tpu.memory_space<vmem>>, vector<512x1xf32>
    %cst_11 = arith.constant dense<0.000000e+00> : vector<8x1xf32>
    %13 = tpu.matmul %10, %12, %cst_11 {dimension_numbers = #tpu.dot_dimension_numbers<[1], [0], [0], [1], [0, 0, 1, 1], [], []>} : vector<8x512xf32>, vector<512x1xf32>, vector<8x1xf32> -> vector<8x1xf32>
    %14 = arith.addf %11, %13 : vector<8x1xf32>
    %c0_12 = arith.constant 0 : index
    %c0_13 = arith.constant 0 : index
    %15 = vector.load %arg8[%c0_12, %c0_13] : memref<8x1xf32, #tpu.memory_space<vmem>>, vector<8x1xf32>
    tpu.vector_store %arg8[%c0_12, %c0_13], %14 {strides = array<i32>} : memref<8x1xf32, #tpu.memory_space<vmem>>, vector<8x1xf32>,
    %c1_i32 = arith.constant 1 : i32
    %16 = arith.cmpi eq, %arg1, %c1_i32 : i32
    %17 = arith.extui %16 : i1 to i32
    %c0_i32_14 = arith.constant 0 : i32
    %18 = arith.cmpi ne, %17, %c0_i32_14 : i32
    scf.if %18 {
      %c0_15 = arith.constant 0 : index
      %c0_16 = arith.constant 0 : index
      %19 = vector.load %arg8[%c0_15, %c0_16] : memref<8x1xf32, #tpu.memory_space<vmem>>, vector<8x1xf32>
      %c0_17 = arith.constant 0 : index
      %c0_18 = arith.constant 0 : index
      %20 = vector.load %arg6[%c0_17, %c0_18] : memref<1x1xf32, #tpu.memory_space<vmem>>, vector<1x1xf32>
      %21 = vector.broadcast %20 : vector<1x1xf32> to vector<8x1xf32>
      %22 = arith.addf %19, %21 : vector<8x1xf32>
      %cst_19 = arith.constant 0.000000e+00 : f32
      %23 = vector.broadcast %cst_19 : f32 to vector<8x1xf32>
      %24 = arith.subf %23, %22 : vector<8x1xf32>
      %25 = math.exp %24 : vector<8x1xf32>
      %cst_20 = arith.constant 1.000000e+00 : f32
      %26 = vector.broadcast %cst_20 : f32 to vector<8x1xf32>
      %27 = arith.addf %26, %25 : vector<8x1xf32>
      %cst_21 = arith.constant 1.000000e+00 : f32
      %28 = vector.broadcast %cst_21 : f32 to vector<8x1xf32>
      %29 = arith.divf %28, %27 : vector<8x1xf32>
      %c0_22 = arith.constant 0 : index
      %c0_23 = arith.constant 0 : index
      %30 = vector.load %arg7[%c0_22, %c0_23] : memref<8x1xf32, #tpu.memory_space<vmem>>, vector<8x1xf32>
      tpu.vector_store %arg7[%c0_22, %c0_23], %29 {strides = array<i32>} : memref<8x1xf32, #tpu.memory_space<vmem>>, vector<8x1xf32>,
    } else {
    }
    return
  }
  func.func @transform_0(%arg0: i32, %arg1: i32) -> (i32, i32) {
    %c0_i32 = arith.constant 0 : i32
    %c0_i32_0 = arith.constant 0 : i32
    return %arg0, %c0_i32 : i32, i32
  }
  func.func @transform_1(%arg0: i32, %arg1: i32) -> (i32, i32) {
    %c0_i32 = arith.constant 0 : i32
    %c0_i32_0 = arith.constant 0 : i32
    return %c0_i32, %arg1 : i32, i32
  }
  func.func @transform_2(%arg0: i32, %arg1: i32) -> (i32, i32) {
    %c0_i32 = arith.constant 0 : i32
    %c0_i32_0 = arith.constant 0 : i32
    return %c0_i32, %arg1 : i32, i32
  }
  func.func @transform_3(%arg0: i32, %arg1: i32) -> (i32, i32) {
    %c0_i32 = arith.constant 0 : i32
    %c0_i32_0 = arith.constant 0 : i32
    return %arg1, %c0_i32 : i32, i32
  }
  func.func @transform_4(%arg0: i32, %arg1: i32) -> (i32, i32) {
    %c0_i32 = arith.constant 0 : i32
    %c0_i32_0 = arith.constant 0 : i32
    %c0_i32_1 = arith.constant 0 : i32
    return %c0_i32, %c0_i32_0 : i32, i32
  }
  func.func @transform_5(%arg0: i32, %arg1: i32) -> (i32, i32) {
    %c0_i32 = arith.constant 0 : i32
    %c0_i32_0 = arith.constant 0 : i32
    return %arg0, %c0_i32 : i32, i32
  }
}

</mosaic_0001>

<llo_original>
// kernel: weigh_estimator6_fwd.2
$region0: #{weigh_estimator6_fwd.2}
  #allocation0 [shape = 'u32[]', space=smem, size = 0x4, offset = 0x4, fixed_abs, tag = 'smem constant byte address 0x4 - core index']
  #allocation1 [shape = 'u32[144,128]{1,0:T(1,128)}', space=vmem, size = 0x12000, scoped, tag = 'internal scratch']
  %s0 = inlined_call_operand.vmem [shape: f32[512,32], index: 0, kind: input, shape index: {}]
  %s1 = inlined_call_operand.vmem [shape: f32[32,64], index: 1, kind: input, shape index: {}]
  %s2 = inlined_call_operand.vmem [shape: f32[1,64], index: 2, kind: input, shape index: {}]
  %s3 = inlined_call_operand.vmem [shape: f32[8,21,64], index: 3, kind: output, shape index: {}]
  %s4 = sld [smem:[#allocation0]]
  $region22: #{weigh_estimator6_fwd.2} parent=0
    _
  %s6 = ssub.s32 1, %s4
  %s7 = scalar_select 0, %s6, %s4
  // Predicated region
  $region2: #{weigh_estimator6_fwd.2} parent=0 // pred_check
    _
  $region3: #{weigh_estimator6_fwd.2} parent=0 // pred_check_branch
    %9 = sbr.rel (0) target = $region5
  $region4: #{weigh_estimator6_fwd.2} parent=0 // pred_region
    _
  $region5: #{weigh_estimator6_fwd.2} parent=0 // pred_fallthru
    _
  // Predicated region
  $region6: #{weigh_estimator6_fwd.2} parent=0 // pred_check
    _
  $region7: #{weigh_estimator6_fwd.2} parent=0 // pred_check_branch
    %11 = sbr.rel (0) target = $region9
  $region8: #{weigh_estimator6_fwd.2} parent=0 // pred_region
    _
  $region9: #{weigh_estimator6_fwd.2} parent=0 // pred_fallthru
    _
  // Predicated region
  $region10: #{weigh_estimator6_fwd.2} parent=0 // pred_check
    _
  $region11: #{weigh_estimator6_fwd.2} parent=0 // pred_check_branch
    %13 = sbr.rel (0) target = $region13
  $region12: #{weigh_estimator6_fwd.2} parent=0 // pred_region
    _
  $region13: #{weigh_estimator6_fwd.2} parent=0 // pred_fallthru
    _
  %v14 = vld [vmem:[%s0] sm:$0xff]
  %v15 = vld [vmem:[%s0 + $0x8] sm:$0xff]
  %v16 = vld [vmem:[%s0 + $0x10] sm:$0xff]
  %v17 = vld [vmem:[%s0 + $0x18] sm:$0xff]
  %v18 = vld [vmem:[%s0 + $0x20] sm:$0xff]
  %v19 = vld [vmem:[%s0 + $0x28] sm:$0xff]
  %v20 = vld [vmem:[%s0 + $0x30] sm:$0xff]
  %v21 = vld [vmem:[%s0 + $0x38] sm:$0xff]
  %v22 = vld [vmem:[%s0 + $0x40] sm:$0xff]
  %v23 = vld [vmem:[%s0 + $0x48] sm:$0xff]
  %v24 = vld [vmem:[%s0 + $0x50] sm:$0xff]
  %v25 = vld [vmem:[%s0 + $0x58] sm:$0xff]
  %v26 = vld [vmem:[%s0 + $0x60] sm:$0xff]
  %v27 = vld [vmem:[%s0 + $0x68] sm:$0xff]
  %v28 = vld [vmem:[%s0 + $0x70] sm:$0xff]
  %v29 = vld [vmem:[%s0 + $0x78] sm:$0xff]
  %v30 = vld [vmem:[%s0 + $0x80] sm:$0xff]
  %v31 = vld [vmem:[%s0 + $0x88] sm:$0xff]
  %v32 = vld [vmem:[%s0 + $0x90] sm:$0xff]
  %v33 = vld [vmem:[%s0 + $0x98] sm:$0xff]
  %v34 = vld [vmem:[%s0 + $0xa0] sm:$0xff]
  %v35 = vld [vmem:[%s0 + $0xa8] sm:$0xff]
  %v36 = vld [vmem:[%s0 + $0xb0] sm:$0xff]
  %v37 = vld [vmem:[%s0 + $0xb8] sm:$0xff]
  %v38 = vld [vmem:[%s0 + $0xc0] sm:$0xff]
  %v39 = vld [vmem:[%s0 + $0xc8] sm:$0xff]
  %v40 = vld [vmem:[%s0 + $0xd0] sm:$0xff]
  %v41 = vld [vmem:[%s0 + $0xd8] sm:$0xff]
  %v42 = vld [vmem:[%s0 + $0xe0] sm:$0xff]
  %v43 = vld [vmem:[%s0 + $0xe8] sm:$0xff]
  %v44 = vld [vmem:[%s0 + $0xf0] sm:$0xff]
  %v45 = vld [vmem:[%s0 + $0xf8] sm:$0xff]
  %v46 = vld [vmem:[%s0 + $0x100] sm:$0xff]
  %v47 = vld [vmem:[%s0 + $0x108] sm:$0xff]
  %v48 = vld [vmem:[%s0 + $0x110] sm:$0xff]
  %v49 = vld [vmem:[%s0 + $0x118] sm:$0xff]
  %v50 = vld [vmem:[%s0 + $0x120] sm:$0xff]
  %v51 = vld [vmem:[%s0 + $0x128] sm:$0xff]
  %v52 = vld [vmem:[%s0 + $0x130] sm:$0xff]
  %v53 = vld [vmem:[%s0 + $0x138] sm:$0xff]
  %v54 = vld [vmem:[%s0 + $0x140] sm:$0xff]
  %v55 = vld [vmem:[%s0 + $0x148] sm:$0xff]
  %v56 = vld [vmem:[%s0 + $0x150] sm:$0xff]
  %v57 = vld [vmem:[%s0 + $0x158] sm:$0xff]
  %v58 = vld [vmem:[%s0 + $0x160] sm:$0xff]
  %v59 = vld [vmem:[%s0 + $0x168] sm:$0xff]
  %v60 = vld [vmem:[%s0 + $0x170] sm:$0xff]
  %v61 = vld [vmem:[%s0 + $0x178] sm:$0xff]
  %v62 = vld [vmem:[%s0 + $0x180] sm:$0xff]
  %v63 = vld [vmem:[%s0 + $0x188] sm:$0xff]
  %v64 = vld [vmem:[%s0 + $0x190] sm:$0xff]
  %v65 = vld [vmem:[%s0 + $0x198] sm:$0xff]
  %v66 = vld [vmem:[%s0 + $0x1a0] sm:$0xff]
  %v67 = vld [vmem:[%s0 + $0x1a8] sm:$0xff]
  %v68 = vld [vmem:[%s0 + $0x1b0] sm:$0xff]
  %v69 = vld [vmem:[%s0 + $0x1b8] sm:$0xff]
  %v70 = vld [vmem:[%s0 + $0x1c0] sm:$0xff]
  %v71 = vld [vmem:[%s0 + $0x1c8] sm:$0xff]
  %v72 = vld [vmem:[%s0 + $0x1d0] sm:$0xff]
  %v73 = vld [vmem:[%s0 + $0x1d8] sm:$0xff]
  %v74 = vld [vmem:[%s0 + $0x1e0] sm:$0xff]
  %v75 = vld [vmem:[%s0 + $0x1e8] sm:$0xff]
  %v76 = vld [vmem:[%s0 + $0x1f0] sm:$0xff]
  %v77 = vld [vmem:[%s0 + $0x1f8] sm:$0xff]
  %v78 = vld [vmem:[%s1] sm:$0xff]
  %v79 = vld [vmem:[%s1 + $0x8] sm:$0xff]
  %v80 = vld [vmem:[%s1 + $0x10] sm:$0xff]
  %v81 = vld [vmem:[%s1 + $0x18] sm:$0xff]
  %v82 = vld [vmem:[%s2] sm:$0x1]
  %v84 = vlaneseq
  %v85 = vshrl.u32 %v84, 7
  %v86 = vsub.s32 0, %v85
  %v87 = vrot.slane %v82, %v86
  %vm89 = vcmask 261120
  %v91 = vsel %vm89, %v14, 0
  %v94 = vsel %vm89, %v15, 0
  %v97 = vsel %vm89, %v16, 0
  %v100 = vsel %vm89, %v17, 0
  %v103 = vsel %vm89, %v18, 0
  %v106 = vsel %vm89, %v19, 0
  %v109 = vsel %vm89, %v20, 0
  %v112 = vsel %vm89, %v21, 0
  %v115 = vsel %vm89, %v22, 0
  %v118 = vsel %vm89, %v23, 0
  %v121 = vsel %vm89, %v24, 0
  %v124 = vsel %vm89, %v25, 0
  %v127 = vsel %vm89, %v26, 0
  %v130 = vsel %vm89, %v27, 0
  %v133 = vsel %vm89, %v28, 0
  %v136 = vsel %vm89, %v29, 0
  %v139 = vsel %vm89, %v30, 0
  %v142 = vsel %vm89, %v31, 0
  %v145 = vsel %vm89, %v32, 0
  %v148 = vsel %vm89, %v33, 0
  %v151 = vsel %vm89, %v34, 0
  %v154 = vsel %vm89, %v35, 0
  %v157 = vsel %vm89, %v36, 0
  %v160 = vsel %vm89, %v37, 0
  %v163 = vsel %vm89, %v38, 0
  %v166 = vsel %vm89, %v39, 0
  %v169 = vsel %vm89, %v40, 0
  %v172 = vsel %vm89, %v41, 0
  %v175 = vsel %vm89, %v42, 0
  %v178 = vsel %vm89, %v43, 0
  %v181 = vsel %vm89, %v44, 0
  %v184 = vsel %vm89, %v45, 0
  %v187 = vsel %vm89, %v46, 0
  %v190 = vsel %vm89, %v47, 0
  %v193 = vsel %vm89, %v48, 0
  %v196 = vsel %vm89, %v49, 0
  %v199 = vsel %vm89, %v50, 0
  %v202 = vsel %vm89, %v51, 0
  %v205 = vsel %vm89, %v52, 0
  %v208 = vsel %vm89, %v53, 0
  %v211 = vsel %vm89, %v54, 0
  %v214 = vsel %vm89, %v55, 0
  %v217 = vsel %vm89, %v56, 0
  %v220 = vsel %vm89, %v57, 0
  %v223 = vsel %vm89, %v58, 0
  %v226 = vsel %vm89, %v59, 0
  %v229 = vsel %vm89, %v60, 0
  %v232 = vsel %vm89, %v61, 0
  %v235 = vsel %vm89, %v62, 0
  %v238 = vsel %vm89, %v63, 0
  %v241 = vsel %vm89, %v64, 0
  %v244 = vsel %vm89, %v65, 0
  %v247 = vsel %vm89, %v66, 0
  %v250 = vsel %vm89, %v67, 0
  %v253 = vsel %vm89, %v68, 0
  %v256 = vsel %vm89, %v69, 0
  %v259 = vsel %vm89, %v70, 0
  %v262 = vsel %vm89, %v71, 0
  %v265 = vsel %vm89, %v72, 0
  %v268 = vsel %vm89, %v73, 0
  %v271 = vsel %vm89, %v74, 0
  %v274 = vsel %vm89, %v75, 0
  %v277 = vsel %vm89, %v76, 0
  %v280 = vsel %vm89, %v77, 0
  %282 = vmatprep.subr.mxu0 0.0
  %283 = vmatpush1.msra.mxu0 %v78
  %284 = vmatprep.subr.mxu0 0.0
  %285 = vmatpush1.msra.mxu0 %v79
  %286 = vmatprep.subr.mxu0 0.0
  %287 = vmatpush1.msra.mxu0 %v80
  %288 = vmatprep.subr.mxu0 0.0
  %289 = vmatpush1.msra.mxu0 %v81
  %290 = vmatprep.subr.mxu0 0.0
  %291 = vmatpush1.msra.mxu0 0.0
  %292 = vmatprep.subr.mxu0 0.0
  %293 = vmatpush1.msra.mxu0 0.0
  %294 = vmatprep.subr.mxu0 0.0
  %295 = vmatpush1.msra.mxu0 0.0
  %296 = vmatprep.subr.mxu0 0.0
  %297 = vmatpush1.msra.mxu0 0.0
  %298 = vmatprep.subr.mxu0 0.0
  %299 = vmatpush1.msra.mxu0 0.0
  %300 = vmatprep.subr.mxu0 0.0
  %301 = vmatpush1.msra.mxu0 0.0
  %302 = vmatprep.subr.mxu0 0.0
  %303 = vmatpush1.msra.mxu0 0.0
  %304 = vmatprep.subr.mxu0 0.0
  %305 = vmatpush1.msra.mxu0 0.0
  %306 = vmatprep.subr.mxu0 0.0
  %307 = vmatpush1.msra.mxu0 0.0
  %308 = vmatprep.subr.mxu0 0.0
  %309 = vmatpush1.msra.mxu0 0.0
  %310 = vmatprep.subr.mxu0 0.0
  %311 = vmatpush1.msra.mxu0 0.0
  %312 = vmatprep.subr.mxu0 0.0
  %313 = vmatpush1.msra.mxu0 0.0
  %314 = vmatprep.subr.mxu0 0.0
  %315 = vmatpush1.msra.mxu0 0.0
  %316 = vmatprep.subr.mxu0 0.0
  %317 = vmatpush1.msra.mxu0 0.0
  %318 = vmatprep.subr.mxu0 0.0
  %319 = vmatpush1.msra.mxu0 0.0
  %320 = vmatprep.subr.mxu0 0.0
  %321 = vmatpush1.msra.mxu0 0.0
  %322 = vmatprep.subr.mxu0 0.0
  %323 = vmatpush1.msra.mxu0 0.0
  %324 = vmatprep.subr.mxu0 0.0
  %325 = vmatpush1.msra.mxu0 0.0
  %326 = vmatprep.subr.mxu0 0.0
  %327 = vmatpush1.msra.mxu0 0.0
  %328 = vmatprep.subr.mxu0 0.0
  %329 = vmatpush1.msra.mxu0 0.0
  %330 = vmatprep.subr.mxu0 0.0
  %331 = vmatpush1.msra.mxu0 0.0
  %332 = vmatprep.subr.mxu0 0.0
  %333 = vmatpush1.msra.mxu0 0.0
  %334 = vmatprep.subr.mxu0 0.0
  %335 = vmatpush1.msra.mxu0 0.0
  %336 = vmatprep.subr.mxu0 0.0
  %337 = vmatpush1.msra.mxu0 0.0
  %338 = vmatprep.subr.mxu0 0.0
  %339 = vmatpush1.msra.mxu0 0.0
  %340 = vmatprep.subr.mxu0 0.0
  %341 = vmatpush1.msra.mxu0 0.0
  %342 = vmatprep.subr.mxu0 0.0
  %343 = vmatpush1.msra.mxu0 0.0
  %344 = vmatprep.subr.mxu0 0.0
  %345 = vmatpush1.msra.mxu0 0.0
  %346 = vmatprep.mubr.f32.mxu0 0.0
  %347 = vmatmul.mubr.f32.gmra.mrb[0].mxu0 %v91
  %v348 = vpop.f32.mrb[0].mxu0
  %v349 = vadd.f32 %v87, %v348
  %v350 = vpop.f32.mrb[0].mxu0
  %351 = vmatprep.mubr.f32.mxu0 0.0
  %352 = vmatmul.mubr.f32.gmra.mrb[0].mxu0 %v94
  %v353 = vpop.f32.mrb[0].mxu0
  %v354 = vadd.f32 %v87, %v353
  %v355 = vpop.f32.mrb[0].mxu0
  %356 = vmatprep.mubr.f32.mxu0 0.0
  %357 = vmatmul.mubr.f32.gmra.mrb[0].mxu0 %v97
  %v358 = vpop.f32.mrb[0].mxu0
  %v359 = vadd.f32 %v87, %v358
  %v360 = vpop.f32.mrb[0].mxu0
  %361 = vmatprep.mubr.f32.mxu0 0.0
  %362 = vmatmul.mubr.f32.gmra.mrb[0].mxu0 %v100
  %v363 = vpop.f32.mrb[0].mxu0
  %v364 = vadd.f32 %v87, %v363
  %v365 = vpop.f32.mrb[0].mxu0
  %366 = vmatprep.mubr.f32.mxu0 0.0
  %367 = vmatmul.mubr.f32.gmra.mrb[0].mxu0 %v103
  %v368 = vpop.f32.mrb[0].mxu0
  %v369 = vadd.f32 %v87, %v368
  %v370 = vpop.f32.mrb[0].mxu0
  %371 = vmatprep.mubr.f32.mxu0 0.0
  %372 = vmatmul.mubr.f32.gmra.mrb[0].mxu0 %v106
  %v373 = vpop.f32.mrb[0].mxu0
  %v374 = vadd.f32 %v87, %v373
  %v375 = vpop.f32.mrb[0].mxu0
  %376 = vmatprep.mubr.f32.mxu0 0.0
  %377 = vmatmul.mubr.f32.gmra.mrb[0].mxu0 %v109
  %v378 = vpop.f32.mrb[0].mxu0
  %v379 = vadd.f32 %v87, %v378
  %v380 = vpop.f32.mrb[0].mxu0
  %381 = vmatprep.mubr.f32.mxu0 0.0
  %382 = vmatmul.mubr.f32.gmra.mrb[0].mxu0 %v112
  %v383 = vpop.f32.mrb[0].mxu0
  %v384 = vadd.f32 %v87, %v383
  %v385 = vpop.f32.mrb[0].mxu0
  %386 = vmatprep.mubr.f32.mxu0 0.0
  %387 = vmatmul.mubr.f32.gmra.mrb[0].mxu0 %v115
  %v388 = vpop.f32.mrb[0].mxu0
  %v389 = vadd.f32 %v87, %v388
  %v390 = vpop.f32.mrb[0].mxu0
  %391 = vmatprep.mubr.f32.mxu0 0.0
  %392 = vmatmul.mubr.f32.gmra.mrb[0].mxu0 %v118
  %v393 = vpop.f32.mrb[0].mxu0
  %v394 = vadd.f32 %v87, %v393
  %v395 = vpop.f32.mrb[0].mxu0
  %396 = vmatprep.mubr.f32.mxu0 0.0
  %397 = vmatmul.mubr.f32.gmra.mrb[0].mxu0 %v121
  %v398 = vpop.f32.mrb[0].mxu0
  %v399 = vadd.f32 %v87, %v398
  %v400 = vpop.f32.mrb[0].mxu0
  %401 = vmatprep.mubr.f32.mxu0 0.0
  %402 = vmatmul.mubr.f32.gmra.mrb[0].mxu0 %v124
  %v403 = vpop.f32.mrb[0].mxu0
  %v404 = vadd.f32 %v87, %v403
  %v405 = vpop.f32.mrb[0].mxu0
  %406 = vmatprep.mubr.f32.mxu0 0.0
  %407 = vmatmul.mubr.f32.gmra.mrb[0].mxu0 %v127
  %v408 = vpop.f32.mrb[0].mxu0
  %v409 = vadd.f32 %v87, %v408
  %v410 = vpop.f32.mrb[0].mxu0
  %411 = vmatprep.mubr.f32.mxu0 0.0
  %412 = vmatmul.mubr.f32.gmra.mrb[0].mxu0 %v130
  %v413 = vpop.f32.mrb[0].mxu0
  %v414 = vadd.f32 %v87, %v413
  %v415 = vpop.f32.mrb[0].mxu0
  %416 = vmatprep.mubr.f32.mxu0 0.0
  %417 = vmatmul.mubr.f32.gmra.mrb[0].mxu0 %v133
  %v418 = vpop.f32.mrb[0].mxu0
  %v419 = vadd.f32 %v87, %v418
  %v420 = vpop.f32.mrb[0].mxu0
  %421 = vmatprep.mubr.f32.mxu0 0.0
  %422 = vmatmul.mubr.f32.gmra.mrb[0].mxu0 %v136
  %v423 = vpop.f32.mrb[0].mxu0
  %v424 = vadd.f32 %v87, %v423
  %v425 = vpop.f32.mrb[0].mxu0
  %426 = vmatprep.mubr.f32.mxu0 0.0
  %427 = vmatmul.mubr.f32.gmra.mrb[0].mxu0 %v139
  %v428 = vpop.f32.mrb[0].mxu0
  %v429 = vadd.f32 %v87, %v428
  %v430 = vpop.f32.mrb[0].mxu0
  %431 = vmatprep.mubr.f32.mxu0 0.0
  %432 = vmatmul.mubr.f32.gmra.mrb[0].mxu0 %v142
  %v433 = vpop.f32.mrb[0].mxu0
  %v434 = vadd.f32 %v87, %v433
  %v435 = vpop.f32.mrb[0].mxu0
  %436 = vmatprep.mubr.f32.mxu0 0.0
  %437 = vmatmul.mubr.f32.gmra.mrb[0].mxu0 %v145
  %v438 = vpop.f32.mrb[0].mxu0
  %v439 = vadd.f32 %v87, %v438
  %v440 = vpop.f32.mrb[0].mxu0
  %441 = vmatprep.mubr.f32.mxu0 0.0
  %442 = vmatmul.mubr.f32.gmra.mrb[0].mxu0 %v148
  %v443 = vpop.f32.mrb[0].mxu0
  %v444 = vadd.f32 %v87, %v443
  %v445 = vpop.f32.mrb[0].mxu0
  %446 = vmatprep.mubr.f32.mxu0 0.0
  %447 = vmatmul.mubr.f32.gmra.mrb[0].mxu0 %v151
  %v448 = vpop.f32.mrb[0].mxu0
  %v449 = vadd.f32 %v87, %v448
  %v450 = vpop.f32.mrb[0].mxu0
  %451 = vmatprep.mubr.f32.mxu0 0.0
  %452 = vmatmul.mubr.f32.gmra.mrb[0].mxu0 %v154
  %v453 = vpop.f32.mrb[0].mxu0
  %v454 = vadd.f32 %v87, %v453
  %v455 = vpop.f32.mrb[0].mxu0
  %456 = vmatprep.mubr.f32.mxu0 0.0
  %457 = vmatmul.mubr.f32.gmra.mrb[0].mxu0 %v157
  %v458 = vpop.f32.mrb[0].mxu0
  %v459 = vadd.f32 %v87, %v458
  %v460 = vpop.f32.mrb[0].mxu0
  %461 = vmatprep.mubr.f32.mxu0 0.0
  %462 = vmatmul.mubr.f32.gmra.mrb[0].mxu0 %v160
  %v463 = vpop.f32.mrb[0].mxu0
  %v464 = vadd.f32 %v87, %v463
  %v465 = vpop.f32.mrb[0].mxu0
  %466 = vmatprep.mubr.f32.mxu0 0.0
  %467 = vmatmul.mubr.f32.gmra.mrb[0].mxu0 %v163
  %v468 = vpop.f32.mrb[0].mxu0
  %v469 = vadd.f32 %v87, %v468
  %v470 = vpop.f32.mrb[0].mxu0
  %471 = vmatprep.mubr.f32.mxu0 0.0
  %472 = vmatmul.mubr.f32.gmra.mrb[0].mxu0 %v166
  %v473 = vpop.f32.mrb[0].mxu0
  %v474 = vadd.f32 %v87, %v473
  %v475 = vpop.f32.mrb[0].mxu0
  %476 = vmatprep.mubr.f32.mxu0 0.0
  %477 = vmatmul.mubr.f32.gmra.mrb[0].mxu0 %v169
  %v478 = vpop.f32.mrb[0].mxu0
  %v479 = vadd.f32 %v87, %v478
  %v480 = vpop.f32.mrb[0].mxu0
  %481 = vmatprep.mubr.f32.mxu0 0.0
  %482 = vmatmul.mubr.f32.gmra.mrb[0].mxu0 %v172
  %v483 = vpop.f32.mrb[0].mxu0
  %v484 = vadd.f32 %v87, %v483
  %v485 = vpop.f32.mrb[0].mxu0
  %486 = vmatprep.mubr.f32.mxu0 0.0
  %487 = vmatmul.mubr.f32.gmra.mrb[0].mxu0 %v175
  %v488 = vpop.f32.mrb[0].mxu0
  %v489 = vadd.f32 %v87, %v488
  %v490 = vpop.f32.mrb[0].mxu0
  %491 = vmatprep.mubr.f32.mxu0 0.0
  %492 = vmatmul.mubr.f32.gmra.mrb[0].mxu0 %v178
  %v493 = vpop.f32.mrb[0].mxu0
  %v494 = vadd.f32 %v87, %v493
  %v495 = vpop.f32.mrb[0].mxu0
  %496 = vmatprep.mubr.f32.mxu0 0.0
  %497 = vmatmul.mubr.f32.gmra.mrb[0].mxu0 %v181
  %v498 = vpop.f32.mrb[0].mxu0
  %v499 = vadd.f32 %v87, %v498
  %v500 = vpop.f32.mrb[0].mxu0
  %501 = vmatprep.mubr.f32.mxu0 0.0
  %502 = vmatmul.mubr.f32.gmra.mrb[0].mxu0 %v184
  %v503 = vpop.f32.mrb[0].mxu0
  %v504 = vadd.f32 %v87, %v503
  %v505 = vpop.f32.mrb[0].mxu0
  %506 = vmatprep.mubr.f32.mxu0 0.0
  %507 = vmatmul.mubr.f32.gmra.mrb[0].mxu0 %v187
  %v508 = vpop.f32.mrb[0].mxu0
  %v509 = vadd.f32 %v87, %v508
  %v510 = vpop.f32.mrb[0].mxu0
  %511 = vmatprep.mubr.f32.mxu0 0.0
  %512 = vmatmul.mubr.f32.gmra.mrb[0].mxu0 %v190
  %v513 = vpop.f32.mrb[0].mxu0
  %v514 = vadd.f32 %v87, %v513
  %v515 = vpop.f32.mrb[0].mxu0
  %516 = vmatprep.mubr.f32.mxu0 0.0
  %517 = vmatmul.mubr.f32.gmra.mrb[0].mxu0 %v193
  %v518 = vpop.f32.mrb[0].mxu0
  %v519 = vadd.f32 %v87, %v518
  %v520 = vpop.f32.mrb[0].mxu0
  %521 = vmatprep.mubr.f32.mxu0 0.0
  %522 = vmatmul.mubr.f32.gmra.mrb[0].mxu0 %v196
  %v523 = vpop.f32.mrb[0].mxu0
  %v524 = vadd.f32 %v87, %v523
  %v525 = vpop.f32.mrb[0].mxu0
  %526 = vmatprep.mubr.f32.mxu0 0.0
  %527 = vmatmul.mubr.f32.gmra.mrb[0].mxu0 %v199
  %v528 = vpop.f32.mrb[0].mxu0
  %v529 = vadd.f32 %v87, %v528
  %v530 = vpop.f32.mrb[0].mxu0
  %531 = vmatprep.mubr.f32.mxu0 0.0
  %532 = vmatmul.mubr.f32.gmra.mrb[0].mxu0 %v202
  %v533 = vpop.f32.mrb[0].mxu0
  %v534 = vadd.f32 %v87, %v533
  %v535 = vpop.f32.mrb[0].mxu0
  %536 = vmatprep.mubr.f32.mxu0 0.0
  %537 = vmatmul.mubr.f32.gmra.mrb[0].mxu0 %v205
  %v538 = vpop.f32.mrb[0].mxu0
  %v539 = vadd.f32 %v87, %v538
  %v540 = vpop.f32.mrb[0].mxu0
  %541 = vmatprep.mubr.f32.mxu0 0.0
  %542 = vmatmul.mubr.f32.gmra.mrb[0].mxu0 %v208
  %v543 = vpop.f32.mrb[0].mxu0
  %v544 = vadd.f32 %v87, %v543
  %v545 = vpop.f32.mrb[0].mxu0
  %546 = vmatprep.mubr.f32.mxu0 0.0
  %547 = vmatmul.mubr.f32.gmra.mrb[0].mxu0 %v211
  %v548 = vpop.f32.mrb[0].mxu0
  %v549 = vadd.f32 %v87, %v548
  %v550 = vpop.f32.mrb[0].mxu0
  %551 = vmatprep.mubr.f32.mxu0 0.0
  %552 = vmatmul.mubr.f32.gmra.mrb[0].mxu0 %v214
  %v553 = vpop.f32.mrb[0].mxu0
  %v554 = vadd.f32 %v87, %v553
  %v555 = vpop.f32.mrb[0].mxu0
  %556 = vmatprep.mubr.f32.mxu0 0.0
  %557 = vmatmul.mubr.f32.gmra.mrb[0].mxu0 %v217
  %v558 = vpop.f32.mrb[0].mxu0
  %v559 = vadd.f32 %v87, %v558
  %v560 = vpop.f32.mrb[0].mxu0
  %561 = vmatprep.mubr.f32.mxu0 0.0
  %562 = vmatmul.mubr.f32.gmra.mrb[0].mxu0 %v220
  %v563 = vpop.f32.mrb[0].mxu0
  %v564 = vadd.f32 %v87, %v563
  %v565 = vpop.f32.mrb[0].mxu0
  %566 = vmatprep.mubr.f32.mxu0 0.0
  %567 = vmatmul.mubr.f32.gmra.mrb[0].mxu0 %v223
  %v568 = vpop.f32.mrb[0].mxu0
  %v569 = vadd.f32 %v87, %v568
  %v570 = vpop.f32.mrb[0].mxu0
  %571 = vmatprep.mubr.f32.mxu0 0.0
  %572 = vmatmul.mubr.f32.gmra.mrb[0].mxu0 %v226
  %v573 = vpop.f32.mrb[0].mxu0
  %v574 = vadd.f32 %v87, %v573
  %v575 = vpop.f32.mrb[0].mxu0
  %576 = vmatprep.mubr.f32.mxu0 0.0
  %577 = vmatmul.mubr.f32.gmra.mrb[0].mxu0 %v229
  %v578 = vpop.f32.mrb[0].mxu0
  %v579 = vadd.f32 %v87, %v578
  %v580 = vpop.f32.mrb[0].mxu0
  %581 = vmatprep.mubr.f32.mxu0 0.0
  %582 = vmatmul.mubr.f32.gmra.mrb[0].mxu0 %v232
  %v583 = vpop.f32.mrb[0].mxu0
  %v584 = vadd.f32 %v87, %v583
  %v585 = vpop.f32.mrb[0].mxu0
  %586 = vmatprep.mubr.f32.mxu0 0.0
  %587 = vmatmul.mubr.f32.gmra.mrb[0].mxu0 %v235
  %v588 = vpop.f32.mrb[0].mxu0
  %v589 = vadd.f32 %v87, %v588
  %v590 = vpop.f32.mrb[0].mxu0
  %591 = vmatprep.mubr.f32.mxu0 0.0
  %592 = vmatmul.mubr.f32.gmra.mrb[0].mxu0 %v238
  %v593 = vpop.f32.mrb[0].mxu0
  %v594 = vadd.f32 %v87, %v593
  %v595 = vpop.f32.mrb[0].mxu0
  %596 = vmatprep.mubr.f32.mxu0 0.0
  %597 = vmatmul.mubr.f32.gmra.mrb[0].mxu0 %v241
  %v598 = vpop.f32.mrb[0].mxu0
  %v599 = vadd.f32 %v87, %v598
  %v600 = vpop.f32.mrb[0].mxu0
  %601 = vmatprep.mubr.f32.mxu0 0.0
  %602 = vmatmul.mubr.f32.gmra.mrb[0].mxu0 %v244
  %v603 = vpop.f32.mrb[0].mxu0
  %v604 = vadd.f32 %v87, %v603
  %v605 = vpop.f32.mrb[0].mxu0
  %606 = vmatprep.mubr.f32.mxu0 0.0
  %607 = vmatmul.mubr.f32.gmra.mrb[0].mxu0 %v247
  %v608 = vpop.f32.mrb[0].mxu0
  %v609 = vadd.f32 %v87, %v608
  %v610 = vpop.f32.mrb[0].mxu0
  %611 = vmatprep.mubr.f32.mxu0 0.0
  %612 = vmatmul.mubr.f32.gmra.mrb[0].mxu0 %v250
  %v613 = vpop.f32.mrb[0].mxu0
  %v614 = vadd.f32 %v87, %v613
  %v615 = vpop.f32.mrb[0].mxu0
  %616 = vmatprep.mubr.f32.mxu0 0.0
  %617 = vmatmul.mubr.f32.gmra.mrb[0].mxu0 %v253
  %v618 = vpop.f32.mrb[0].mxu0
  %v619 = vadd.f32 %v87, %v618
  %v620 = vpop.f32.mrb[0].mxu0
  %621 = vmatprep.mubr.f32.mxu0 0.0
  %622 = vmatmul.mubr.f32.gmra.mrb[0].mxu0 %v256
  %v623 = vpop.f32.mrb[0].mxu0
  %v624 = vadd.f32 %v87, %v623
  %v625 = vpop.f32.mrb[0].mxu0
  %626 = vmatprep.mubr.f32.mxu0 0.0
  %627 = vmatmul.mubr.f32.gmra.mrb[0].mxu0 %v259
  %v628 = vpop.f32.mrb[0].mxu0
  %v629 = vadd.f32 %v87, %v628
  %v630 = vpop.f32.mrb[0].mxu0
  %631 = vmatprep.mubr.f32.mxu0 0.0
  %632 = vmatmul.mubr.f32.gmra.mrb[0].mxu0 %v262
  %v633 = vpop.f32.mrb[0].mxu0
  %v634 = vadd.f32 %v87, %v633
  %v635 = vpop.f32.mrb[0].mxu0
  %636 = vmatprep.mubr.f32.mxu0 0.0
  %637 = vmatmul.mubr.f32.gmra.mrb[0].mxu0 %v265
  %v638 = vpop.f32.mrb[0].mxu0
  %v639 = vadd.f32 %v87, %v638
  %v640 = vpop.f32.mrb[0].mxu0
  %641 = vmatprep.mubr.f32.mxu0 0.0
  %642 = vmatmul.mubr.f32.gmra.mrb[0].mxu0 %v268
  %v643 = vpop.f32.mrb[0].mxu0
  %v644 = vadd.f32 %v87, %v643
  %v645 = vpop.f32.mrb[0].mxu0
  %646 = vmatprep.mubr.f32.mxu0 0.0
  %647 = vmatmul.mubr.f32.gmra.mrb[0].mxu0 %v271
  %v648 = vpop.f32.mrb[0].mxu0
  %v649 = vadd.f32 %v87, %v648
  %v650 = vpop.f32.mrb[0].mxu0
  %651 = vmatprep.mubr.f32.mxu0 0.0
  %652 = vmatmul.mubr.f32.gmra.mrb[0].mxu0 %v274
  %v653 = vpop.f32.mrb[0].mxu0
  %v654 = vadd.f32 %v87, %v653
  %v655 = vpop.f32.mrb[0].mxu0
  %656 = vmatprep.mubr.f32.mxu0 0.0
  %657 = vmatmul.mubr.f32.gmra.mrb[0].mxu0 %v277
  %v658 = vpop.f32.mrb[0].mxu0
  %v659 = vadd.f32 %v87, %v658
  %v660 = vpop.f32.mrb[0].mxu0
  %661 = vmatprep.mubr.f32.mxu0 0.0
  %662 = vmatmul.mubr.f32.gmra.mrb[0].mxu0 %v280
  %v663 = vpop.f32.mrb[0].mxu0
  %v664 = vadd.f32 %v87, %v663
  %v665 = vpop.f32.mrb[0].mxu0
  %666 = vdwg.mxu0
  %v667 = vmax.f32 %v349, 0.0
  %v668 = vmax.f32 %v354, 0.0
  %v669 = vmax.f32 %v359, 0.0
  %v670 = vmax.f32 %v364, 0.0
  %v671 = vmax.f32 %v369, 0.0
  %v672 = vmax.f32 %v374, 0.0
  %v673 = vmax.f32 %v379, 0.0
  %v674 = vmax.f32 %v384, 0.0
  %v675 = vmax.f32 %v389, 0.0
  %v676 = vmax.f32 %v394, 0.0
  %v677 = vmax.f32 %v399, 0.0
  %v678 = vmax.f32 %v404, 0.0
  %v679 = vmax.f32 %v409, 0.0
  %v680 = vmax.f32 %v414, 0.0
  %v681 = vmax.f32 %v419, 0.0
  %v682 = vmax.f32 %v424, 0.0
  %v683 = vmax.f32 %v429, 0.0
  %v684 = vmax.f32 %v434, 0.0
  %v685 = vmax.f32 %v439, 0.0
  %v686 = vmax.f32 %v444, 0.0
  %v687 = vmax.f32 %v449, 0.0
  %v688 = vmax.f32 %v454, 0.0
  %v689 = vmax.f32 %v459, 0.0
  %v690 = vmax.f32 %v464, 0.0
  %v691 = vmax.f32 %v469, 0.0
  %v692 = vmax.f32 %v474, 0.0
  %v693 = vmax.f32 %v479, 0.0
  %v694 = vmax.f32 %v484, 0.0
  %v695 = vmax.f32 %v489, 0.0
  %v696 = vmax.f32 %v494, 0.0
  %v697 = vmax.f32 %v499, 0.0
  %v698 = vmax.f32 %v504, 0.0
  %v699 = vmax.f32 %v509, 0.0
  %v700 = vmax.f32 %v514, 0.0
  %v701 = vmax.f32 %v519, 0.0
  %v702 = vmax.f32 %v524, 0.0
  %v703 = vmax.f32 %v529, 0.0
  %v704 = vmax.f32 %v534, 0.0
  %v705 = vmax.f32 %v539, 0.0
  %v706 = vmax.f32 %v544, 0.0
  %v707 = vmax.f32 %v549, 0.0
  %v708 = vmax.f32 %v554, 0.0
  %v709 = vmax.f32 %v559, 0.0
  %v710 = vmax.f32 %v564, 0.0
  %v711 = vmax.f32 %v569, 0.0
  %v712 = vmax.f32 %v574, 0.0
  %v713 = vmax.f32 %v579, 0.0
  %v714 = vmax.f32 %v584, 0.0
  %v715 = vmax.f32 %v589, 0.0
  %v716 = vmax.f32 %v594, 0.0
  %v717 = vmax.f32 %v599, 0.0
  %v718 = vmax.f32 %v604, 0.0
  %v719 = vmax.f32 %v609, 0.0
  %v720 = vmax.f32 %v614, 0.0
  %v721 = vmax.f32 %v619, 0.0
  %v722 = vmax.f32 %v624, 0.0
  %v723 = vmax.f32 %v629, 0.0
  %v724 = vmax.f32 %v634, 0.0
  %v725 = vmax.f32 %v639, 0.0
  %v726 = vmax.f32 %v644, 0.0
  %v727 = vmax.f32 %v649, 0.0
  %v728 = vmax.f32 %v654, 0.0
  %v729 = vmax.f32 %v659, 0.0
  %v730 = vmax.f32 %v664, 0.0
  %v731 = vmax.f32 %v667, %v669
  %v732 = vmax.f32 %v668, %v670
  %v733 = vmax.f32 %v675, %v677
  %v734 = vmax.f32 %v676, %v678
  %v735 = vmax.f32 %v683, %v685
  %v736 = vmax.f32 %v684, %v686
  %v737 = vmax.f32 %v691, %v693
  %v738 = vmax.f32 %v692, %v694
  %v739 = vmax.f32 %v699, %v701
  %v740 = vmax.f32 %v700, %v702
  %v741 = vmax.f32 %v707, %v709
  %v742 = vmax.f32 %v708, %v710
  %v743 = vmax.f32 %v715, %v717
  %v744 = vmax.f32 %v716, %v718
  %v745 = vmax.f32 %v723, %v725
  %v746 = vmax.f32 %v724, %v726
  %v747 = vmax.f32 %v731, %v671
  %v748 = vmax.f32 %v732, %v672
  %v749 = vmax.f32 %v733, %v679
  %v750 = vmax.f32 %v734, %v680
  %v751 = vmax.f32 %v735, %v687
  %v752 = vmax.f32 %v736, %v688
  %v753 = vmax.f32 %v737, %v695
  %v754 = vmax.f32 %v738, %v696
  %v755 = vmax.f32 %v739, %v703
  %v756 = vmax.f32 %v740, %v704
  %v757 = vmax.f32 %v741, %v711
  %v758 = vmax.f32 %v742, %v712
  %v759 = vmax.f32 %v743, %v719
  %v760 = vmax.f32 %v744, %v720
  %v761 = vmax.f32 %v745, %v727
  %v762 = vmax.f32 %v746, %v728
  %v763 = vmax.f32 %v747, %v673
  %v764 = vmax.f32 %v748, %v674
  %v765 = vmax.f32 %v749, %v681
  %v766 = vmax.f32 %v750, %v682
  %v767 = vmax.f32 %v751, %v689
  %v768 = vmax.f32 %v752, %v690
  %v769 = vmax.f32 %v753, %v697
  %v770 = vmax.f32 %v754, %v698
  %v771 = vmax.f32 %v755, %v705
  %v772 = vmax.f32 %v756, %v706
  %v773 = vmax.f32 %v757, %v713
  %v774 = vmax.f32 %v758, %v714
  %v775 = vmax.f32 %v759, %v721
  %v776 = vmax.f32 %v760, %v722
  %v777 = vmax.f32 %v761, %v729
  %v778 = vmax.f32 %v762, %v730
  %v779 = vmax.f32 %v763, %v764
  %v780 = vmax.f32 %v765, %v766
  %v781 = vmax.f32 %v767, %v768
  %v782 = vmax.f32 %v769, %v770
  %v783 = vmax.f32 %v771, %v772
  %v784 = vmax.f32 %v773, %v774
  %v785 = vmax.f32 %v775, %v776
  %v786 = vmax.f32 %v777, %v778
  %v795 = vrot.slane %v779, 4
  %v796 = vrot.slane %v780, 4
  %v797 = vrot.slane %v781, 4
  %v798 = vrot.slane %v782, 4
  %v799 = vrot.slane %v783, 4
  %v800 = vrot.slane %v784, 4
  %v801 = vrot.slane %v785, 4
  %v802 = vrot.slane %v786, 4
  %v811 = vmax.f32 %v779, %v795
  %v812 = vmax.f32 %v780, %v796
  %v813 = vmax.f32 %v781, %v797
  %v814 = vmax.f32 %v782, %v798
  %v815 = vmax.f32 %v783, %v799
  %v816 = vmax.f32 %v784, %v800
  %v817 = vmax.f32 %v785, %v801
  %v818 = vmax.f32 %v786, %v802
  %v827 = vrot.slane %v811, 2
  %v828 = vrot.slane %v812, 2
  %v829 = vrot.slane %v813, 2
  %v830 = vrot.slane %v814, 2
  %v831 = vrot.slane %v815, 2
  %v832 = vrot.slane %v816, 2
  %v833 = vrot.slane %v817, 2
  %v834 = vrot.slane %v818, 2
  %v843 = vmax.f32 %v811, %v827
  %v844 = vmax.f32 %v812, %v828
  %v845 = vmax.f32 %v813, %v829
  %v846 = vmax.f32 %v814, %v830
  %v847 = vmax.f32 %v815, %v831
  %v848 = vmax.f32 %v816, %v832
  %v849 = vmax.f32 %v817, %v833
  %v850 = vmax.f32 %v818, %v834
  %v859 = vrot.slane %v843, 1
  %v860 = vrot.slane %v844, 1
  %v861 = vrot.slane %v845, 1
  %v862 = vrot.slane %v846, 1
  %v863 = vrot.slane %v847, 1
  %v864 = vrot.slane %v848, 1
  %v865 = vrot.slane %v849, 1
  %v866 = vrot.slane %v850, 1
  %v875 = vmax.f32 %v843, %v859
  %v876 = vmax.f32 %v844, %v860
  %v877 = vmax.f32 %v845, %v861
  %v878 = vmax.f32 %v846, %v862
  %v879 = vmax.f32 %v847, %v863
  %v880 = vmax.f32 %v848, %v864
  %v881 = vmax.f32 %v849, %v865
  %v882 = vmax.f32 %v850, %v866
  %v883 = vrot.slane %v811, 7
  %v884 = vrot.slane %v812, 7
  %v885 = vrot.slane %v813, 7
  %v886 = vrot.slane %v814, 7
  %v887 = vrot.slane %v815, 7
  %v888 = vrot.slane %v816, 7
  %v889 = vrot.slane %v817, 7
  %v890 = vrot.slane %v818, 7
  %vm915 = vcmask 1044480
  %v916 = vrot.slane %v763, 3
  %v917 = vrot.slane %v764, 3
  %v918 = vsel %vm915, %v916, %v917
  %v919 = vrot.slane %v765, 3
  %v920 = vrot.slane %v766, 3
  %v921 = vsel %vm915, %v919, %v920
  %v922 = vrot.slane %v767, 3
  %v923 = vrot.slane %v768, 3
  %v924 = vsel %vm915, %v922, %v923
  %v925 = vrot.slane %v769, 3
  %v926 = vrot.slane %v770, 3
  %v927 = vsel %vm915, %v925, %v926
  %v928 = vrot.slane %v771, 3
  %v929 = vrot.slane %v772, 3
  %v930 = vsel %vm915, %v928, %v929
  %v931 = vrot.slane %v773, 3
  %v932 = vrot.slane %v774, 3
  %v933 = vsel %vm915, %v931, %v932
  %v934 = vrot.slane %v775, 3
  %v935 = vrot.slane %v776, 3
  %v936 = vsel %vm915, %v934, %v935
  %v937 = vrot.slane %v777, 3
  %v938 = vrot.slane %v778, 3
  %v939 = vsel %vm915, %v937, %v938
  %vm964 = vcmask 1040384
  %v965 = vsel %vm964, %v875, %v883
  %v966 = vsel %vm964, %v876, %v884
  %v967 = vsel %vm964, %v877, %v885
  %v968 = vsel %vm964, %v878, %v886
  %v969 = vsel %vm964, %v879, %v887
  %v970 = vsel %vm964, %v880, %v888
  %v971 = vsel %vm964, %v881, %v889
  %v972 = vsel %vm964, %v882, %v890
  %v973 = vsel %vm915, %v965, %v916
  %v974 = vsel %vm915, %v966, %v919
  %v975 = vsel %vm915, %v967, %v922
  %v976 = vsel %vm915, %v968, %v925
  %v977 = vsel %vm915, %v969, %v928
  %v978 = vsel %vm915, %v970, %v931
  %v979 = vsel %vm915, %v971, %v934
  %v980 = vsel %vm915, %v972, %v937
  %vm981 = vcmask 523264
  %982 = vst.msk [vmem:[%s3] sm:$0xff] %vm981, %v973
  %983 = vst.msk [vmem:[%s3 + $0x8] sm:$0xff] %vm981, %v918
  %vm984 = vcmask 520192
  %985 = vst.msk [vmem:[%s3 + $0x10] sm:$0x1f] %vm984, %v917
  %986 = vst.msk [vmem:[%s3 + $0x18] sm:$0xff] %vm981, %v974
  %987 = vst.msk [vmem:[%s3 + $0x20] sm:$0xff] %vm981, %v921
  %988 = vst.msk [vmem:[%s3 + $0x28] sm:$0x1f] %vm984, %v920
  %989 = vst.msk [vmem:[%s3 + $0x30] sm:$0xff] %vm981, %v975
  %990 = vst.msk [vmem:[%s3 + $0x38] sm:$0xff] %vm981, %v924
  %991 = vst.msk [vmem:[%s3 + $0x40] sm:$0x1f] %vm984, %v923
  %992 = vst.msk [vmem:[%s3 + $0x48] sm:$0xff] %vm981, %v976
  %993 = vst.msk [vmem:[%s3 + $0x50] sm:$0xff] %vm981, %v927
  %994 = vst.msk [vmem:[%s3 + $0x58] sm:$0x1f] %vm984, %v926
  %995 = vst.msk [vmem:[%s3 + $0x60] sm:$0xff] %vm981, %v977
  %996 = vst.msk [vmem:[%s3 + $0x68] sm:$0xff] %vm981, %v930
  %997 = vst.msk [vmem:[%s3 + $0x70] sm:$0x1f] %vm984, %v929
  %998 = vst.msk [vmem:[%s3 + $0x78] sm:$0xff] %vm981, %v978
  %999 = vst.msk [vmem:[%s3 + $0x80] sm:$0xff] %vm981, %v933
  %1000 = vst.msk [vmem:[%s3 + $0x88] sm:$0x1f] %vm984, %v932
  %1001 = vst.msk [vmem:[%s3 + $0x90] sm:$0xff] %vm981, %v979
  %1002 = vst.msk [vmem:[%s3 + $0x98] sm:$0xff] %vm981, %v936
  %1003 = vst.msk [vmem:[%s3 + $0xa0] sm:$0x1f] %vm984, %v935
  %1004 = vst.msk [vmem:[%s3 + $0xa8] sm:$0xff] %vm981, %v980
  %1005 = vst.msk [vmem:[%s3 + $0xb0] sm:$0xff] %vm981, %v939
  %1006 = vst.msk [vmem:[%s3 + $0xb8] sm:$0x1f] %vm984, %v938
  // Predicated region
  $region14: #{weigh_estimator6_fwd.2} parent=0 // pred_check
    _
  $region15: #{weigh_estimator6_fwd.2} parent=0 // pred_check_branch
    %1008 = sbr.rel (0) target = $region17
  $region16: #{weigh_estimator6_fwd.2} parent=0 // pred_region
    _
  $region17: #{weigh_estimator6_fwd.2} parent=0 // pred_fallthru
    _
  // Predicated region
  $region18: #{weigh_estimator6_fwd.2} parent=0 // pred_check
    _
  $region19: #{weigh_estimator6_fwd.2} parent=0 // pred_check_branch
    %1010 = sbr.rel (0) target = $region21
  $region20: #{weigh_estimator6_fwd.2} parent=0 // pred_region
    _
  $region21: #{weigh_estimator6_fwd.2} parent=0 // pred_fallthru
    _

// kernel: weigh_estimator6_fwd.3
$region0: #{weigh_estimator6_fwd.3}
  #allocation0 [shape = 'u32[]', space=smem, size = 0x4, offset = 0x4, fixed_abs, tag = 'smem constant byte address 0x4 - core index']
  #allocation1 [shape = 'u32[144,128]{1,0:T(1,128)}', space=vmem, size = 0x12000, scoped, tag = 'internal scratch']
  #allocation2 [shape = 'f32[8,1]{1,0:T(8,128)}', space=vmem, size = 0x1000, scoped, tag = 'scratch operand']
  #allocation3 [shape = 'f32[1,1]{1,0:T(1,128)S(1)}', space=vmem, size = 0x200, scoped, tag = 'scoped memory for weigh_estimator6_fwd.3']
  %s0 = inlined_call_operand.vmem [shape: f32[8,1344], index: 0, kind: input, shape index: {}]
  %s1 = inlined_call_operand.vmem [shape: f32[1344,1024], index: 1, kind: input, shape index: {}]
  %s2 = inlined_call_operand.vmem [shape: f32[1,1024], index: 2, kind: input, shape index: {}]
  %s3 = inlined_call_operand.vmem [shape: f32[1024,1], index: 3, kind: input, shape index: {}]
  %s4 = inlined_call_operand.<no memory space> [shape: f32[1,1], index: 4, kind: input, shape index: {}]
  %s5 = inlined_call_operand.vmem [shape: f32[8,1], index: 5, kind: output, shape index: {}]
  %s6 = sld [smem:[#allocation0]]
  $region84: #{weigh_estimator6_fwd.3} parent=0
    _
  %s8 = ssub.s32 1, %s6
  %s9 = scalar_select 0, %s8, %s6
  %v10 = vstv %s4
  %11 = vst [vmem:[#allocation3] sm:$0x1] %v10
  $region1: #{weigh_estimator6_fwd.3} parent=0
    #allocation4 [shape = 'u8[5505024]{0}', space=vmem, size = 0x540000, scoped, tag = 'input window, operand 1']
    loop: start=0, step=1, limit=4
    $region2: #{weigh_estimator6_fwd.3} parent=1 // loop_pre_header
      _
    $region3: #{weigh_estimator6_fwd.3} parent=1 // loop_header
      %s13 = sphi 0, %s17
      %p14 = scmp.ge.s32.totalorder %s13, 4
      %s20 = sphi 0, %s32
      %s21 = sphi 0, %s28
      %s22 = sphi 0, %s20
      %s23 = sphi 0, %s21
      %s24 = sphi 0, %s22
      %s25 = sphi 0, %s23
      %s35 = sphi 0, %s37
      %s38 = sphi 0, %s35
      %s39 = sphi 0, %s38
      %s55 = sphi 0, %s39
      %s61 = sphi 0, %s63
      %s64 = sphi 0, %s61
      %s65 = sphi 0, %s64
      %s81 = sphi 0, %s65
      %s87 = sphi 0, %s89
      %s90 = sphi 0, %s87
      %s91 = sphi 0, %s90
      %s107 = sphi 0, %s91
      %s113 = sphi 0, %s115
      %s116 = sphi 0, %s113
      %s117 = sphi 0, %s116
      %s133 = sphi 0, %s117
      %s137 = sphi 0, %s137
      %s139 = sphi 0, %s137
      %s140 = sphi 0, %s139
      %s154 = sphi 0, %s140
      %s160 = sphi 0, %s162
      %s163 = sphi 0, %s160
      %s164 = sphi 0, %s163
      %s180 = sphi 0, %s164
    $region4: #{weigh_estimator6_fwd.3} parent=1 // loop_header_branch
      %16 = sbr.rel (%p14) target = $region8
    $region5: #{weigh_estimator6_fwd.3} parent=1 // loop_body
      %s18 = ssub.s32 %s13, 1
      %s19 = ssub.s32 %s13, 2
      %s26 = sadd.s32 1, %s21
      %p27 = scmp.ge.s32.totalorder %s26, 2
      %s28 = scalar_select %p27, 0, %s26
      %s29 = sadd.s32 1, %s20
      %s30 = scalar_select %p27, %s29, %s20
      %p31 = scmp.ge.s32.totalorder %s30, 1
      %s32 = scalar_select %p31, 0, %s30
      %s33 = ssub.s32 %s20, %s32
      %p34 = scmp.eq.s32.totalorder %s33, 0
      %s36 = sadd.s32 %s35, 1
      %s37 = scalar_select %p34, %s35, %s36
      %p40 = pneg %p34
      %p41 = scmp.eq.s32.totalorder %s13, 1
      %p42 = por %p40, %p41
      %p43 = scmp.ne.s32.totalorder %s35, %s38
      %p44 = scmp.eq.s32.totalorder %s13, 0
      %p45 = por %p43, %p44
      %p46 = scmp.ne.s32.totalorder %s35, %s38
      %p47 = scmp.eq.s32.totalorder %s18, 1
      %p48 = por %p46, %p47
      %p49 = scmp.ne.s32.totalorder %s38, %s39
      %p50 = scmp.eq.s32.totalorder %s18, 0
      %p51 = por %p49, %p50
      %p52 = scmp.ne.s32.totalorder %s38, %s39
      %p53 = scmp.eq.s32.totalorder %s19, 1
      %p54 = por %p52, %p53
      %p56 = scmp.ne.s32.totalorder %s39, %s55
      %p57 = scmp.eq.s32.totalorder %s19, 0
      %p58 = por %p56, %p57
      %s59 = ssub.s32 %s21, %s28
      %p60 = scmp.eq.s32.totalorder %s59, 0
      %s62 = sadd.s32 %s61, 1
      %s63 = scalar_select %p60, %s61, %s62
      %p66 = pneg %p60
      %p67 = scmp.eq.s32.totalorder %s13, 1
      %p68 = por %p66, %p67
      %p69 = scmp.ne.s32.totalorder %s61, %s64
      %p70 = scmp.eq.s32.totalorder %s13, 0
      %p71 = por %p69, %p70
      %p72 = scmp.ne.s32.totalorder %s61, %s64
      %p73 = scmp.eq.s32.totalorder %s18, 1
      %p74 = por %p72, %p73
      %p75 = scmp.ne.s32.totalorder %s64, %s65
      %p76 = scmp.eq.s32.totalorder %s18, 0
      %p77 = por %p75, %p76
      %p78 = scmp.ne.s32.totalorder %s64, %s65
      %p79 = scmp.eq.s32.totalorder %s19, 1
      %p80 = por %p78, %p79
      %p82 = scmp.ne.s32.totalorder %s65, %s81
      %p83 = scmp.eq.s32.totalorder %s19, 0
      %p84 = por %p82, %p83
      %s85 = ssub.s32 %s21, %s28
      %p86 = scmp.eq.s32.totalorder %s85, 0
      %s88 = sadd.s32 %s87, 1
      %s89 = scalar_select %p86, %s87, %s88
      %p92 = pneg %p86
      %p93 = scmp.eq.s32.totalorder %s13, 1
      %p94 = por %p92, %p93
      %p95 = scmp.ne.s32.totalorder %s87, %s90
      %p96 = scmp.eq.s32.totalorder %s13, 0
      %p97 = por %p95, %p96
      %p98 = scmp.ne.s32.totalorder %s87, %s90
      %p99 = scmp.eq.s32.totalorder %s18, 1
      %p100 = por %p98, %p99
      %p101 = scmp.ne.s32.totalorder %s90, %s91
      %p102 = scmp.eq.s32.totalorder %s18, 0
      %p103 = por %p101, %p102
      %p104 = scmp.ne.s32.totalorder %s90, %s91
      %p105 = scmp.eq.s32.totalorder %s19, 1
      %p106 = por %p104, %p105
      %p108 = scmp.ne.s32.totalorder %s91, %s107
      %p109 = scmp.eq.s32.totalorder %s19, 0
      %p110 = por %p108, %p109
      %s111 = ssub.s32 %s21, %s28
      %p112 = scmp.eq.s32.totalorder %s111, 0
      %s114 = sadd.s32 %s113, 1
      %s115 = scalar_select %p112, %s113, %s114
      %p118 = pneg %p112
      %p119 = scmp.eq.s32.totalorder %s13, 1
      %p120 = por %p118, %p119
      %p121 = scmp.ne.s32.totalorder %s113, %s116
      %p122 = scmp.eq.s32.totalorder %s13, 0
      %p123 = por %p121, %p122
      %p124 = scmp.ne.s32.totalorder %s113, %s116
      %p125 = scmp.eq.s32.totalorder %s18, 1
      %p126 = por %p124, %p125
      %p127 = scmp.ne.s32.totalorder %s116, %s117
      %p128 = scmp.eq.s32.totalorder %s18, 0
      %p129 = por %p127, %p128
      %p130 = scmp.ne.s32.totalorder %s116, %s117
      %p131 = scmp.eq.s32.totalorder %s19, 1
      %p132 = por %p130, %p131
      %p134 = scmp.ne.s32.totalorder %s117, %s133
      %p135 = scmp.eq.s32.totalorder %s19, 0
      %p136 = por %p134, %p135
      %s138 = sadd.s32 %s137, 1
      %p141 = scmp.eq.s32.totalorder %s13, 1
      %p142 = scmp.ne.s32.totalorder %s137, %s139
      %p143 = scmp.eq.s32.totalorder %s13, 0
      %p144 = por %p142, %p143
      %p145 = scmp.ne.s32.totalorder %s137, %s139
      %p146 = scmp.eq.s32.totalorder %s18, 1
      %p147 = por %p145, %p146
      %p148 = scmp.ne.s32.totalorder %s139, %s140
      %p149 = scmp.eq.s32.totalorder %s18, 0
      %p150 = por %p148, %p149
      %p151 = scmp.ne.s32.totalorder %s139, %s140
      %p152 = scmp.eq.s32.totalorder %s19, 1
      %p153 = por %p151, %p152
      %p155 = scmp.ne.s32.totalorder %s140, %s154
      %p156 = scmp.eq.s32.totalorder %s19, 0
      %p157 = por %p155, %p156
      %s158 = ssub.s32 %s20, %s32
      %p159 = scmp.eq.s32.totalorder %s158, 0
      %s161 = sadd.s32 %s160, 1
      %s162 = scalar_select %p159, %s160, %s161
      %p165 = pneg %p159
      %p166 = scmp.eq.s32.totalorder %s13, 1
      %p167 = por %p165, %p166
      %p168 = scmp.ne.s32.totalorder %s160, %s163
      %p169 = scmp.eq.s32.totalorder %s13, 0
      %p170 = por %p168, %p169
      %p171 = scmp.ne.s32.totalorder %s160, %s163
      %p172 = scmp.eq.s32.totalorder %s18, 1
      %p173 = por %p171, %p172
      %p174 = scmp.ne.s32.totalorder %s163, %s164
      %p175 = scmp.eq.s32.totalorder %s18, 0
      %p176 = por %p174, %p175
      %p177 = scmp.ne.s32.totalorder %s163, %s164
      %p178 = scmp.eq.s32.totalorder %s19, 1
      %p179 = por %p177, %p178
      %p181 = scmp.ne.s32.totalorder %s164, %s180
      %p182 = scmp.eq.s32.totalorder %s19, 0
      %p183 = por %p181, %p182
      %p184 = scmp.le.s32.totalorder 1, %s13
      %p185 = scmp.lt.s32.totalorder %s13, 3
      %p186 = pnand %p184, %p185
      %p187 = pneg %p186
      // Predicated region
      $region9: #{weigh_estimator6_fwd.3} parent=5 // pred_check
        _
      $region10: #{weigh_estimator6_fwd.3} parent=5 // pred_check_branch
        %189 = sbr.rel (%p186) target = $region12
      $region11: #{weigh_estimator6_fwd.3} parent=5 // pred_region
        %s190 = ssub.s32 %s13, 1
        // Predicated region
        $region13: #{weigh_estimator6_fwd.3} parent=11 // pred_check
          %p191 = pneg %p51
        $region14: #{weigh_estimator6_fwd.3} parent=11 // pred_check_branch
          %193 = sbr.rel (%p191) target = $region16
        $region15: #{weigh_estimator6_fwd.3} parent=11 // pred_region
          %p194 = scmp.lt.s32.totalorder %s22, 0
          %s195 = scalar_select %p194, %s22, 0
          %s196 = smul.addr %s195, 11
          %s197 = smul.addr %s196, 8
          %s198 = scalar_lea.vmem %s0, %s197
        $region16: #{weigh_estimator6_fwd.3} parent=11 // pred_fallthru
          _
        // Predicated region
        $region17: #{weigh_estimator6_fwd.3} parent=11 // pred_check
          %p199 = pneg %p150
        $region18: #{weigh_estimator6_fwd.3} parent=11 // pred_check_branch
          %201 = sbr.rel (%p199) target = $region20
        $region19: #{weigh_estimator6_fwd.3} parent=11 // pred_region
          _
        $region20: #{weigh_estimator6_fwd.3} parent=11 // pred_fallthru
          _
      $region12: #{weigh_estimator6_fwd.3} parent=5 // pred_fallthru
        _
      %p202 = scmp.lt.s32.totalorder %s13, 2
      // Predicated region
      $region21: #{weigh_estimator6_fwd.3} parent=5 // pred_check
        %p203 = pneg %p202
      $region22: #{weigh_estimator6_fwd.3} parent=5 // pred_check_branch
        %205 = sbr.rel (%p203) target = $region24
      $region23: #{weigh_estimator6_fwd.3} parent=5 // pred_region
        // Predicated region
        $region25: #{weigh_estimator6_fwd.3} parent=23 // pred_check
          %p206 = pneg %p71
        $region26: #{weigh_estimator6_fwd.3} parent=23 // pred_check_branch
          %208 = sbr.rel (%p206) target = $region28
        $region27: #{weigh_estimator6_fwd.3} parent=23 // pred_region
          %s209 = sand.u32 %s61, 1
          %s210 = sand.u32 %s61, 1
          %s211 = smul.addr %s210, 5376
          %s212 = scalar_lea.vmem [#allocation4], %s211
          %s213 = smul.u32 4, %s21
          %s214 = smul.addr %s213, 8
          %s215 = scalar_lea.vmem %s1, %s214
          // Predicated region
          $region29: #{weigh_estimator6_fwd.3} parent=27 // pred_check
            _
          $region30: #{weigh_estimator6_fwd.3} parent=27 // pred_check_branch
            %217 = sbr.rel (0) target = $region32
          $region31: #{weigh_estimator6_fwd.3} parent=27 // pred_region
            // Predicated region
            $region33: #{weigh_estimator6_fwd.3} parent=31 // pred_check
              _
            $region34: #{weigh_estimator6_fwd.3} parent=31 // pred_check_branch
              %219 = sbr.rel (0) target = $region36
            $region35: #{weigh_estimator6_fwd.3} parent=31 // pred_region
              loop: start=0, step=1, limit=1
              $region37: #{weigh_estimator6_fwd.3} parent=35 // loop_pre_header
                _
              $region38: #{weigh_estimator6_fwd.3} parent=35 // loop_header
                %s221 = sphi 0, %s225
                %p222 = scmp.ge.s32.totalorder %s221, 1
                %s226 = sphi %s215, %s215
                %s227 = sphi %s212, %s212
              $region39: #{weigh_estimator6_fwd.3} parent=35 // loop_header_branch
                %224 = sbr.rel (%p222) target = $region43
              $region40: #{weigh_estimator6_fwd.3} parent=35 // loop_body
                %v228 = vld [vmem:[%s226] sm:$0xff]
                %229 = vst [vmem:[%s227] sm:$0xff] %v228
                %v230 = vld [vmem:[%s226 + $0x8] sm:$0xff]
                %231 = vst [vmem:[%s227 + $0x8] sm:$0xff] %v230
                %v232 = vld [vmem:[%s226 + $0x10] sm:$0xff]
                %233 = vst [vmem:[%s227 + $0x10] sm:$0xff] %v232
                %v234 = vld [vmem:[%s226 + $0x18] sm:$0xff]
                %235 = vst [vmem:[%s227 + $0x18] sm:$0xff] %v234
                %v236 = vld [vmem:[%s226 + $0x40] sm:$0xff]
                %237 = vst [vmem:[%s227 + $0x20] sm:$0xff] %v236
                %v238 = vld [vmem:[%s226 + $0x48] sm:$0xff]
                %239 = vst [vmem:[%s227 + $0x28] sm:$0xff] %v238
                %v240 = vld [vmem:[%s226 + $0x50] sm:$0xff]
                %241 = vst [vmem:[%s227 + $0x30] sm:$0xff] %v240
                %v242 = vld [vmem:[%s226 + $0x58] sm:$0xff]
                %243 = vst [vmem:[%s227 + $0x38] sm:$0xff] %v242
                %v244 = vld [vmem:[%s226 + $0x80] sm:$0xff]
                %245 = vst [vmem:[%s227 + $0x40] sm:$0xff] %v244
                %v246 = vld [vmem:[%s226 + $0x88] sm:$0xff]
                %247 = vst [vmem:[%s227 + $0x48] sm:$0xff] %v246
                %v248 = vld [vmem:[%s226 + $0x90] sm:$0xff]
                %249 = vst [vmem:[%s227 + $0x50] sm:$0xff] %v248
                %v250 = vld [vmem:[%s226 + $0x98] sm:$0xff]
                %251 = vst [vmem:[%s227 + $0x58] sm:$0xff] %v250
                %v252 = vld [vmem:[%s226 + $0xc0] sm:$0xff]
                %253 = vst [vmem:[%s227 + $0x60] sm:$0xff] %v252
                %v254 = vld [vmem:[%s226 + $0xc8] sm:$0xff]
                %255 = vst [vmem:[%s227 + $0x68] sm:$0xff] %v254
                %v256 = vld [vmem:[%s226 + $0xd0] sm:$0xff]
                %257 = vst [vmem:[%s227 + $0x70] sm:$0xff] %v256
                %v258 = vld [vmem:[%s226 + $0xd8] sm:$0xff]
                %259 = vst [vmem:[%s227 + $0x78] sm:$0xff] %v258
                %v260 = vld [vmem:[%s226 + $0x100] sm:$0xff]
                %261 = vst [vmem:[%s227 + $0x80] sm:$0xff] %v260
                %v262 = vld [vmem:[%s226 + $0x108] sm:$0xff]
                %263 = vst [vmem:[%s227 + $0x88] sm:$0xff] %v262
                %v264 = vld [vmem:[%s226 + $0x110] sm:$0xff]
                %265 = vst [vmem:[%s227 + $0x90] sm:$0xff] %v264
                %v266 = vld [vmem:[%s226 + $0x118] sm:$0xff]
                %267 = vst [vmem:[%s227 + $0x98] sm:$0xff] %v266
                %v268 = vld [vmem:[%s226 + $0x140] sm:$0xff]
                %269 = vst [vmem:[%s227 + $0xa0] sm:$0xff] %v268
                %v270 = vld [vmem:[%s226 + $0x148] sm:$0xff]
                %271 = vst [vmem:[%s227 + $0xa8] sm:$0xff] %v270
                %v272 = vld [vmem:[%s226 + $0x150] sm:$0xff]
                %273 = vst [vmem:[%s227 + $0xb0] sm:$0xff] %v272
                %v274 = vld [vmem:[%s226 + $0x158] sm:$0xff]
                %275 = vst [vmem:[%s227 + $0xb8] sm:$0xff] %v274
                %v276 = vld [vmem:[%s226 + $0x180] sm:$0xff]
                %277 = vst [vmem:[%s227 + $0xc0] sm:$0xff] %v276
                %v278 = vld [vmem:[%s226 + $0x188] sm:$0xff]
                %279 = vst [vmem:[%s227 + $0xc8] sm:$0xff] %v278
                %v280 = vld [vmem:[%s226 + $0x190] sm:$0xff]
                %281 = vst [vmem:[%s227 + $0xd0] sm:$0xff] %v280
                %v282 = vld [vmem:[%s226 + $0x198] sm:$0xff]
                %283 = vst [vmem:[%s227 + $0xd8] sm:$0xff] %v282
                %v284 = vld [vmem:[%s226 + $0x1c0] sm:$0xff]
                %285 = vst [vmem:[%s227 + $0xe0] sm:$0xff] %v284
                %v286 = vld [vmem:[%s226 + $0x1c8] sm:$0xff]
                %287 = vst [vmem:[%s227 + $0xe8] sm:$0xff] %v286
                %v288 = vld [vmem:[%s226 + $0x1d0] sm:$0xff]
                %289 = vst [vmem:[%s227 + $0xf0] sm:$0xff] %v288
                %v290 = vld [vmem:[%s226 + $0x1d8] sm:$0xff]
                %291 = vst [vmem:[%s227 + $0xf8] sm:$0xff] %v290
                %v292 = vld [vmem:[%s226 + $0x200] sm:$0xff]
                %293 = vst [vmem:[%s227 + $0x100] sm:$0xff] %v292
                %v294 = vld [vmem:[%s226 + $0x208] sm:$0xff]
                %295 = vst [vmem:[%s227 + $0x108] sm:$0xff] %v294
                %v296 = vld [vmem:[%s226 + $0x210] sm:$0xff]
                %297 = vst [vmem:[%s227 + $0x110] sm:$0xff] %v296
                %v298 = vld [vmem:[%s226 + $0x218] sm:$0xff]
                %299 = vst [vmem:[%s227 + $0x118] sm:$0xff] %v298
                %v300 = vld [vmem:[%s226 + $0x240] sm:$0xff]
                %301 = vst [vmem:[%s227 + $0x120] sm:$0xff] %v300
                %v302 = vld [vmem:[%s226 + $0x248] sm:$0xff]
                %303 = vst [vmem:[%s227 + $0x128] sm:$0xff] %v302
                %v304 = vld [vmem:[%s226 + $0x250] sm:$0xff]
                %305 = vst [vmem:[%s227 + $0x130] sm:$0xff] %v304
                %v306 = vld [vmem:[%s226 + $0x258] sm:$0xff]
                %307 = vst [vmem:[%s227 + $0x138] sm:$0xff] %v306
                %v308 = vld [vmem:[%s226 + $0x280] sm:$0xff]
                %309 = vst [vmem:[%s227 + $0x140] sm:$0xff] %v308
                %v310 = vld [vmem:[%s226 + $0x288] sm:$0xff]
                %311 = vst [vmem:[%s227 + $0x148] sm:$0xff] %v310
                %v312 = vld [vmem:[%s226 + $0x290] sm:$0xff]
                %313 = vst [vmem:[%s227 + $0x150] sm:$0xff] %v312
                %v314 = vld [vmem:[%s226 + $0x298] sm:$0xff]
                %315 = vst [vmem:[%s227 + $0x158] sm:$0xff] %v314
                %v316 = vld [vmem:[%s226 + $0x2c0] sm:$0xff]
                %317 = vst [vmem:[%s227 + $0x160] sm:$0xff] %v316
                %v318 = vld [vmem:[%s226 + $0x2c8] sm:$0xff]
                %319 = vst [vmem:[%s227 + $0x168] sm:$0xff] %v318
                %v320 = vld [vmem:[%s226 + $0x2d0] sm:$0xff]
                %321 = vst [vmem:[%s227 + $0x170] sm:$0xff] %v320
                %v322 = vld [vmem:[%s226 + $0x2d8] sm:$0xff]
                %323 = vst [vmem:[%s227 + $0x178] sm:$0xff] %v322
                %v324 = vld [vmem:[%s226 + $0x300] sm:$0xff]
                %325 = vst [vmem:[%s227 + $0x180] sm:$0xff] %v324
                %v326 = vld [vmem:[%s226 + $0x308] sm:$0xff]
                %327 = vst [vmem:[%s227 + $0x188] sm:$0xff] %v326
                %v328 = vld [vmem:[%s226 + $0x310] sm:$0xff]
                %329 = vst [vmem:[%s227 + $0x190] sm:$0xff] %v328
                %v330 = vld [vmem:[%s226 + $0x318] sm:$0xff]
                %331 = vst [vmem:[%s227 + $0x198] sm:$0xff] %v330
                %v332 = vld [vmem:[%s226 + $0x340] sm:$0xff]
                %333 = vst [vmem:[%s227 + $0x1a0] sm:$0xff] %v332
                %v334 = vld [vmem:[%s226 + $0x348] sm:$0xff]
                %335 = vst [vmem:[%s227 + $0x1a8] sm:$0xff] %v334
                %v336 = vld [vmem:[%s226 + $0x350] sm:$0xff]
                %337 = vst [vmem:[%s227 + $0x1b0] sm:$0xff] %v336
                %v338 = vld [vmem:[%s226 + $0x358] sm:$0xff]
                %339 = vst [vmem:[%s227 + $0x1b8] sm:$0xff] %v338
                %v340 = vld [vmem:[%s226 + $0x380] sm:$0xff]
                %341 = vst [vmem:[%s227 + $0x1c0] sm:$0xff] %v340
                %v342 = vld [vmem:[%s226 + $0x388] sm:$0xff]
                %343 = vst [vmem:[%s227 + $0x1c8] sm:$0xff] %v342
                %v344 = vld [vmem:[%s226 + $0x390] sm:$0xff]
                %345 = vst [vmem:[%s227 + $0x1d0] sm:$0xff] %v344
                %v346 = vld [vmem:[%s226 + $0x398] sm:$0xff]
                %347 = vst [vmem:[%s227 + $0x1d8] sm:$0xff] %v346
                %v348 = vld [vmem:[%s226 + $0x3c0] sm:$0xff]
                %349 = vst [vmem:[%s227 + $0x1e0] sm:$0xff] %v348
                %v350 = vld [vmem:[%s226 + $0x3c8] sm:$0xff]
                %351 = vst [vmem:[%s227 + $0x1e8] sm:$0xff] %v350
                %v352 = vld [vmem:[%s226 + $0x3d0] sm:$0xff]
                %353 = vst [vmem:[%s227 + $0x1f0] sm:$0xff] %v352
                %v354 = vld [vmem:[%s226 + $0x3d8] sm:$0xff]
                %355 = vst [vmem:[%s227 + $0x1f8] sm:$0xff] %v354
                %v356 = vld [vmem:[%s226 + $0x400] sm:$0xff]
                %357 = vst [vmem:[%s227 + $0x200] sm:$0xff] %v356
                %v358 = vld [vmem:[%s226 + $0x408] sm:$0xff]
                %359 = vst [vmem:[%s227 + $0x208] sm:$0xff] %v358
                %v360 = vld [vmem:[%s226 + $0x410] sm:$0xff]
                %361 = vst [vmem:[%s227 + $0x210] sm:$0xff] %v360
                %v362 = vld [vmem:[%s226 + $0x418] sm:$0xff]
                %363 = vst [vmem:[%s227 + $0x218] sm:$0xff] %v362
                %v364 = vld [vmem:[%s226 + $0x440] sm:$0xff]
                %365 = vst [vmem:[%s227 + $0x220] sm:$0xff] %v364
                %v366 = vld [vmem:[%s226 + $0x448] sm:$0xff]
                %367 = vst [vmem:[%s227 + $0x228] sm:$0xff] %v366
                %v368 = vld [vmem:[%s226 + $0x450] sm:$0xff]
                %369 = vst [vmem:[%s227 + $0x230] sm:$0xff] %v368
                %v370 = vld [vmem:[%s226 + $0x458] sm:$0xff]
                %371 = vst [vmem:[%s227 + $0x238] sm:$0xff] %v370
                %v372 = vld [vmem:[%s226 + $0x480] sm:$0xff]
                %373 = vst [vmem:[%s227 + $0x240] sm:$0xff] %v372
                %v374 = vld [vmem:[%s226 + $0x488] sm:$0xff]
                %375 = vst [vmem:[%s227 + $0x248] sm:$0xff] %v374
                %v376 = vld [vmem:[%s226 + $0x490] sm:$0xff]
                %377 = vst [vmem:[%s227 + $0x250] sm:$0xff] %v376
                %v378 = vld [vmem:[%s226 + $0x498] sm:$0xff]
                %379 = vst [vmem:[%s227 + $0x258] sm:$0xff] %v378
                %v380 = vld [vmem:[%s226 + $0x4c0] sm:$0xff]
                %381 = vst [vmem:[%s227 + $0x260] sm:$0xff] %v380
                %v382 = vld [vmem:[%s226 + $0x4c8] sm:$0xff]
                %383 = vst [vmem:[%s227 + $0x268] sm:$0xff] %v382
                %v384 = vld [vmem:[%s226 + $0x4d0] sm:$0xff]
                %385 = vst [vmem:[%s227 + $0x270] sm:$0xff] %v384
                %v386 = vld [vmem:[%s226 + $0x4d8] sm:$0xff]
                %387 = vst [vmem:[%s227 + $0x278] sm:$0xff] %v386
                %v388 = vld [vmem:[%s226 + $0x500] sm:$0xff]
                %389 = vst [vmem:[%s227 + $0x280] sm:$0xff] %v388
                %v390 = vld [vmem:[%s226 + $0x508] sm:$0xff]
                %391 = vst [vmem:[%s227 + $0x288] sm:$0xff] %v390
                %v392 = vld [vmem:[%s226 + $0x510] sm:$0xff]
                %393 = vst [vmem:[%s227 + $0x290] sm:$0xff] %v392
                %v394 = vld [vmem:[%s226 + $0x518] sm:$0xff]
                %395 = vst [vmem:[%s227 + $0x298] sm:$0xff] %v394
                %v396 = vld [vmem:[%s226 + $0x540] sm:$0xff]
                %397 = vst [vmem:[%s227 + $0x2a0] sm:$0xff] %v396
                %v398 = vld [vmem:[%s226 + $0x548] sm:$0xff]
                %399 = vst [vmem:[%s227 + $0x2a8] sm:$0xff] %v398
                %v400 = vld [vmem:[%s226 + $0x550] sm:$0xff]
                %401 = vst [vmem:[%s227 + $0x2b0] sm:$0xff] %v400
                %v402 = vld [vmem:[%s226 + $0x558] sm:$0xff]
                %403 = vst [vmem:[%s227 + $0x2b8] sm:$0xff] %v402
                %v404 = vld [vmem:[%s226 + $0x580] sm:$0xff]
                %405 = vst [vmem:[%s227 + $0x2c0] sm:$0xff] %v404
                %v406 = vld [vmem:[%s226 + $0x588] sm:$0xff]
                %407 = vst [vmem:[%s227 + $0x2c8] sm:$0xff] %v406
                %v408 = vld [vmem:[%s226 + $0x590] sm:$0xff]
                %409 = vst [vmem:[%s227 + $0x2d0] sm:$0xff] %v408
                %v410 = vld [vmem:[%s226 + $0x598] sm:$0xff]
                %411 = vst [vmem:[%s227 + $0x2d8] sm:$0xff] %v410
                %v412 = vld [vmem:[%s226 + $0x5c0] sm:$0xff]
                %413 = vst [vmem:[%s227 + $0x2e0] sm:$0xff] %v412
                %v414 = vld [vmem:[%s226 + $0x5c8] sm:$0xff]
                %415 = vst [vmem:[%s227 + $0x2e8] sm:$0xff] %v414
                %v416 = vld [vmem:[%s226 + $0x5d0] sm:$0xff]
                %417 = vst [vmem:[%s227 + $0x2f0] sm:$0xff] %v416
                %v418 = vld [vmem:[%s226 + $0x5d8] sm:$0xff]
                %419 = vst [vmem:[%s227 + $0x2f8] sm:$0xff] %v418
                %v420 = vld [vmem:[%s226 + $0x600] sm:$0xff]
                %421 = vst [vmem:[%s227 + $0x300] sm:$0xff] %v420
                %v422 = vld [vmem:[%s226 + $0x608] sm:$0xff]
                %423 = vst [vmem:[%s227 + $0x308] sm:$0xff] %v422
                %v424 = vld [vmem:[%s226 + $0x610] sm:$0xff]
                %425 = vst [vmem:[%s227 + $0x310] sm:$0xff] %v424
                %v426 = vld [vmem:[%s226 + $0x618] sm:$0xff]
                %427 = vst [vmem:[%s227 + $0x318] sm:$0xff] %v426
                %v428 = vld [vmem:[%s226 + $0x640] sm:$0xff]
                %429 = vst [vmem:[%s227 + $0x320] sm:$0xff] %v428
                %v430 = vld [vmem:[%s226 + $0x648] sm:$0xff]
                %431 = vst [vmem:[%s227 + $0x328] sm:$0xff] %v430
                %v432 = vld [vmem:[%s226 + $0x650] sm:$0xff]
                %433 = vst [vmem:[%s227 + $0x330] sm:$0xff] %v432
                %v434 = vld [vmem:[%s226 + $0x658] sm:$0xff]
                %435 = vst [vmem:[%s227 + $0x338] sm:$0xff] %v434
                %v436 = vld [vmem:[%s226 + $0x680] sm:$0xff]
                %437 = vst [vmem:[%s227 + $0x340] sm:$0xff] %v436
                %v438 = vld [vmem:[%s226 + $0x688] sm:$0xff]
                %439 = vst [vmem:[%s227 + $0x348] sm:$0xff] %v438
                %v440 = vld [vmem:[%s226 + $0x690] sm:$0xff]
                %441 = vst [vmem:[%s227 + $0x350] sm:$0xff] %v440
                %v442 = vld [vmem:[%s226 + $0x698] sm:$0xff]
                %443 = vst [vmem:[%s227 + $0x358] sm:$0xff] %v442
                %v444 = vld [vmem:[%s226 + $0x6c0] sm:$0xff]
                %445 = vst [vmem:[%s227 + $0x360] sm:$0xff] %v444
                %v446 = vld [vmem:[%s226 + $0x6c8] sm:$0xff]
                %447 = vst [vmem:[%s227 + $0x368] sm:$0xff] %v446
                %v448 = vld [vmem:[%s226 + $0x6d0] sm:$0xff]
                %449 = vst [vmem:[%s227 + $0x370] sm:$0xff] %v448
                %v450 = vld [vmem:[%s226 + $0x6d8] sm:$0xff]
                %451 = vst [vmem:[%s227 + $0x378] sm:$0xff] %v450
                %v452 = vld [vmem:[%s226 + $0x700] sm:$0xff]
                %453 = vst [vmem:[%s227 + $0x380] sm:$0xff] %v452
                %v454 = vld [vmem:[%s226 + $0x708] sm:$0xff]
                %455 = vst [vmem:[%s227 + $0x388] sm:$0xff] %v454
                %v456 = vld [vmem:[%s226 + $0x710] sm:$0xff]
                %457 = vst [vmem:[%s227 + $0x390] sm:$0xff] %v456
                %v458 = vld [vmem:[%s226 + $0x718] sm:$0xff]
                %459 = vst [vmem:[%s227 + $0x398] sm:$0xff] %v458
                %v460 = vld [vmem:[%s226 + $0x740] sm:$0xff]
                %461 = vst [vmem:[%s227 + $0x3a0] sm:$0xff] %v460
                %v462 = vld [vmem:[%s226 + $0x748] sm:$0xff]
                %463 = vst [vmem:[%s227 + $0x3a8] sm:$0xff] %v462
                %v464 = vld [vmem:[%s226 + $0x750] sm:$0xff]
                %465 = vst [vmem:[%s227 + $0x3b0] sm:$0xff] %v464
                %v466 = vld [vmem:[%s226 + $0x758] sm:$0xff]
                %467 = vst [vmem:[%s227 + $0x3b8] sm:$0xff] %v466
                %v468 = vld [vmem:[%s226 + $0x780] sm:$0xff]
                %469 = vst [vmem:[%s227 + $0x3c0] sm:$0xff] %v468
                %v470 = vld [vmem:[%s226 + $0x788] sm:$0xff]
                %471 = vst [vmem:[%s227 + $0x3c8] sm:$0xff] %v470
                %v472 = vld [vmem:[%s226 + $0x790] sm:$0xff]
                %473 = vst [vmem:[%s227 + $0x3d0] sm:$0xff] %v472
                %v474 = vld [vmem:[%s226 + $0x798] sm:$0xff]
                %475 = vst [vmem:[%s227 + $0x3d8] sm:$0xff] %v474
                %v476 = vld [vmem:[%s226 + $0x7c0] sm:$0xff]
                %477 = vst [vmem:[%s227 + $0x3e0] sm:$0xff] %v476
                %v478 = vld [vmem:[%s226 + $0x7c8] sm:$0xff]
                %479 = vst [vmem:[%s227 + $0x3e8] sm:$0xff] %v478
                %v480 = vld [vmem:[%s226 + $0x7d0] sm:$0xff]
                %481 = vst [vmem:[%s227 + $0x3f0] sm:$0xff] %v480
                %v482 = vld [vmem:[%s226 + $0x7d8] sm:$0xff]
                %483 = vst [vmem:[%s227 + $0x3f8] sm:$0xff] %v482
                %v484 = vld [vmem:[%s226 + $0x800] sm:$0xff]
                %485 = vst [vmem:[%s227 + $0x400] sm:$0xff] %v484
                %v486 = vld [vmem:[%s226 + $0x808] sm:$0xff]
                %487 = vst [vmem:[%s227 + $0x408] sm:$0xff] %v486
                %v488 = vld [vmem:[%s226 + $0x810] sm:$0xff]
                %489 = vst [vmem:[%s227 + $0x410] sm:$0xff] %v488
                %v490 = vld [vmem:[%s226 + $0x818] sm:$0xff]
                %491 = vst [vmem:[%s227 + $0x418] sm:$0xff] %v490
                %v492 = vld [vmem:[%s226 + $0x840] sm:$0xff]
                %493 = vst [vmem:[%s227 + $0x420] sm:$0xff] %v492
                %v494 = vld [vmem:[%s226 + $0x848] sm:$0xff]
                %495 = vst [vmem:[%s227 + $0x428] sm:$0xff] %v494
                %v496 = vld [vmem:[%s226 + $0x850] sm:$0xff]
                %497 = vst [vmem:[%s227 + $0x430] sm:$0xff] %v496
                %v498 = vld [vmem:[%s226 + $0x858] sm:$0xff]
                %499 = vst [vmem:[%s227 + $0x438] sm:$0xff] %v498
                %v500 = vld [vmem:[%s226 + $0x880] sm:$0xff]
                %501 = vst [vmem:[%s227 + $0x440] sm:$0xff] %v500
                %v502 = vld [vmem:[%s226 + $0x888] sm:$0xff]
                %503 = vst [vmem:[%s227 + $0x448] sm:$0xff] %v502
                %v504 = vld [vmem:[%s226 + $0x890] sm:$0xff]
                %505 = vst [vmem:[%s227 + $0x450] sm:$0xff] %v504
                %v506 = vld [vmem:[%s226 + $0x898] sm:$0xff]
                %507 = vst [vmem:[%s227 + $0x458] sm:$0xff] %v506
                %v508 = vld [vmem:[%s226 + $0x8c0] sm:$0xff]
                %509 = vst [vmem:[%s227 + $0x460] sm:$0xff] %v508
                %v510 = vld [vmem:[%s226 + $0x8c8] sm:$0xff]
                %511 = vst [vmem:[%s227 + $0x468] sm:$0xff] %v510
                %v512 = vld [vmem:[%s226 + $0x8d0] sm:$0xff]
                %513 = vst [vmem:[%s227 + $0x470] sm:$0xff] %v512
                %v514 = vld [vmem:[%s226 + $0x8d8] sm:$0xff]
                %515 = vst [vmem:[%s227 + $0x478] sm:$0xff] %v514
                %v516 = vld [vmem:[%s226 + $0x900] sm:$0xff]
                %517 = vst [vmem:[%s227 + $0x480] sm:$0xff] %v516
                %v518 = vld [vmem:[%s226 + $0x908] sm:$0xff]
                %519 = vst [vmem:[%s227 + $0x488] sm:$0xff] %v518
                %v520 = vld [vmem:[%s226 + $0x910] sm:$0xff]
                %521 = vst [vmem:[%s227 + $0x490] sm:$0xff] %v520
                %v522 = vld [vmem:[%s226 + $0x918] sm:$0xff]
                %523 = vst [vmem:[%s227 + $0x498] sm:$0xff] %v522
                %v524 = vld [vmem:[%s226 + $0x940] sm:$0xff]
                %525 = vst [vmem:[%s227 + $0x4a0] sm:$0xff] %v524
                %v526 = vld [vmem:[%s226 + $0x948] sm:$0xff]
                %527 = vst [vmem:[%s227 + $0x4a8] sm:$0xff] %v526
                %v528 = vld [vmem:[%s226 + $0x950] sm:$0xff]
                %529 = vst [vmem:[%s227 + $0x4b0] sm:$0xff] %v528
                %v530 = vld [vmem:[%s226 + $0x958] sm:$0xff]
                %531 = vst [vmem:[%s227 + $0x4b8] sm:$0xff] %v530
                %v532 = vld [vmem:[%s226 + $0x980] sm:$0xff]
                %533 = vst [vmem:[%s227 + $0x4c0] sm:$0xff] %v532
                %v534 = vld [vmem:[%s226 + $0x988] sm:$0xff]
                %535 = vst [vmem:[%s227 + $0x4c8] sm:$0xff] %v534
                %v536 = vld [vmem:[%s226 + $0x990] sm:$0xff]
                %537 = vst [vmem:[%s227 + $0x4d0] sm:$0xff] %v536
                %v538 = vld [vmem:[%s226 + $0x998] sm:$0xff]
                %539 = vst [vmem:[%s227 + $0x4d8] sm:$0xff] %v538
                %v540 = vld [vmem:[%s226 + $0x9c0] sm:$0xff]
                %541 = vst [vmem:[%s227 + $0x4e0] sm:$0xff] %v540
                %v542 = vld [vmem:[%s226 + $0x9c8] sm:$0xff]
                %543 = vst [vmem:[%s227 + $0x4e8] sm:$0xff] %v542
                %v544 = vld [vmem:[%s226 + $0x9d0] sm:$0xff]
                %545 = vst [vmem:[%s227 + $0x4f0] sm:$0xff] %v544
                %v546 = vld [vmem:[%s226 + $0x9d8] sm:$0xff]
                %547 = vst [vmem:[%s227 + $0x4f8] sm:$0xff] %v546
                %v548 = vld [vmem:[%s226 + $0xa00] sm:$0xff]
                %549 = vst [vmem:[%s227 + $0x500] sm:$0xff] %v548
                %v550 = vld [vmem:[%s226 + $0xa08] sm:$0xff]
                %551 = vst [vmem:[%s227 + $0x508] sm:$0xff] %v550
                %v552 = vld [vmem:[%s226 + $0xa10] sm:$0xff]
                %553 = vst [vmem:[%s227 + $0x510] sm:$0xff] %v552
                %v554 = vld [vmem:[%s226 + $0xa18] sm:$0xff]
                %555 = vst [vmem:[%s227 + $0x518] sm:$0xff] %v554
                %v556 = vld [vmem:[%s226 + $0xa40] sm:$0xff]
                %557 = vst [vmem:[%s227 + $0x520] sm:$0xff] %v556
                %v558 = vld [vmem:[%s226 + $0xa48] sm:$0xff]
                %559 = vst [vmem:[%s227 + $0x528] sm:$0xff] %v558
                %v560 = vld [vmem:[%s226 + $0xa50] sm:$0xff]
                %561 = vst [vmem:[%s227 + $0x530] sm:$0xff] %v560
                %v562 = vld [vmem:[%s226 + $0xa58] sm:$0xff]
                %563 = vst [vmem:[%s227 + $0x538] sm:$0xff] %v562
                %v564 = vld [vmem:[%s226 + $0xa80] sm:$0xff]
                %565 = vst [vmem:[%s227 + $0x540] sm:$0xff] %v564
                %v566 = vld [vmem:[%s226 + $0xa88] sm:$0xff]
                %567 = vst [vmem:[%s227 + $0x548] sm:$0xff] %v566
                %v568 = vld [vmem:[%s226 + $0xa90] sm:$0xff]
                %569 = vst [vmem:[%s227 + $0x550] sm:$0xff] %v568
                %v570 = vld [vmem:[%s226 + $0xa98] sm:$0xff]
                %571 = vst [vmem:[%s227 + $0x558] sm:$0xff] %v570
                %v572 = vld [vmem:[%s226 + $0xac0] sm:$0xff]
                %573 = vst [vmem:[%s227 + $0x560] sm:$0xff] %v572
                %v574 = vld [vmem:[%s226 + $0xac8] sm:$0xff]
                %575 = vst [vmem:[%s227 + $0x568] sm:$0xff] %v574
                %v576 = vld [vmem:[%s226 + $0xad0] sm:$0xff]
                %577 = vst [vmem:[%s227 + $0x570] sm:$0xff] %v576
                %v578 = vld [vmem:[%s226 + $0xad8] sm:$0xff]
                %579 = vst [vmem:[%s227 + $0x578] sm:$0xff] %v578
                %v580 = vld [vmem:[%s226 + $0xb00] sm:$0xff]
                %581 = vst [vmem:[%s227 + $0x580] sm:$0xff] %v580
                %v582 = vld [vmem:[%s226 + $0xb08] sm:$0xff]
                %583 = vst [vmem:[%s227 + $0x588] sm:$0xff] %v582
                %v584 = vld [vmem:[%s226 + $0xb10] sm:$0xff]
                %585 = vst [vmem:[%s227 + $0x590] sm:$0xff] %v584
                %v586 = vld [vmem:[%s226 + $0xb18] sm:$0xff]
                %587 = vst [vmem:[%s227 + $0x598] sm:$0xff] %v586
                %v588 = vld [vmem:[%s226 + $0xb40] sm:$0xff]
                %589 = vst [vmem:[%s227 + $0x5a0] sm:$0xff] %v588
                %v590 = vld [vmem:[%s226 + $0xb48] sm:$0xff]
                %591 = vst [vmem:[%s227 + $0x5a8] sm:$0xff] %v590
                %v592 = vld [vmem:[%s226 + $0xb50] sm:$0xff]
                %593 = vst [vmem:[%s227 + $0x5b0] sm:$0xff] %v592
                %v594 = vld [vmem:[%s226 + $0xb58] sm:$0xff]
                %595 = vst [vmem:[%s227 + $0x5b8] sm:$0xff] %v594
                %v596 = vld [vmem:[%s226 + $0xb80] sm:$0xff]
                %597 = vst [vmem:[%s227 + $0x5c0] sm:$0xff] %v596
                %v598 = vld [vmem:[%s226 + $0xb88] sm:$0xff]
                %599 = vst [vmem:[%s227 + $0x5c8] sm:$0xff] %v598
                %v600 = vld [vmem:[%s226 + $0xb90] sm:$0xff]
                %601 = vst [vmem:[%s227 + $0x5d0] sm:$0xff] %v600
                %v602 = vld [vmem:[%s226 + $0xb98] sm:$0xff]
                %603 = vst [vmem:[%s227 + $0x5d8] sm:$0xff] %v602
                %v604 = vld [vmem:[%s226 + $0xbc0] sm:$0xff]
                %605 = vst [vmem:[%s227 + $0x5e0] sm:$0xff] %v604
                %v606 = vld [vmem:[%s226 + $0xbc8] sm:$0xff]
                %607 = vst [vmem:[%s227 + $0x5e8] sm:$0xff] %v606
                %v608 = vld [vmem:[%s226 + $0xbd0] sm:$0xff]
                %609 = vst [vmem:[%s227 + $0x5f0] sm:$0xff] %v608
                %v610 = vld [vmem:[%s226 + $0xbd8] sm:$0xff]
                %611 = vst [vmem:[%s227 + $0x5f8] sm:$0xff] %v610
                %v612 = vld [vmem:[%s226 + $0xc00] sm:$0xff]
                %613 = vst [vmem:[%s227 + $0x600] sm:$0xff] %v612
                %v614 = vld [vmem:[%s226 + $0xc08] sm:$0xff]
                %615 = vst [vmem:[%s227 + $0x608] sm:$0xff] %v614
                %v616 = vld [vmem:[%s226 + $0xc10] sm:$0xff]
                %617 = vst [vmem:[%s227 + $0x610] sm:$0xff] %v616
                %v618 = vld [vmem:[%s226 + $0xc18] sm:$0xff]
                %619 = vst [vmem:[%s227 + $0x618] sm:$0xff] %v618
                %v620 = vld [vmem:[%s226 + $0xc40] sm:$0xff]
                %621 = vst [vmem:[%s227 + $0x620] sm:$0xff] %v620
                %v622 = vld [vmem:[%s226 + $0xc48] sm:$0xff]
                %623 = vst [vmem:[%s227 + $0x628] sm:$0xff] %v622
                %v624 = vld [vmem:[%s226 + $0xc50] sm:$0xff]
                %625 = vst [vmem:[%s227 + $0x630] sm:$0xff] %v624
                %v626 = vld [vmem:[%s226 + $0xc58] sm:$0xff]
                %627 = vst [vmem:[%s227 + $0x638] sm:$0xff] %v626
                %v628 = vld [vmem:[%s226 + $0xc80] sm:$0xff]
                %629 = vst [vmem:[%s227 + $0x640] sm:$0xff] %v628
                %v630 = vld [vmem:[%s226 + $0xc88] sm:$0xff]
                %631 = vst [vmem:[%s227 + $0x648] sm:$0xff] %v630
                %v632 = vld [vmem:[%s226 + $0xc90] sm:$0xff]
                %633 = vst [vmem:[%s227 + $0x650] sm:$0xff] %v632
                %v634 = vld [vmem:[%s226 + $0xc98] sm:$0xff]
                %635 = vst [vmem:[%s227 + $0x658] sm:$0xff] %v634
                %v636 = vld [vmem:[%s226 + $0xcc0] sm:$0xff]
                %637 = vst [vmem:[%s227 + $0x660] sm:$0xff] %v636
                %v638 = vld [vmem:[%s226 + $0xcc8] sm:$0xff]
                %639 = vst [vmem:[%s227 + $0x668] sm:$0xff] %v638
                %v640 = vld [vmem:[%s226 + $0xcd0] sm:$0xff]
                %641 = vst [vmem:[%s227 + $0x670] sm:$0xff] %v640
                %v642 = vld [vmem:[%s226 + $0xcd8] sm:$0xff]
                %643 = vst [vmem:[%s227 + $0x678] sm:$0xff] %v642
                %v644 = vld [vmem:[%s226 + $0xd00] sm:$0xff]
                %645 = vst [vmem:[%s227 + $0x680] sm:$0xff] %v644
                %v646 = vld [vmem:[%s226 + $0xd08] sm:$0xff]
                %647 = vst [vmem:[%s227 + $0x688] sm:$0xff] %v646
                %v648 = vld [vmem:[%s226 + $0xd10] sm:$0xff]
                %649 = vst [vmem:[%s227 + $0x690] sm:$0xff] %v648
                %v650 = vld [vmem:[%s226 + $0xd18] sm:$0xff]
                %651 = vst [vmem:[%s227 + $0x698] sm:$0xff] %v650
                %v652 = vld [vmem:[%s226 + $0xd40] sm:$0xff]
                %653 = vst [vmem:[%s227 + $0x6a0] sm:$0xff] %v652
                %v654 = vld [vmem:[%s226 + $0xd48] sm:$0xff]
                %655 = vst [vmem:[%s227 + $0x6a8] sm:$0xff] %v654
                %v656 = vld [vmem:[%s226 + $0xd50] sm:$0xff]
                %657 = vst [vmem:[%s227 + $0x6b0] sm:$0xff] %v656
                %v658 = vld [vmem:[%s226 + $0xd58] sm:$0xff]
                %659 = vst [vmem:[%s227 + $0x6b8] sm:$0xff] %v658
                %v660 = vld [vmem:[%s226 + $0xd80] sm:$0xff]
                %661 = vst [vmem:[%s227 + $0x6c0] sm:$0xff] %v660
                %v662 = vld [vmem:[%s226 + $0xd88] sm:$0xff]
                %663 = vst [vmem:[%s227 + $0x6c8] sm:$0xff] %v662
                %v664 = vld [vmem:[%s226 + $0xd90] sm:$0xff]
                %665 = vst [vmem:[%s227 + $0x6d0] sm:$0xff] %v664
                %v666 = vld [vmem:[%s226 + $0xd98] sm:$0xff]
                %667 = vst [vmem:[%s227 + $0x6d8] sm:$0xff] %v666
                %v668 = vld [vmem:[%s226 + $0xdc0] sm:$0xff]
                %669 = vst [vmem:[%s227 + $0x6e0] sm:$0xff] %v668
                %v670 = vld [vmem:[%s226 + $0xdc8] sm:$0xff]
                %671 = vst [vmem:[%s227 + $0x6e8] sm:$0xff] %v670
                %v672 = vld [vmem:[%s226 + $0xdd0] sm:$0xff]
                %673 = vst [vmem:[%s227 + $0x6f0] sm:$0xff] %v672
                %v674 = vld [vmem:[%s226 + $0xdd8] sm:$0xff]
                %675 = vst [vmem:[%s227 + $0x6f8] sm:$0xff] %v674
                %v676 = vld [vmem:[%s226 + $0xe00] sm:$0xff]
                %677 = vst [vmem:[%s227 + $0x700] sm:$0xff] %v676
                %v678 = vld [vmem:[%s226 + $0xe08] sm:$0xff]
                %679 = vst [vmem:[%s227 + $0x708] sm:$0xff] %v678
                %v680 = vld [vmem:[%s226 + $0xe10] sm:$0xff]
                %681 = vst [vmem:[%s227 + $0x710] sm:$0xff] %v680
                %v682 = vld [vmem:[%s226 + $0xe18] sm:$0xff]
                %683 = vst [vmem:[%s227 + $0x718] sm:$0xff] %v682
                %v684 = vld [vmem:[%s226 + $0xe40] sm:$0xff]
                %685 = vst [vmem:[%s227 + $0x720] sm:$0xff] %v684
                %v686 = vld [vmem:[%s226 + $0xe48] sm:$0xff]
                %687 = vst [vmem:[%s227 + $0x728] sm:$0xff] %v686
                %v688 = vld [vmem:[%s226 + $0xe50] sm:$0xff]
                %689 = vst [vmem:[%s227 + $0x730] sm:$0xff] %v688
                %v690 = vld [vmem:[%s226 + $0xe58] sm:$0xff]
                %691 = vst [vmem:[%s227 + $0x738] sm:$0xff] %v690
                %v692 = vld [vmem:[%s226 + $0xe80] sm:$0xff]
                %693 = vst [vmem:[%s227 + $0x740] sm:$0xff] %v692
                %v694 = vld [vmem:[%s226 + $0xe88] sm:$0xff]
                %695 = vst [vmem:[%s227 + $0x748] sm:$0xff] %v694
                %v696 = vld [vmem:[%s226 + $0xe90] sm:$0xff]
                %697 = vst [vmem:[%s227 + $0x750] sm:$0xff] %v696
                %v698 = vld [vmem:[%s226 + $0xe98] sm:$0xff]
                %699 = vst [vmem:[%s227 + $0x758] sm:$0xff] %v698
                %v700 = vld [vmem:[%s226 + $0xec0] sm:$0xff]
                %701 = vst [vmem:[%s227 + $0x760] sm:$0xff] %v700
                %v702 = vld [vmem:[%s226 + $0xec8] sm:$0xff]
                %703 = vst [vmem:[%s227 + $0x768] sm:$0xff] %v702
                %v704 = vld [vmem:[%s226 + $0xed0] sm:$0xff]
                %705 = vst [vmem:[%s227 + $0x770] sm:$0xff] %v704
                %v706 = vld [vmem:[%s226 + $0xed8] sm:$0xff]
                %707 = vst [vmem:[%s227 + $0x778] sm:$0xff] %v706
                %v708 = vld [vmem:[%s226 + $0xf00] sm:$0xff]
                %709 = vst [vmem:[%s227 + $0x780] sm:$0xff] %v708
                %v710 = vld [vmem:[%s226 + $0xf08] sm:$0xff]
                %711 = vst [vmem:[%s227 + $0x788] sm:$0xff] %v710
                %v712 = vld [vmem:[%s226 + $0xf10] sm:$0xff]
                %713 = vst [vmem:[%s227 + $0x790] sm:$0xff] %v712
                %v714 = vld [vmem:[%s226 + $0xf18] sm:$0xff]
                %715 = vst [vmem:[%s227 + $0x798] sm:$0xff] %v714
                %v716 = vld [vmem:[%s226 + $0xf40] sm:$0xff]
                %717 = vst [vmem:[%s227 + $0x7a0] sm:$0xff] %v716
                %v718 = vld [vmem:[%s226 + $0xf48] sm:$0xff]
                %719 = vst [vmem:[%s227 + $0x7a8] sm:$0xff] %v718
                %v720 = vld [vmem:[%s226 + $0xf50] sm:$0xff]
                %721 = vst [vmem:[%s227 + $0x7b0] sm:$0xff] %v720
                %v722 = vld [vmem:[%s226 + $0xf58] sm:$0xff]
                %723 = vst [vmem:[%s227 + $0x7b8] sm:$0xff] %v722
                %v724 = vld [vmem:[%s226 + $0xf80] sm:$0xff]
                %725 = vst [vmem:[%s227 + $0x7c0] sm:$0xff] %v724
                %v726 = vld [vmem:[%s226 + $0xf88] sm:$0xff]
                %727 = vst [vmem:[%s227 + $0x7c8] sm:$0xff] %v726
                %v728 = vld [vmem:[%s226 + $0xf90] sm:$0xff]
                %729 = vst [vmem:[%s227 + $0x7d0] sm:$0xff] %v728
                %v730 = vld [vmem:[%s226 + $0xf98] sm:$0xff]
                %731 = vst [vmem:[%s227 + $0x7d8] sm:$0xff] %v730
                %v732 = vld [vmem:[%s226 + $0xfc0] sm:$0xff]
                %733 = vst [vmem:[%s227 + $0x7e0] sm:$0xff] %v732
                %v734 = vld [vmem:[%s226 + $0xfc8] sm:$0xff]
                %735 = vst [vmem:[%s227 + $0x7e8] sm:$0xff] %v734
                %v736 = vld [vmem:[%s226 + $0xfd0] sm:$0xff]
                %737 = vst [vmem:[%s227 + $0x7f0] sm:$0xff] %v736
                %v738 = vld [vmem:[%s226 + $0xfd8] sm:$0xff]
                %739 = vst [vmem:[%s227 + $0x7f8] sm:$0xff] %v738
                %v740 = vld [vmem:[%s226 + $0x1000] sm:$0xff]
                %741 = vst [vmem:[%s227 + $0x800] sm:$0xff] %v740
                %v742 = vld [vmem:[%s226 + $0x1008] sm:$0xff]
                %743 = vst [vmem:[%s227 + $0x808] sm:$0xff] %v742
                %v744 = vld [vmem:[%s226 + $0x1010] sm:$0xff]
                %745 = vst [vmem:[%s227 + $0x810] sm:$0xff] %v744
                %v746 = vld [vmem:[%s226 + $0x1018] sm:$0xff]
                %747 = vst [vmem:[%s227 + $0x818] sm:$0xff] %v746
                %v748 = vld [vmem:[%s226 + $0x1040] sm:$0xff]
                %749 = vst [vmem:[%s227 + $0x820] sm:$0xff] %v748
                %v750 = vld [vmem:[%s226 + $0x1048] sm:$0xff]
                %751 = vst [vmem:[%s227 + $0x828] sm:$0xff] %v750
                %v752 = vld [vmem:[%s226 + $0x1050] sm:$0xff]
                %753 = vst [vmem:[%s227 + $0x830] sm:$0xff] %v752
                %v754 = vld [vmem:[%s226 + $0x1058] sm:$0xff]
                %755 = vst [vmem:[%s227 + $0x838] sm:$0xff] %v754
                %v756 = vld [vmem:[%s226 + $0x1080] sm:$0xff]
                %757 = vst [vmem:[%s227 + $0x840] sm:$0xff] %v756
                %v758 = vld [vmem:[%s226 + $0x1088] sm:$0xff]
                %759 = vst [vmem:[%s227 + $0x848] sm:$0xff] %v758
                %v760 = vld [vmem:[%s226 + $0x1090] sm:$0xff]
                %761 = vst [vmem:[%s227 + $0x850] sm:$0xff] %v760
                %v762 = vld [vmem:[%s226 + $0x1098] sm:$0xff]
                %763 = vst [vmem:[%s227 + $0x858] sm:$0xff] %v762
                %v764 = vld [vmem:[%s226 + $0x10c0] sm:$0xff]
                %765 = vst [vmem:[%s227 + $0x860] sm:$0xff] %v764
                %v766 = vld [vmem:[%s226 + $0x10c8] sm:$0xff]
                %767 = vst [vmem:[%s227 + $0x868] sm:$0xff] %v766
                %v768 = vld [vmem:[%s226 + $0x10d0] sm:$0xff]
                %769 = vst [vmem:[%s227 + $0x870] sm:$0xff] %v768
                %v770 = vld [vmem:[%s226 + $0x10d8] sm:$0xff]
                %771 = vst [vmem:[%s227 + $0x878] sm:$0xff] %v770
                %v772 = vld [vmem:[%s226 + $0x1100] sm:$0xff]
                %773 = vst [vmem:[%s227 + $0x880] sm:$0xff] %v772
                %v774 = vld [vmem:[%s226 + $0x1108] sm:$0xff]
                %775 = vst [vmem:[%s227 + $0x888] sm:$0xff] %v774
                %v776 = vld [vmem:[%s226 + $0x1110] sm:$0xff]
                %777 = vst [vmem:[%s227 + $0x890] sm:$0xff] %v776
                %v778 = vld [vmem:[%s226 + $0x1118] sm:$0xff]
                %779 = vst [vmem:[%s227 + $0x898] sm:$0xff] %v778
                %v780 = vld [vmem:[%s226 + $0x1140] sm:$0xff]
                %781 = vst [vmem:[%s227 + $0x8a0] sm:$0xff] %v780
                %v782 = vld [vmem:[%s226 + $0x1148] sm:$0xff]
                %783 = vst [vmem:[%s227 + $0x8a8] sm:$0xff] %v782
                %v784 = vld [vmem:[%s226 + $0x1150] sm:$0xff]
                %785 = vst [vmem:[%s227 + $0x8b0] sm:$0xff] %v784
                %v786 = vld [vmem:[%s226 + $0x1158] sm:$0xff]
                %787 = vst [vmem:[%s227 + $0x8b8] sm:$0xff] %v786
                %v788 = vld [vmem:[%s226 + $0x1180] sm:$0xff]
                %789 = vst [vmem:[%s227 + $0x8c0] sm:$0xff] %v788
                %v790 = vld [vmem:[%s226 + $0x1188] sm:$0xff]
                %791 = vst [vmem:[%s227 + $0x8c8] sm:$0xff] %v790
                %v792 = vld [vmem:[%s226 + $0x1190] sm:$0xff]
                %793 = vst [vmem:[%s227 + $0x8d0] sm:$0xff] %v792
                %v794 = vld [vmem:[%s226 + $0x1198] sm:$0xff]
                %795 = vst [vmem:[%s227 + $0x8d8] sm:$0xff] %v794
                %v796 = vld [vmem:[%s226 + $0x11c0] sm:$0xff]
                %797 = vst [vmem:[%s227 + $0x8e0] sm:$0xff] %v796
                %v798 = vld [vmem:[%s226 + $0x11c8] sm:$0xff]
                %799 = vst [vmem:[%s227 + $0x8e8] sm:$0xff] %v798
                %v800 = vld [vmem:[%s226 + $0x11d0] sm:$0xff]
                %801 = vst [vmem:[%s227 + $0x8f0] sm:$0xff] %v800
                %v802 = vld [vmem:[%s226 + $0x11d8] sm:$0xff]
                %803 = vst [vmem:[%s227 + $0x8f8] sm:$0xff] %v802
                %v804 = vld [vmem:[%s226 + $0x1200] sm:$0xff]
                %805 = vst [vmem:[%s227 + $0x900] sm:$0xff] %v804
                %v806 = vld [vmem:[%s226 + $0x1208] sm:$0xff]
                %807 = vst [vmem:[%s227 + $0x908] sm:$0xff] %v806
                %v808 = vld [vmem:[%s226 + $0x1210] sm:$0xff]
                %809 = vst [vmem:[%s227 + $0x910] sm:$0xff] %v808
                %v810 = vld [vmem:[%s226 + $0x1218] sm:$0xff]
                %811 = vst [vmem:[%s227 + $0x918] sm:$0xff] %v810
                %v812 = vld [vmem:[%s226 + $0x1240] sm:$0xff]
                %813 = vst [vmem:[%s227 + $0x920] sm:$0xff] %v812
                %v814 = vld [vmem:[%s226 + $0x1248] sm:$0xff]
                %815 = vst [vmem:[%s227 + $0x928] sm:$0xff] %v814
                %v816 = vld [vmem:[%s226 + $0x1250] sm:$0xff]
                %817 = vst [vmem:[%s227 + $0x930] sm:$0xff] %v816
                %v818 = vld [vmem:[%s226 + $0x1258] sm:$0xff]
                %819 = vst [vmem:[%s227 + $0x938] sm:$0xff] %v818
                %v820 = vld [vmem:[%s226 + $0x1280] sm:$0xff]
                %821 = vst [vmem:[%s227 + $0x940] sm:$0xff] %v820
                %v822 = vld [vmem:[%s226 + $0x1288] sm:$0xff]
                %823 = vst [vmem:[%s227 + $0x948] sm:$0xff] %v822
                %v824 = vld [vmem:[%s226 + $0x1290] sm:$0xff]
                %825 = vst [vmem:[%s227 + $0x950] sm:$0xff] %v824
                %v826 = vld [vmem:[%s226 + $0x1298] sm:$0xff]
                %827 = vst [vmem:[%s227 + $0x958] sm:$0xff] %v826
                %v828 = vld [vmem:[%s226 + $0x12c0] sm:$0xff]
                %829 = vst [vmem:[%s227 + $0x960] sm:$0xff] %v828
                %v830 = vld [vmem:[%s226 + $0x12c8] sm:$0xff]
                %831 = vst [vmem:[%s227 + $0x968] sm:$0xff] %v830
                %v832 = vld [vmem:[%s226 + $0x12d0] sm:$0xff]
                %833 = vst [vmem:[%s227 + $0x970] sm:$0xff] %v832
                %v834 = vld [vmem:[%s226 + $0x12d8] sm:$0xff]
                %835 = vst [vmem:[%s227 + $0x978] sm:$0xff] %v834
                %v836 = vld [vmem:[%s226 + $0x1300] sm:$0xff]
                %837 = vst [vmem:[%s227 + $0x980] sm:$0xff] %v836
                %v838 = vld [vmem:[%s226 + $0x1308] sm:$0xff]
                %839 = vst [vmem:[%s227 + $0x988] sm:$0xff] %v838
                %v840 = vld [vmem:[%s226 + $0x1310] sm:$0xff]
                %841 = vst [vmem:[%s227 + $0x990] sm:$0xff] %v840
                %v842 = vld [vmem:[%s226 + $0x1318] sm:$0xff]
                %843 = vst [vmem:[%s227 + $0x998] sm:$0xff] %v842
                %v844 = vld [vmem:[%s226 + $0x1340] sm:$0xff]
                %845 = vst [vmem:[%s227 + $0x9a0] sm:$0xff] %v844
                %v846 = vld [vmem:[%s226 + $0x1348] sm:$0xff]
                %847 = vst [vmem:[%s227 + $0x9a8] sm:$0xff] %v846
                %v848 = vld [vmem:[%s226 + $0x1350] sm:$0xff]
                %849 = vst [vmem:[%s227 + $0x9b0] sm:$0xff] %v848
                %v850 = vld [vmem:[%s226 + $0x1358] sm:$0xff]
                %851 = vst [vmem:[%s227 + $0x9b8] sm:$0xff] %v850
                %v852 = vld [vmem:[%s226 + $0x1380] sm:$0xff]
                %853 = vst [vmem:[%s227 + $0x9c0] sm:$0xff] %v852
                %v854 = vld [vmem:[%s226 + $0x1388] sm:$0xff]
                %855 = vst [vmem:[%s227 + $0x9c8] sm:$0xff] %v854
                %v856 = vld [vmem:[%s226 + $0x1390] sm:$0xff]
                %857 = vst [vmem:[%s227 + $0x9d0] sm:$0xff] %v856
                %v858 = vld [vmem:[%s226 + $0x1398] sm:$0xff]
                %859 = vst [vmem:[%s227 + $0x9d8] sm:$0xff] %v858
                %v860 = vld [vmem:[%s226 + $0x13c0] sm:$0xff]
                %861 = vst [vmem:[%s227 + $0x9e0] sm:$0xff] %v860
                %v862 = vld [vmem:[%s226 + $0x13c8] sm:$0xff]
                %863 = vst [vmem:[%s227 + $0x9e8] sm:$0xff] %v862
                %v864 = vld [vmem:[%s226 + $0x13d0] sm:$0xff]
                %865 = vst [vmem:[%s227 + $0x9f0] sm:$0xff] %v864
                %v866 = vld [vmem:[%s226 + $0x13d8] sm:$0xff]
                %867 = vst [vmem:[%s227 + $0x9f8] sm:$0xff] %v866
                %v868 = vld [vmem:[%s226 + $0x1400] sm:$0xff]
                %869 = vst [vmem:[%s227 + $0xa00] sm:$0xff] %v868
                %v870 = vld [vmem:[%s226 + $0x1408] sm:$0xff]
                %871 = vst [vmem:[%s227 + $0xa08] sm:$0xff] %v870
                %v872 = vld [vmem:[%s226 + $0x1410] sm:$0xff]
                %873 = vst [vmem:[%s227 + $0xa10] sm:$0xff] %v872
                %v874 = vld [vmem:[%s226 + $0x1418] sm:$0xff]
                %875 = vst [vmem:[%s227 + $0xa18] sm:$0xff] %v874
                %v876 = vld [vmem:[%s226 + $0x1440] sm:$0xff]
                %877 = vst [vmem:[%s227 + $0xa20] sm:$0xff] %v876
                %v878 = vld [vmem:[%s226 + $0x1448] sm:$0xff]
                %879 = vst [vmem:[%s227 + $0xa28] sm:$0xff] %v878
                %v880 = vld [vmem:[%s226 + $0x1450] sm:$0xff]
                %881 = vst [vmem:[%s227 + $0xa30] sm:$0xff] %v880
                %v882 = vld [vmem:[%s226 + $0x1458] sm:$0xff]
                %883 = vst [vmem:[%s227 + $0xa38] sm:$0xff] %v882
                %v884 = vld [vmem:[%s226 + $0x1480] sm:$0xff]
                %885 = vst [vmem:[%s227 + $0xa40] sm:$0xff] %v884
                %v886 = vld [vmem:[%s226 + $0x1488] sm:$0xff]
                %887 = vst [vmem:[%s227 + $0xa48] sm:$0xff] %v886
                %v888 = vld [vmem:[%s226 + $0x1490] sm:$0xff]
                %889 = vst [vmem:[%s227 + $0xa50] sm:$0xff] %v888
                %v890 = vld [vmem:[%s226 + $0x1498] sm:$0xff]
                %891 = vst [vmem:[%s227 + $0xa58] sm:$0xff] %v890
                %v892 = vld [vmem:[%s226 + $0x14c0] sm:$0xff]
                %893 = vst [vmem:[%s227 + $0xa60] sm:$0xff] %v892
                %v894 = vld [vmem:[%s226 + $0x14c8] sm:$0xff]
                %895 = vst [vmem:[%s227 + $0xa68] sm:$0xff] %v894
                %v896 = vld [vmem:[%s226 + $0x14d0] sm:$0xff]
                %897 = vst [vmem:[%s227 + $0xa70] sm:$0xff] %v896
                %v898 = vld [vmem:[%s226 + $0x14d8] sm:$0xff]
                %899 = vst [vmem:[%s227 + $0xa78] sm:$0xff] %v898
                %v900 = vld [vmem:[%s226 + $0x1500] sm:$0xff]
                %901 = vst [vmem:[%s227 + $0xa80] sm:$0xff] %v900
                %v902 = vld [vmem:[%s226 + $0x1508] sm:$0xff]
                %903 = vst [vmem:[%s227 + $0xa88] sm:$0xff] %v902
                %v904 = vld [vmem:[%s226 + $0x1510] sm:$0xff]
                %905 = vst [vmem:[%s227 + $0xa90] sm:$0xff] %v904
                %v906 = vld [vmem:[%s226 + $0x1518] sm:$0xff]
                %907 = vst [vmem:[%s227 + $0xa98] sm:$0xff] %v906
                %v908 = vld [vmem:[%s226 + $0x1540] sm:$0xff]
                %909 = vst [vmem:[%s227 + $0xaa0] sm:$0xff] %v908
                %v910 = vld [vmem:[%s226 + $0x1548] sm:$0xff]
                %911 = vst [vmem:[%s227 + $0xaa8] sm:$0xff] %v910
                %v912 = vld [vmem:[%s226 + $0x1550] sm:$0xff]
                %913 = vst [vmem:[%s227 + $0xab0] sm:$0xff] %v912
                %v914 = vld [vmem:[%s226 + $0x1558] sm:$0xff]
                %915 = vst [vmem:[%s227 + $0xab8] sm:$0xff] %v914
                %v916 = vld [vmem:[%s226 + $0x1580] sm:$0xff]
                %917 = vst [vmem:[%s227 + $0xac0] sm:$0xff] %v916
                %v918 = vld [vmem:[%s226 + $0x1588] sm:$0xff]
                %919 = vst [vmem:[%s227 + $0xac8] sm:$0xff] %v918
                %v920 = vld [vmem:[%s226 + $0x1590] sm:$0xff]
                %921 = vst [vmem:[%s227 + $0xad0] sm:$0xff] %v920
                %v922 = vld [vmem:[%s226 + $0x1598] sm:$0xff]
                %923 = vst [vmem:[%s227 + $0xad8] sm:$0xff] %v922
                %v924 = vld [vmem:[%s226 + $0x15c0] sm:$0xff]
                %925 = vst [vmem:[%s227 + $0xae0] sm:$0xff] %v924
                %v926 = vld [vmem:[%s226 + $0x15c8] sm:$0xff]
                %927 = vst [vmem:[%s227 + $0xae8] sm:$0xff] %v926
                %v928 = vld [vmem:[%s226 + $0x15d0] sm:$0xff]
                %929 = vst [vmem:[%s227 + $0xaf0] sm:$0xff] %v928
                %v930 = vld [vmem:[%s226 + $0x15d8] sm:$0xff]
                %931 = vst [vmem:[%s227 + $0xaf8] sm:$0xff] %v930
                %v932 = vld [vmem:[%s226 + $0x1600] sm:$0xff]
                %933 = vst [vmem:[%s227 + $0xb00] sm:$0xff] %v932
                %v934 = vld [vmem:[%s226 + $0x1608] sm:$0xff]
                %935 = vst [vmem:[%s227 + $0xb08] sm:$0xff] %v934
                %v936 = vld [vmem:[%s226 + $0x1610] sm:$0xff]
                %937 = vst [vmem:[%s227 + $0xb10] sm:$0xff] %v936
                %v938 = vld [vmem:[%s226 + $0x1618] sm:$0xff]
                %939 = vst [vmem:[%s227 + $0xb18] sm:$0xff] %v938
                %v940 = vld [vmem:[%s226 + $0x1640] sm:$0xff]
                %941 = vst [vmem:[%s227 + $0xb20] sm:$0xff] %v940
                %v942 = vld [vmem:[%s226 + $0x1648] sm:$0xff]
                %943 = vst [vmem:[%s227 + $0xb28] sm:$0xff] %v942
                %v944 = vld [vmem:[%s226 + $0x1650] sm:$0xff]
                %945 = vst [vmem:[%s227 + $0xb30] sm:$0xff] %v944
                %v946 = vld [vmem:[%s226 + $0x1658] sm:$0xff]
                %947 = vst [vmem:[%s227 + $0xb38] sm:$0xff] %v946
                %v948 = vld [vmem:[%s226 + $0x1680] sm:$0xff]
                %949 = vst [vmem:[%s227 + $0xb40] sm:$0xff] %v948
                %v950 = vld [vmem:[%s226 + $0x1688] sm:$0xff]
                %951 = vst [vmem:[%s227 + $0xb48] sm:$0xff] %v950
                %v952 = vld [vmem:[%s226 + $0x1690] sm:$0xff]
                %953 = vst [vmem:[%s227 + $0xb50] sm:$0xff] %v952
                %v954 = vld [vmem:[%s226 + $0x1698] sm:$0xff]
                %955 = vst [vmem:[%s227 + $0xb58] sm:$0xff] %v954
                %v956 = vld [vmem:[%s226 + $0x16c0] sm:$0xff]
                %957 = vst [vmem:[%s227 + $0xb60] sm:$0xff] %v956
                %v958 = vld [vmem:[%s226 + $0x16c8] sm:$0xff]
                %959 = vst [vmem:[%s227 + $0xb68] sm:$0xff] %v958
                %v960 = vld [vmem:[%s226 + $0x16d0] sm:$0xff]
                %961 = vst [vmem:[%s227 + $0xb70] sm:$0xff] %v960
                %v962 = vld [vmem:[%s226 + $0x16d8] sm:$0xff]
                %963 = vst [vmem:[%s227 + $0xb78] sm:$0xff] %v962
                %v964 = vld [vmem:[%s226 + $0x1700] sm:$0xff]
                %965 = vst [vmem:[%s227 + $0xb80] sm:$0xff] %v964
                %v966 = vld [vmem:[%s226 + $0x1708] sm:$0xff]
                %967 = vst [vmem:[%s227 + $0xb88] sm:$0xff] %v966
                %v968 = vld [vmem:[%s226 + $0x1710] sm:$0xff]
                %969 = vst [vmem:[%s227 + $0xb90] sm:$0xff] %v968
                %v970 = vld [vmem:[%s226 + $0x1718] sm:$0xff]
                %971 = vst [vmem:[%s227 + $0xb98] sm:$0xff] %v970
                %v972 = vld [vmem:[%s226 + $0x1740] sm:$0xff]
                %973 = vst [vmem:[%s227 + $0xba0] sm:$0xff] %v972
                %v974 = vld [vmem:[%s226 + $0x1748] sm:$0xff]
                %975 = vst [vmem:[%s227 + $0xba8] sm:$0xff] %v974
                %v976 = vld [vmem:[%s226 + $0x1750] sm:$0xff]
                %977 = vst [vmem:[%s227 + $0xbb0] sm:$0xff] %v976
                %v978 = vld [vmem:[%s226 + $0x1758] sm:$0xff]
                %979 = vst [vmem:[%s227 + $0xbb8] sm:$0xff] %v978
                %v980 = vld [vmem:[%s226 + $0x1780] sm:$0xff]
                %981 = vst [vmem:[%s227 + $0xbc0] sm:$0xff] %v980
                %v982 = vld [vmem:[%s226 + $0x1788] sm:$0xff]
                %983 = vst [vmem:[%s227 + $0xbc8] sm:$0xff] %v982
                %v984 = vld [vmem:[%s226 + $0x1790] sm:$0xff]
                %985 = vst [vmem:[%s227 + $0xbd0] sm:$0xff] %v984
                %v986 = vld [vmem:[%s226 + $0x1798] sm:$0xff]
                %987 = vst [vmem:[%s227 + $0xbd8] sm:$0xff] %v986
                %v988 = vld [vmem:[%s226 + $0x17c0] sm:$0xff]
                %989 = vst [vmem:[%s227 + $0xbe0] sm:$0xff] %v988
                %v990 = vld [vmem:[%s226 + $0x17c8] sm:$0xff]
                %991 = vst [vmem:[%s227 + $0xbe8] sm:$0xff] %v990
                %v992 = vld [vmem:[%s226 + $0x17d0] sm:$0xff]
                %993 = vst [vmem:[%s227 + $0xbf0] sm:$0xff] %v992
                %v994 = vld [vmem:[%s226 + $0x17d8] sm:$0xff]
                %995 = vst [vmem:[%s227 + $0xbf8] sm:$0xff] %v994
                %v996 = vld [vmem:[%s226 + $0x1800] sm:$0xff]
                %997 = vst [vmem:[%s227 + $0xc00] sm:$0xff] %v996
                %v998 = vld [vmem:[%s226 + $0x1808] sm:$0xff]
                %999 = vst [vmem:[%s227 + $0xc08] sm:$0xff] %v998
                %v1000 = vld [vmem:[%s226 + $0x1810] sm:$0xff]
                %1001 = vst [vmem:[%s227 + $0xc10] sm:$0xff] %v1000
                %v1002 = vld [vmem:[%s226 + $0x1818] sm:$0xff]
                %1003 = vst [vmem:[%s227 + $0xc18] sm:$0xff] %v1002
                %v1004 = vld [vmem:[%s226 + $0x1840] sm:$0xff]
                %1005 = vst [vmem:[%s227 + $0xc20] sm:$0xff] %v1004
                %v1006 = vld [vmem:[%s226 + $0x1848] sm:$0xff]
                %1007 = vst [vmem:[%s227 + $0xc28] sm:$0xff] %v1006
                %v1008 = vld [vmem:[%s226 + $0x1850] sm:$0xff]
                %1009 = vst [vmem:[%s227 + $0xc30] sm:$0xff] %v1008
                %v1010 = vld [vmem:[%s226 + $0x1858] sm:$0xff]
                %1011 = vst [vmem:[%s227 + $0xc38] sm:$0xff] %v1010
                %v1012 = vld [vmem:[%s226 + $0x1880] sm:$0xff]
                %1013 = vst [vmem:[%s227 + $0xc40] sm:$0xff] %v1012
                %v1014 = vld [vmem:[%s226 + $0x1888] sm:$0xff]
                %1015 = vst [vmem:[%s227 + $0xc48] sm:$0xff] %v1014
                %v1016 = vld [vmem:[%s226 + $0x1890] sm:$0xff]
                %1017 = vst [vmem:[%s227 + $0xc50] sm:$0xff] %v1016
                %v1018 = vld [vmem:[%s226 + $0x1898] sm:$0xff]
                %1019 = vst [vmem:[%s227 + $0xc58] sm:$0xff] %v1018
                %v1020 = vld [vmem:[%s226 + $0x18c0] sm:$0xff]
                %1021 = vst [vmem:[%s227 + $0xc60] sm:$0xff] %v1020
                %v1022 = vld [vmem:[%s226 + $0x18c8] sm:$0xff]
                %1023 = vst [vmem:[%s227 + $0xc68] sm:$0xff] %v1022
                %v1024 = vld [vmem:[%s226 + $0x18d0] sm:$0xff]
                %1025 = vst [vmem:[%s227 + $0xc70] sm:$0xff] %v1024
                %v1026 = vld [vmem:[%s226 + $0x18d8] sm:$0xff]
                %1027 = vst [vmem:[%s227 + $0xc78] sm:$0xff] %v1026
                %v1028 = vld [vmem:[%s226 + $0x1900] sm:$0xff]
                %1029 = vst [vmem:[%s227 + $0xc80] sm:$0xff] %v1028
                %v1030 = vld [vmem:[%s226 + $0x1908] sm:$0xff]
                %1031 = vst [vmem:[%s227 + $0xc88] sm:$0xff] %v1030
                %v1032 = vld [vmem:[%s226 + $0x1910] sm:$0xff]
                %1033 = vst [vmem:[%s227 + $0xc90] sm:$0xff] %v1032
                %v1034 = vld [vmem:[%s226 + $0x1918] sm:$0xff]
                %1035 = vst [vmem:[%s227 + $0xc98] sm:$0xff] %v1034
                %v1036 = vld [vmem:[%s226 + $0x1940] sm:$0xff]
                %1037 = vst [vmem:[%s227 + $0xca0] sm:$0xff] %v1036
                %v1038 = vld [vmem:[%s226 + $0x1948] sm:$0xff]
                %1039 = vst [vmem:[%s227 + $0xca8] sm:$0xff] %v1038
                %v1040 = vld [vmem:[%s226 + $0x1950] sm:$0xff]
                %1041 = vst [vmem:[%s227 + $0xcb0] sm:$0xff] %v1040
                %v1042 = vld [vmem:[%s226 + $0x1958] sm:$0xff]
                %1043 = vst [vmem:[%s227 + $0xcb8] sm:$0xff] %v1042
                %v1044 = vld [vmem:[%s226 + $0x1980] sm:$0xff]
                %1045 = vst [vmem:[%s227 + $0xcc0] sm:$0xff] %v1044
                %v1046 = vld [vmem:[%s226 + $0x1988] sm:$0xff]
                %1047 = vst [vmem:[%s227 + $0xcc8] sm:$0xff] %v1046
                %v1048 = vld [vmem:[%s226 + $0x1990] sm:$0xff]
                %1049 = vst [vmem:[%s227 + $0xcd0] sm:$0xff] %v1048
                %v1050 = vld [vmem:[%s226 + $0x1998] sm:$0xff]
                %1051 = vst [vmem:[%s227 + $0xcd8] sm:$0xff] %v1050
                %v1052 = vld [vmem:[%s226 + $0x19c0] sm:$0xff]
                %1053 = vst [vmem:[%s227 + $0xce0] sm:$0xff] %v1052
                %v1054 = vld [vmem:[%s226 + $0x19c8] sm:$0xff]
                %1055 = vst [vmem:[%s227 + $0xce8] sm:$0xff] %v1054
                %v1056 = vld [vmem:[%s226 + $0x19d0] sm:$0xff]
                %1057 = vst [vmem:[%s227 + $0xcf0] sm:$0xff] %v1056
                %v1058 = vld [vmem:[%s226 + $0x19d8] sm:$0xff]
                %1059 = vst [vmem:[%s227 + $0xcf8] sm:$0xff] %v1058
                %v1060 = vld [vmem:[%s226 + $0x1a00] sm:$0xff]
                %1061 = vst [vmem:[%s227 + $0xd00] sm:$0xff] %v1060
                %v1062 = vld [vmem:[%s226 + $0x1a08] sm:$0xff]
                %1063 = vst [vmem:[%s227 + $0xd08] sm:$0xff] %v1062
                %v1064 = vld [vmem:[%s226 + $0x1a10] sm:$0xff]
                %1065 = vst [vmem:[%s227 + $0xd10] sm:$0xff] %v1064
                %v1066 = vld [vmem:[%s226 + $0x1a18] sm:$0xff]
                %1067 = vst [vmem:[%s227 + $0xd18] sm:$0xff] %v1066
                %v1068 = vld [vmem:[%s226 + $0x1a40] sm:$0xff]
                %1069 = vst [vmem:[%s227 + $0xd20] sm:$0xff] %v1068
                %v1070 = vld [vmem:[%s226 + $0x1a48] sm:$0xff]
                %1071 = vst [vmem:[%s227 + $0xd28] sm:$0xff] %v1070
                %v1072 = vld [vmem:[%s226 + $0x1a50] sm:$0xff]
                %1073 = vst [vmem:[%s227 + $0xd30] sm:$0xff] %v1072
                %v1074 = vld [vmem:[%s226 + $0x1a58] sm:$0xff]
                %1075 = vst [vmem:[%s227 + $0xd38] sm:$0xff] %v1074
                %v1076 = vld [vmem:[%s226 + $0x1a80] sm:$0xff]
                %1077 = vst [vmem:[%s227 + $0xd40] sm:$0xff] %v1076
                %v1078 = vld [vmem:[%s226 + $0x1a88] sm:$0xff]
                %1079 = vst [vmem:[%s227 + $0xd48] sm:$0xff] %v1078
                %v1080 = vld [vmem:[%s226 + $0x1a90] sm:$0xff]
                %1081 = vst [vmem:[%s227 + $0xd50] sm:$0xff] %v1080
                %v1082 = vld [vmem:[%s226 + $0x1a98] sm:$0xff]
                %1083 = vst [vmem:[%s227 + $0xd58] sm:$0xff] %v1082
                %v1084 = vld [vmem:[%s226 + $0x1ac0] sm:$0xff]
                %1085 = vst [vmem:[%s227 + $0xd60] sm:$0xff] %v1084
                %v1086 = vld [vmem:[%s226 + $0x1ac8] sm:$0xff]
                %1087 = vst [vmem:[%s227 + $0xd68] sm:$0xff] %v1086
                %v1088 = vld [vmem:[%s226 + $0x1ad0] sm:$0xff]
                %1089 = vst [vmem:[%s227 + $0xd70] sm:$0xff] %v1088
                %v1090 = vld [vmem:[%s226 + $0x1ad8] sm:$0xff]
                %1091 = vst [vmem:[%s227 + $0xd78] sm:$0xff] %v1090
                %v1092 = vld [vmem:[%s226 + $0x1b00] sm:$0xff]
                %1093 = vst [vmem:[%s227 + $0xd80] sm:$0xff] %v1092
                %v1094 = vld [vmem:[%s226 + $0x1b08] sm:$0xff]
                %1095 = vst [vmem:[%s227 + $0xd88] sm:$0xff] %v1094
                %v1096 = vld [vmem:[%s226 + $0x1b10] sm:$0xff]
                %1097 = vst [vmem:[%s227 + $0xd90] sm:$0xff] %v1096
                %v1098 = vld [vmem:[%s226 + $0x1b18] sm:$0xff]
                %1099 = vst [vmem:[%s227 + $0xd98] sm:$0xff] %v1098
                %v1100 = vld [vmem:[%s226 + $0x1b40] sm:$0xff]
                %1101 = vst [vmem:[%s227 + $0xda0] sm:$0xff] %v1100
                %v1102 = vld [vmem:[%s226 + $0x1b48] sm:$0xff]
                %1103 = vst [vmem:[%s227 + $0xda8] sm:$0xff] %v1102
                %v1104 = vld [vmem:[%s226 + $0x1b50] sm:$0xff]
                %1105 = vst [vmem:[%s227 + $0xdb0] sm:$0xff] %v1104
                %v1106 = vld [vmem:[%s226 + $0x1b58] sm:$0xff]
                %1107 = vst [vmem:[%s227 + $0xdb8] sm:$0xff] %v1106
                %v1108 = vld [vmem:[%s226 + $0x1b80] sm:$0xff]
                %1109 = vst [vmem:[%s227 + $0xdc0] sm:$0xff] %v1108
                %v1110 = vld [vmem:[%s226 + $0x1b88] sm:$0xff]
                %1111 = vst [vmem:[%s227 + $0xdc8] sm:$0xff] %v1110
                %v1112 = vld [vmem:[%s226 + $0x1b90] sm:$0xff]
                %1113 = vst [vmem:[%s227 + $0xdd0] sm:$0xff] %v1112
                %v1114 = vld [vmem:[%s226 + $0x1b98] sm:$0xff]
                %1115 = vst [vmem:[%s227 + $0xdd8] sm:$0xff] %v1114
                %v1116 = vld [vmem:[%s226 + $0x1bc0] sm:$0xff]
                %1117 = vst [vmem:[%s227 + $0xde0] sm:$0xff] %v1116
                %v1118 = vld [vmem:[%s226 + $0x1bc8] sm:$0xff]
                %1119 = vst [vmem:[%s227 + $0xde8] sm:$0xff] %v1118
                %v1120 = vld [vmem:[%s226 + $0x1bd0] sm:$0xff]
                %1121 = vst [vmem:[%s227 + $0xdf0] sm:$0xff] %v1120
                %v1122 = vld [vmem:[%s226 + $0x1bd8] sm:$0xff]
                %1123 = vst [vmem:[%s227 + $0xdf8] sm:$0xff] %v1122
                %v1124 = vld [vmem:[%s226 + $0x1c00] sm:$0xff]
                %1125 = vst [vmem:[%s227 + $0xe00] sm:$0xff] %v1124
                %v1126 = vld [vmem:[%s226 + $0x1c08] sm:$0xff]
                %1127 = vst [vmem:[%s227 + $0xe08] sm:$0xff] %v1126
                %v1128 = vld [vmem:[%s226 + $0x1c10] sm:$0xff]
                %1129 = vst [vmem:[%s227 + $0xe10] sm:$0xff] %v1128
                %v1130 = vld [vmem:[%s226 + $0x1c18] sm:$0xff]
                %1131 = vst [vmem:[%s227 + $0xe18] sm:$0xff] %v1130
                %v1132 = vld [vmem:[%s226 + $0x1c40] sm:$0xff]
                %1133 = vst [vmem:[%s227 + $0xe20] sm:$0xff] %v1132
                %v1134 = vld [vmem:[%s226 + $0x1c48] sm:$0xff]
                %1135 = vst [vmem:[%s227 + $0xe28] sm:$0xff] %v1134
                %v1136 = vld [vmem:[%s226 + $0x1c50] sm:$0xff]
                %1137 = vst [vmem:[%s227 + $0xe30] sm:$0xff] %v1136
                %v1138 = vld [vmem:[%s226 + $0x1c58] sm:$0xff]
                %1139 = vst [vmem:[%s227 + $0xe38] sm:$0xff] %v1138
                %v1140 = vld [vmem:[%s226 + $0x1c80] sm:$0xff]
                %1141 = vst [vmem:[%s227 + $0xe40] sm:$0xff] %v1140
                %v1142 = vld [vmem:[%s226 + $0x1c88] sm:$0xff]
                %1143 = vst [vmem:[%s227 + $0xe48] sm:$0xff] %v1142
                %v1144 = vld [vmem:[%s226 + $0x1c90] sm:$0xff]
                %1145 = vst [vmem:[%s227 + $0xe50] sm:$0xff] %v1144
                %v1146 = vld [vmem:[%s226 + $0x1c98] sm:$0xff]
                %1147 = vst [vmem:[%s227 + $0xe58] sm:$0xff] %v1146
                %v1148 = vld [vmem:[%s226 + $0x1cc0] sm:$0xff]
                %1149 = vst [vmem:[%s227 + $0xe60] sm:$0xff] %v1148
                %v1150 = vld [vmem:[%s226 + $0x1cc8] sm:$0xff]
                %1151 = vst [vmem:[%s227 + $0xe68] sm:$0xff] %v1150
                %v1152 = vld [vmem:[%s226 + $0x1cd0] sm:$0xff]
                %1153 = vst [vmem:[%s227 + $0xe70] sm:$0xff] %v1152
                %v1154 = vld [vmem:[%s226 + $0x1cd8] sm:$0xff]
                %1155 = vst [vmem:[%s227 + $0xe78] sm:$0xff] %v1154
                %v1156 = vld [vmem:[%s226 + $0x1d00] sm:$0xff]
                %1157 = vst [vmem:[%s227 + $0xe80] sm:$0xff] %v1156
                %v1158 = vld [vmem:[%s226 + $0x1d08] sm:$0xff]
                %1159 = vst [vmem:[%s227 + $0xe88] sm:$0xff] %v1158
                %v1160 = vld [vmem:[%s226 + $0x1d10] sm:$0xff]
                %1161 = vst [vmem:[%s227 + $0xe90] sm:$0xff] %v1160
                %v1162 = vld [vmem:[%s226 + $0x1d18] sm:$0xff]
                %1163 = vst [vmem:[%s227 + $0xe98] sm:$0xff] %v1162
                %v1164 = vld [vmem:[%s226 + $0x1d40] sm:$0xff]
                %1165 = vst [vmem:[%s227 + $0xea0] sm:$0xff] %v1164
                %v1166 = vld [vmem:[%s226 + $0x1d48] sm:$0xff]
                %1167 = vst [vmem:[%s227 + $0xea8] sm:$0xff] %v1166
                %v1168 = vld [vmem:[%s226 + $0x1d50] sm:$0xff]
                %1169 = vst [vmem:[%s227 + $0xeb0] sm:$0xff] %v1168
                %v1170 = vld [vmem:[%s226 + $0x1d58] sm:$0xff]
                %1171 = vst [vmem:[%s227 + $0xeb8] sm:$0xff] %v1170
                %v1172 = vld [vmem:[%s226 + $0x1d80] sm:$0xff]
                %1173 = vst [vmem:[%s227 + $0xec0] sm:$0xff] %v1172
                %v1174 = vld [vmem:[%s226 + $0x1d88] sm:$0xff]
                %1175 = vst [vmem:[%s227 + $0xec8] sm:$0xff] %v1174
                %v1176 = vld [vmem:[%s226 + $0x1d90] sm:$0xff]
                %1177 = vst [vmem:[%s227 + $0xed0] sm:$0xff] %v1176
                %v1178 = vld [vmem:[%s226 + $0x1d98] sm:$0xff]
                %1179 = vst [vmem:[%s227 + $0xed8] sm:$0xff] %v1178
                %v1180 = vld [vmem:[%s226 + $0x1dc0] sm:$0xff]
                %1181 = vst [vmem:[%s227 + $0xee0] sm:$0xff] %v1180
                %v1182 = vld [vmem:[%s226 + $0x1dc8] sm:$0xff]
                %1183 = vst [vmem:[%s227 + $0xee8] sm:$0xff] %v1182
                %v1184 = vld [vmem:[%s226 + $0x1dd0] sm:$0xff]
                %1185 = vst [vmem:[%s227 + $0xef0] sm:$0xff] %v1184
                %v1186 = vld [vmem:[%s226 + $0x1dd8] sm:$0xff]
                %1187 = vst [vmem:[%s227 + $0xef8] sm:$0xff] %v1186
                %v1188 = vld [vmem:[%s226 + $0x1e00] sm:$0xff]
                %1189 = vst [vmem:[%s227 + $0xf00] sm:$0xff] %v1188
                %v1190 = vld [vmem:[%s226 + $0x1e08] sm:$0xff]
                %1191 = vst [vmem:[%s227 + $0xf08] sm:$0xff] %v1190
                %v1192 = vld [vmem:[%s226 + $0x1e10] sm:$0xff]
                %1193 = vst [vmem:[%s227 + $0xf10] sm:$0xff] %v1192
                %v1194 = vld [vmem:[%s226 + $0x1e18] sm:$0xff]
                %1195 = vst [vmem:[%s227 + $0xf18] sm:$0xff] %v1194
                %v1196 = vld [vmem:[%s226 + $0x1e40] sm:$0xff]
                %1197 = vst [vmem:[%s227 + $0xf20] sm:$0xff] %v1196
                %v1198 = vld [vmem:[%s226 + $0x1e48] sm:$0xff]
                %1199 = vst [vmem:[%s227 + $0xf28] sm:$0xff] %v1198
                %v1200 = vld [vmem:[%s226 + $0x1e50] sm:$0xff]
                %1201 = vst [vmem:[%s227 + $0xf30] sm:$0xff] %v1200
                %v1202 = vld [vmem:[%s226 + $0x1e58] sm:$0xff]
                %1203 = vst [vmem:[%s227 + $0xf38] sm:$0xff] %v1202
                %v1204 = vld [vmem:[%s226 + $0x1e80] sm:$0xff]
                %1205 = vst [vmem:[%s227 + $0xf40] sm:$0xff] %v1204
                %v1206 = vld [vmem:[%s226 + $0x1e88] sm:$0xff]
                %1207 = vst [vmem:[%s227 + $0xf48] sm:$0xff] %v1206
                %v1208 = vld [vmem:[%s226 + $0x1e90] sm:$0xff]
                %1209 = vst [vmem:[%s227 + $0xf50] sm:$0xff] %v1208
                %v1210 = vld [vmem:[%s226 + $0x1e98] sm:$0xff]
                %1211 = vst [vmem:[%s227 + $0xf58] sm:$0xff] %v1210
                %v1212 = vld [vmem:[%s226 + $0x1ec0] sm:$0xff]
                %1213 = vst [vmem:[%s227 + $0xf60] sm:$0xff] %v1212
                %v1214 = vld [vmem:[%s226 + $0x1ec8] sm:$0xff]
                %1215 = vst [vmem:[%s227 + $0xf68] sm:$0xff] %v1214
                %v1216 = vld [vmem:[%s226 + $0x1ed0] sm:$0xff]
                %1217 = vst [vmem:[%s227 + $0xf70] sm:$0xff] %v1216
                %v1218 = vld [vmem:[%s226 + $0x1ed8] sm:$0xff]
                %1219 = vst [vmem:[%s227 + $0xf78] sm:$0xff] %v1218
                %v1220 = vld [vmem:[%s226 + $0x1f00] sm:$0xff]
                %1221 = vst [vmem:[%s227 + $0xf80] sm:$0xff] %v1220
                %v1222 = vld [vmem:[%s226 + $0x1f08] sm:$0xff]
                %1223 = vst [vmem:[%s227 + $0xf88] sm:$0xff] %v1222
                %v1224 = vld [vmem:[%s226 + $0x1f10] sm:$0xff]
                %1225 = vst [vmem:[%s227 + $0xf90] sm:$0xff] %v1224
                %v1226 = vld [vmem:[%s226 + $0x1f18] sm:$0xff]
                %1227 = vst [vmem:[%s227 + $0xf98] sm:$0xff] %v1226
                %v1228 = vld [vmem:[%s226 + $0x1f40] sm:$0xff]
                %1229 = vst [vmem:[%s227 + $0xfa0] sm:$0xff] %v1228
                %v1230 = vld [vmem:[%s226 + $0x1f48] sm:$0xff]
                %1231 = vst [vmem:[%s227 + $0xfa8] sm:$0xff] %v1230
                %v1232 = vld [vmem:[%s226 + $0x1f50] sm:$0xff]
                %1233 = vst [vmem:[%s227 + $0xfb0] sm:$0xff] %v1232
                %v1234 = vld [vmem:[%s226 + $0x1f58] sm:$0xff]
                %1235 = vst [vmem:[%s227 + $0xfb8] sm:$0xff] %v1234
                %v1236 = vld [vmem:[%s226 + $0x1f80] sm:$0xff]
                %1237 = vst [vmem:[%s227 + $0xfc0] sm:$0xff] %v1236
                %v1238 = vld [vmem:[%s226 + $0x1f88] sm:$0xff]
                %1239 = vst [vmem:[%s227 + $0xfc8] sm:$0xff] %v1238
                %v1240 = vld [vmem:[%s226 + $0x1f90] sm:$0xff]
                %1241 = vst [vmem:[%s227 + $0xfd0] sm:$0xff] %v1240
                %v1242 = vld [vmem:[%s226 + $0x1f98] sm:$0xff]
                %1243 = vst [vmem:[%s227 + $0xfd8] sm:$0xff] %v1242
                %v1244 = vld [vmem:[%s226 + $0x1fc0] sm:$0xff]
                %1245 = vst [vmem:[%s227 + $0xfe0] sm:$0xff] %v1244
                %v1246 = vld [vmem:[%s226 + $0x1fc8] sm:$0xff]
                %1247 = vst [vmem:[%s227 + $0xfe8] sm:$0xff] %v1246
                %v1248 = vld [vmem:[%s226 + $0x1fd0] sm:$0xff]
                %1249 = vst [vmem:[%s227 + $0xff0] sm:$0xff] %v1248
                %v1250 = vld [vmem:[%s226 + $0x1fd8] sm:$0xff]
                %1251 = vst [vmem:[%s227 + $0xff8] sm:$0xff] %v1250
                %v1252 = vld [vmem:[%s226 + $0x2000] sm:$0xff]
                %1253 = vst [vmem:[%s227 + $0x1000] sm:$0xff] %v1252
                %v1254 = vld [vmem:[%s226 + $0x2008] sm:$0xff]
                %1255 = vst [vmem:[%s227 + $0x1008] sm:$0xff] %v1254
                %v1256 = vld [vmem:[%s226 + $0x2010] sm:$0xff]
                %1257 = vst [vmem:[%s227 + $0x1010] sm:$0xff] %v1256
                %v1258 = vld [vmem:[%s226 + $0x2018] sm:$0xff]
                %1259 = vst [vmem:[%s227 + $0x1018] sm:$0xff] %v1258
                %v1260 = vld [vmem:[%s226 + $0x2040] sm:$0xff]
                %1261 = vst [vmem:[%s227 + $0x1020] sm:$0xff] %v1260
                %v1262 = vld [vmem:[%s226 + $0x2048] sm:$0xff]
                %1263 = vst [vmem:[%s227 + $0x1028] sm:$0xff] %v1262
                %v1264 = vld [vmem:[%s226 + $0x2050] sm:$0xff]
                %1265 = vst [vmem:[%s227 + $0x1030] sm:$0xff] %v1264
                %v1266 = vld [vmem:[%s226 + $0x2058] sm:$0xff]
                %1267 = vst [vmem:[%s227 + $0x1038] sm:$0xff] %v1266
                %v1268 = vld [vmem:[%s226 + $0x2080] sm:$0xff]
                %1269 = vst [vmem:[%s227 + $0x1040] sm:$0xff] %v1268
                %v1270 = vld [vmem:[%s226 + $0x2088] sm:$0xff]
                %1271 = vst [vmem:[%s227 + $0x1048] sm:$0xff] %v1270
                %v1272 = vld [vmem:[%s226 + $0x2090] sm:$0xff]
                %1273 = vst [vmem:[%s227 + $0x1050] sm:$0xff] %v1272
                %v1274 = vld [vmem:[%s226 + $0x2098] sm:$0xff]
                %1275 = vst [vmem:[%s227 + $0x1058] sm:$0xff] %v1274
                %v1276 = vld [vmem:[%s226 + $0x20c0] sm:$0xff]
                %1277 = vst [vmem:[%s227 + $0x1060] sm:$0xff] %v1276
                %v1278 = vld [vmem:[%s226 + $0x20c8] sm:$0xff]
                %1279 = vst [vmem:[%s227 + $0x1068] sm:$0xff] %v1278
                %v1280 = vld [vmem:[%s226 + $0x20d0] sm:$0xff]
                %1281 = vst [vmem:[%s227 + $0x1070] sm:$0xff] %v1280
                %v1282 = vld [vmem:[%s226 + $0x20d8] sm:$0xff]
                %1283 = vst [vmem:[%s227 + $0x1078] sm:$0xff] %v1282
                %v1284 = vld [vmem:[%s226 + $0x2100] sm:$0xff]
                %1285 = vst [vmem:[%s227 + $0x1080] sm:$0xff] %v1284
                %v1286 = vld [vmem:[%s226 + $0x2108] sm:$0xff]
                %1287 = vst [vmem:[%s227 + $0x1088] sm:$0xff] %v1286
                %v1288 = vld [vmem:[%s226 + $0x2110] sm:$0xff]
                %1289 = vst [vmem:[%s227 + $0x1090] sm:$0xff] %v1288
                %v1290 = vld [vmem:[%s226 + $0x2118] sm:$0xff]
                %1291 = vst [vmem:[%s227 + $0x1098] sm:$0xff] %v1290
                %v1292 = vld [vmem:[%s226 + $0x2140] sm:$0xff]
                %1293 = vst [vmem:[%s227 + $0x10a0] sm:$0xff] %v1292
                %v1294 = vld [vmem:[%s226 + $0x2148] sm:$0xff]
                %1295 = vst [vmem:[%s227 + $0x10a8] sm:$0xff] %v1294
                %v1296 = vld [vmem:[%s226 + $0x2150] sm:$0xff]
                %1297 = vst [vmem:[%s227 + $0x10b0] sm:$0xff] %v1296
                %v1298 = vld [vmem:[%s226 + $0x2158] sm:$0xff]
                %1299 = vst [vmem:[%s227 + $0x10b8] sm:$0xff] %v1298
                %v1300 = vld [vmem:[%s226 + $0x2180] sm:$0xff]
                %1301 = vst [vmem:[%s227 + $0x10c0] sm:$0xff] %v1300
                %v1302 = vld [vmem:[%s226 + $0x2188] sm:$0xff]
                %1303 = vst [vmem:[%s227 + $0x10c8] sm:$0xff] %v1302
                %v1304 = vld [vmem:[%s226 + $0x2190] sm:$0xff]
                %1305 = vst [vmem:[%s227 + $0x10d0] sm:$0xff] %v1304
                %v1306 = vld [vmem:[%s226 + $0x2198] sm:$0xff]
                %1307 = vst [vmem:[%s227 + $0x10d8] sm:$0xff] %v1306
                %v1308 = vld [vmem:[%s226 + $0x21c0] sm:$0xff]
                %1309 = vst [vmem:[%s227 + $0x10e0] sm:$0xff] %v1308
                %v1310 = vld [vmem:[%s226 + $0x21c8] sm:$0xff]
                %1311 = vst [vmem:[%s227 + $0x10e8] sm:$0xff] %v1310
                %v1312 = vld [vmem:[%s226 + $0x21d0] sm:$0xff]
                %1313 = vst [vmem:[%s227 + $0x10f0] sm:$0xff] %v1312
                %v1314 = vld [vmem:[%s226 + $0x21d8] sm:$0xff]
                %1315 = vst [vmem:[%s227 + $0x10f8] sm:$0xff] %v1314
                %v1316 = vld [vmem:[%s226 + $0x2200] sm:$0xff]
                %1317 = vst [vmem:[%s227 + $0x1100] sm:$0xff] %v1316
                %v1318 = vld [vmem:[%s226 + $0x2208] sm:$0xff]
                %1319 = vst [vmem:[%s227 + $0x1108] sm:$0xff] %v1318
                %v1320 = vld [vmem:[%s226 + $0x2210] sm:$0xff]
                %1321 = vst [vmem:[%s227 + $0x1110] sm:$0xff] %v1320
                %v1322 = vld [vmem:[%s226 + $0x2218] sm:$0xff]
                %1323 = vst [vmem:[%s227 + $0x1118] sm:$0xff] %v1322
                %v1324 = vld [vmem:[%s226 + $0x2240] sm:$0xff]
                %1325 = vst [vmem:[%s227 + $0x1120] sm:$0xff] %v1324
                %v1326 = vld [vmem:[%s226 + $0x2248] sm:$0xff]
                %1327 = vst [vmem:[%s227 + $0x1128] sm:$0xff] %v1326
                %v1328 = vld [vmem:[%s226 + $0x2250] sm:$0xff]
                %1329 = vst [vmem:[%s227 + $0x1130] sm:$0xff] %v1328
                %v1330 = vld [vmem:[%s226 + $0x2258] sm:$0xff]
                %1331 = vst [vmem:[%s227 + $0x1138] sm:$0xff] %v1330
                %v1332 = vld [vmem:[%s226 + $0x2280] sm:$0xff]
                %1333 = vst [vmem:[%s227 + $0x1140] sm:$0xff] %v1332
                %v1334 = vld [vmem:[%s226 + $0x2288] sm:$0xff]
                %1335 = vst [vmem:[%s227 + $0x1148] sm:$0xff] %v1334
                %v1336 = vld [vmem:[%s226 + $0x2290] sm:$0xff]
                %1337 = vst [vmem:[%s227 + $0x1150] sm:$0xff] %v1336
                %v1338 = vld [vmem:[%s226 + $0x2298] sm:$0xff]
                %1339 = vst [vmem:[%s227 + $0x1158] sm:$0xff] %v1338
                %v1340 = vld [vmem:[%s226 + $0x22c0] sm:$0xff]
                %1341 = vst [vmem:[%s227 + $0x1160] sm:$0xff] %v1340
                %v1342 = vld [vmem:[%s226 + $0x22c8] sm:$0xff]
                %1343 = vst [vmem:[%s227 + $0x1168] sm:$0xff] %v1342
                %v1344 = vld [vmem:[%s226 + $0x22d0] sm:$0xff]
                %1345 = vst [vmem:[%s227 + $0x1170] sm:$0xff] %v1344
                %v1346 = vld [vmem:[%s226 + $0x22d8] sm:$0xff]
                %1347 = vst [vmem:[%s227 + $0x1178] sm:$0xff] %v1346
                %v1348 = vld [vmem:[%s226 + $0x2300] sm:$0xff]
                %1349 = vst [vmem:[%s227 + $0x1180] sm:$0xff] %v1348
                %v1350 = vld [vmem:[%s226 + $0x2308] sm:$0xff]
                %1351 = vst [vmem:[%s227 + $0x1188] sm:$0xff] %v1350
                %v1352 = vld [vmem:[%s226 + $0x2310] sm:$0xff]
                %1353 = vst [vmem:[%s227 + $0x1190] sm:$0xff] %v1352
                %v1354 = vld [vmem:[%s226 + $0x2318] sm:$0xff]
                %1355 = vst [vmem:[%s227 + $0x1198] sm:$0xff] %v1354
                %v1356 = vld [vmem:[%s226 + $0x2340] sm:$0xff]
                %1357 = vst [vmem:[%s227 + $0x11a0] sm:$0xff] %v1356
                %v1358 = vld [vmem:[%s226 + $0x2348] sm:$0xff]
                %1359 = vst [vmem:[%s227 + $0x11a8] sm:$0xff] %v1358
                %v1360 = vld [vmem:[%s226 + $0x2350] sm:$0xff]
                %1361 = vst [vmem:[%s227 + $0x11b0] sm:$0xff] %v1360
                %v1362 = vld [vmem:[%s226 + $0x2358] sm:$0xff]
                %1363 = vst [vmem:[%s227 + $0x11b8] sm:$0xff] %v1362
                %v1364 = vld [vmem:[%s226 + $0x2380] sm:$0xff]
                %1365 = vst [vmem:[%s227 + $0x11c0] sm:$0xff] %v1364
                %v1366 = vld [vmem:[%s226 + $0x2388] sm:$0xff]
                %1367 = vst [vmem:[%s227 + $0x11c8] sm:$0xff] %v1366
                %v1368 = vld [vmem:[%s226 + $0x2390] sm:$0xff]
                %1369 = vst [vmem:[%s227 + $0x11d0] sm:$0xff] %v1368
                %v1370 = vld [vmem:[%s226 + $0x2398] sm:$0xff]
                %1371 = vst [vmem:[%s227 + $0x11d8] sm:$0xff] %v1370
                %v1372 = vld [vmem:[%s226 + $0x23c0] sm:$0xff]
                %1373 = vst [vmem:[%s227 + $0x11e0] sm:$0xff] %v1372
                %v1374 = vld [vmem:[%s226 + $0x23c8] sm:$0xff]
                %1375 = vst [vmem:[%s227 + $0x11e8] sm:$0xff] %v1374
                %v1376 = vld [vmem:[%s226 + $0x23d0] sm:$0xff]
                %1377 = vst [vmem:[%s227 + $0x11f0] sm:$0xff] %v1376
                %v1378 = vld [vmem:[%s226 + $0x23d8] sm:$0xff]
                %1379 = vst [vmem:[%s227 + $0x11f8] sm:$0xff] %v1378
                %v1380 = vld [vmem:[%s226 + $0x2400] sm:$0xff]
                %1381 = vst [vmem:[%s227 + $0x1200] sm:$0xff] %v1380
                %v1382 = vld [vmem:[%s226 + $0x2408] sm:$0xff]
                %1383 = vst [vmem:[%s227 + $0x1208] sm:$0xff] %v1382
                %v1384 = vld [vmem:[%s226 + $0x2410] sm:$0xff]
                %1385 = vst [vmem:[%s227 + $0x1210] sm:$0xff] %v1384
                %v1386 = vld [vmem:[%s226 + $0x2418] sm:$0xff]
                %1387 = vst [vmem:[%s227 + $0x1218] sm:$0xff] %v1386
                %v1388 = vld [vmem:[%s226 + $0x2440] sm:$0xff]
                %1389 = vst [vmem:[%s227 + $0x1220] sm:$0xff] %v1388
                %v1390 = vld [vmem:[%s226 + $0x2448] sm:$0xff]
                %1391 = vst [vmem:[%s227 + $0x1228] sm:$0xff] %v1390
                %v1392 = vld [vmem:[%s226 + $0x2450] sm:$0xff]
                %1393 = vst [vmem:[%s227 + $0x1230] sm:$0xff] %v1392
                %v1394 = vld [vmem:[%s226 + $0x2458] sm:$0xff]
                %1395 = vst [vmem:[%s227 + $0x1238] sm:$0xff] %v1394
                %v1396 = vld [vmem:[%s226 + $0x2480] sm:$0xff]
                %1397 = vst [vmem:[%s227 + $0x1240] sm:$0xff] %v1396
                %v1398 = vld [vmem:[%s226 + $0x2488] sm:$0xff]
                %1399 = vst [vmem:[%s227 + $0x1248] sm:$0xff] %v1398
                %v1400 = vld [vmem:[%s226 + $0x2490] sm:$0xff]
                %1401 = vst [vmem:[%s227 + $0x1250] sm:$0xff] %v1400
                %v1402 = vld [vmem:[%s226 + $0x2498] sm:$0xff]
                %1403 = vst [vmem:[%s227 + $0x1258] sm:$0xff] %v1402
                %v1404 = vld [vmem:[%s226 + $0x24c0] sm:$0xff]
                %1405 = vst [vmem:[%s227 + $0x1260] sm:$0xff] %v1404
                %v1406 = vld [vmem:[%s226 + $0x24c8] sm:$0xff]
                %1407 = vst [vmem:[%s227 + $0x1268] sm:$0xff] %v1406
                %v1408 = vld [vmem:[%s226 + $0x24d0] sm:$0xff]
                %1409 = vst [vmem:[%s227 + $0x1270] sm:$0xff] %v1408
                %v1410 = vld [vmem:[%s226 + $0x24d8] sm:$0xff]
                %1411 = vst [vmem:[%s227 + $0x1278] sm:$0xff] %v1410
                %v1412 = vld [vmem:[%s226 + $0x2500] sm:$0xff]
                %1413 = vst [vmem:[%s227 + $0x1280] sm:$0xff] %v1412
                %v1414 = vld [vmem:[%s226 + $0x2508] sm:$0xff]
                %1415 = vst [vmem:[%s227 + $0x1288] sm:$0xff] %v1414
                %v1416 = vld [vmem:[%s226 + $0x2510] sm:$0xff]
                %1417 = vst [vmem:[%s227 + $0x1290] sm:$0xff] %v1416
                %v1418 = vld [vmem:[%s226 + $0x2518] sm:$0xff]
                %1419 = vst [vmem:[%s227 + $0x1298] sm:$0xff] %v1418
                %v1420 = vld [vmem:[%s226 + $0x2540] sm:$0xff]
                %1421 = vst [vmem:[%s227 + $0x12a0] sm:$0xff] %v1420
                %v1422 = vld [vmem:[%s226 + $0x2548] sm:$0xff]
                %1423 = vst [vmem:[%s227 + $0x12a8] sm:$0xff] %v1422
                %v1424 = vld [vmem:[%s226 + $0x2550] sm:$0xff]
                %1425 = vst [vmem:[%s227 + $0x12b0] sm:$0xff] %v1424
                %v1426 = vld [vmem:[%s226 + $0x2558] sm:$0xff]
                %1427 = vst [vmem:[%s227 + $0x12b8] sm:$0xff] %v1426
                %v1428 = vld [vmem:[%s226 + $0x2580] sm:$0xff]
                %1429 = vst [vmem:[%s227 + $0x12c0] sm:$0xff] %v1428
                %v1430 = vld [vmem:[%s226 + $0x2588] sm:$0xff]
                %1431 = vst [vmem:[%s227 + $0x12c8] sm:$0xff] %v1430
                %v1432 = vld [vmem:[%s226 + $0x2590] sm:$0xff]
                %1433 = vst [vmem:[%s227 + $0x12d0] sm:$0xff] %v1432
                %v1434 = vld [vmem:[%s226 + $0x2598] sm:$0xff]
                %1435 = vst [vmem:[%s227 + $0x12d8] sm:$0xff] %v1434
                %v1436 = vld [vmem:[%s226 + $0x25c0] sm:$0xff]
                %1437 = vst [vmem:[%s227 + $0x12e0] sm:$0xff] %v1436
                %v1438 = vld [vmem:[%s226 + $0x25c8] sm:$0xff]
                %1439 = vst [vmem:[%s227 + $0x12e8] sm:$0xff] %v1438
                %v1440 = vld [vmem:[%s226 + $0x25d0] sm:$0xff]
                %1441 = vst [vmem:[%s227 + $0x12f0] sm:$0xff] %v1440
                %v1442 = vld [vmem:[%s226 + $0x25d8] sm:$0xff]
                %1443 = vst [vmem:[%s227 + $0x12f8] sm:$0xff] %v1442
                %v1444 = vld [vmem:[%s226 + $0x2600] sm:$0xff]
                %1445 = vst [vmem:[%s227 + $0x1300] sm:$0xff] %v1444
                %v1446 = vld [vmem:[%s226 + $0x2608] sm:$0xff]
                %1447 = vst [vmem:[%s227 + $0x1308] sm:$0xff] %v1446
                %v1448 = vld [vmem:[%s226 + $0x2610] sm:$0xff]
                %1449 = vst [vmem:[%s227 + $0x1310] sm:$0xff] %v1448
                %v1450 = vld [vmem:[%s226 + $0x2618] sm:$0xff]
                %1451 = vst [vmem:[%s227 + $0x1318] sm:$0xff] %v1450
                %v1452 = vld [vmem:[%s226 + $0x2640] sm:$0xff]
                %1453 = vst [vmem:[%s227 + $0x1320] sm:$0xff] %v1452
                %v1454 = vld [vmem:[%s226 + $0x2648] sm:$0xff]
                %1455 = vst [vmem:[%s227 + $0x1328] sm:$0xff] %v1454
                %v1456 = vld [vmem:[%s226 + $0x2650] sm:$0xff]
                %1457 = vst [vmem:[%s227 + $0x1330] sm:$0xff] %v1456
                %v1458 = vld [vmem:[%s226 + $0x2658] sm:$0xff]
                %1459 = vst [vmem:[%s227 + $0x1338] sm:$0xff] %v1458
                %v1460 = vld [vmem:[%s226 + $0x2680] sm:$0xff]
                %1461 = vst [vmem:[%s227 + $0x1340] sm:$0xff] %v1460
                %v1462 = vld [vmem:[%s226 + $0x2688] sm:$0xff]
                %1463 = vst [vmem:[%s227 + $0x1348] sm:$0xff] %v1462
                %v1464 = vld [vmem:[%s226 + $0x2690] sm:$0xff]
                %1465 = vst [vmem:[%s227 + $0x1350] sm:$0xff] %v1464
                %v1466 = vld [vmem:[%s226 + $0x2698] sm:$0xff]
                %1467 = vst [vmem:[%s227 + $0x1358] sm:$0xff] %v1466
                %v1468 = vld [vmem:[%s226 + $0x26c0] sm:$0xff]
                %1469 = vst [vmem:[%s227 + $0x1360] sm:$0xff] %v1468
                %v1470 = vld [vmem:[%s226 + $0x26c8] sm:$0xff]
                %1471 = vst [vmem:[%s227 + $0x1368] sm:$0xff] %v1470
                %v1472 = vld [vmem:[%s226 + $0x26d0] sm:$0xff]
                %1473 = vst [vmem:[%s227 + $0x1370] sm:$0xff] %v1472
                %v1474 = vld [vmem:[%s226 + $0x26d8] sm:$0xff]
                %1475 = vst [vmem:[%s227 + $0x1378] sm:$0xff] %v1474
                %v1476 = vld [vmem:[%s226 + $0x2700] sm:$0xff]
                %1477 = vst [vmem:[%s227 + $0x1380] sm:$0xff] %v1476
                %v1478 = vld [vmem:[%s226 + $0x2708] sm:$0xff]
                %1479 = vst [vmem:[%s227 + $0x1388] sm:$0xff] %v1478
                %v1480 = vld [vmem:[%s226 + $0x2710] sm:$0xff]
                %1481 = vst [vmem:[%s227 + $0x1390] sm:$0xff] %v1480
                %v1482 = vld [vmem:[%s226 + $0x2718] sm:$0xff]
                %1483 = vst [vmem:[%s227 + $0x1398] sm:$0xff] %v1482
                %v1484 = vld [vmem:[%s226 + $0x2740] sm:$0xff]
                %1485 = vst [vmem:[%s227 + $0x13a0] sm:$0xff] %v1484
                %v1486 = vld [vmem:[%s226 + $0x2748] sm:$0xff]
                %1487 = vst [vmem:[%s227 + $0x13a8] sm:$0xff] %v1486
                %v1488 = vld [vmem:[%s226 + $0x2750] sm:$0xff]
                %1489 = vst [vmem:[%s227 + $0x13b0] sm:$0xff] %v1488
                %v1490 = vld [vmem:[%s226 + $0x2758] sm:$0xff]
                %1491 = vst [vmem:[%s227 + $0x13b8] sm:$0xff] %v1490
                %v1492 = vld [vmem:[%s226 + $0x2780] sm:$0xff]
                %1493 = vst [vmem:[%s227 + $0x13c0] sm:$0xff] %v1492
                %v1494 = vld [vmem:[%s226 + $0x2788] sm:$0xff]
                %1495 = vst [vmem:[%s227 + $0x13c8] sm:$0xff] %v1494
                %v1496 = vld [vmem:[%s226 + $0x2790] sm:$0xff]
                %1497 = vst [vmem:[%s227 + $0x13d0] sm:$0xff] %v1496
                %v1498 = vld [vmem:[%s226 + $0x2798] sm:$0xff]
                %1499 = vst [vmem:[%s227 + $0x13d8] sm:$0xff] %v1498
                %v1500 = vld [vmem:[%s226 + $0x27c0] sm:$0xff]
                %1501 = vst [vmem:[%s227 + $0x13e0] sm:$0xff] %v1500
                %v1502 = vld [vmem:[%s226 + $0x27c8] sm:$0xff]
                %1503 = vst [vmem:[%s227 + $0x13e8] sm:$0xff] %v1502
                %v1504 = vld [vmem:[%s226 + $0x27d0] sm:$0xff]
                %1505 = vst [vmem:[%s227 + $0x13f0] sm:$0xff] %v1504
                %v1506 = vld [vmem:[%s226 + $0x27d8] sm:$0xff]
                %1507 = vst [vmem:[%s227 + $0x13f8] sm:$0xff] %v1506
                %v1508 = vld [vmem:[%s226 + $0x2800] sm:$0xff]
                %1509 = vst [vmem:[%s227 + $0x1400] sm:$0xff] %v1508
                %v1510 = vld [vmem:[%s226 + $0x2808] sm:$0xff]
                %1511 = vst [vmem:[%s227 + $0x1408] sm:$0xff] %v1510
                %v1512 = vld [vmem:[%s226 + $0x2810] sm:$0xff]
                %1513 = vst [vmem:[%s227 + $0x1410] sm:$0xff] %v1512
                %v1514 = vld [vmem:[%s226 + $0x2818] sm:$0xff]
                %1515 = vst [vmem:[%s227 + $0x1418] sm:$0xff] %v1514
                %v1516 = vld [vmem:[%s226 + $0x2840] sm:$0xff]
                %1517 = vst [vmem:[%s227 + $0x1420] sm:$0xff] %v1516
                %v1518 = vld [vmem:[%s226 + $0x2848] sm:$0xff]
                %1519 = vst [vmem:[%s227 + $0x1428] sm:$0xff] %v1518
                %v1520 = vld [vmem:[%s226 + $0x2850] sm:$0xff]
                %1521 = vst [vmem:[%s227 + $0x1430] sm:$0xff] %v1520
                %v1522 = vld [vmem:[%s226 + $0x2858] sm:$0xff]
                %1523 = vst [vmem:[%s227 + $0x1438] sm:$0xff] %v1522
                %v1524 = vld [vmem:[%s226 + $0x2880] sm:$0xff]
                %1525 = vst [vmem:[%s227 + $0x1440] sm:$0xff] %v1524
                %v1526 = vld [vmem:[%s226 + $0x2888] sm:$0xff]
                %1527 = vst [vmem:[%s227 + $0x1448] sm:$0xff] %v1526
                %v1528 = vld [vmem:[%s226 + $0x2890] sm:$0xff]
                %1529 = vst [vmem:[%s227 + $0x1450] sm:$0xff] %v1528
                %v1530 = vld [vmem:[%s226 + $0x2898] sm:$0xff]
                %1531 = vst [vmem:[%s227 + $0x1458] sm:$0xff] %v1530
                %v1532 = vld [vmem:[%s226 + $0x28c0] sm:$0xff]
                %1533 = vst [vmem:[%s227 + $0x1460] sm:$0xff] %v1532
                %v1534 = vld [vmem:[%s226 + $0x28c8] sm:$0xff]
                %1535 = vst [vmem:[%s227 + $0x1468] sm:$0xff] %v1534
                %v1536 = vld [vmem:[%s226 + $0x28d0] sm:$0xff]
                %1537 = vst [vmem:[%s227 + $0x1470] sm:$0xff] %v1536
                %v1538 = vld [vmem:[%s226 + $0x28d8] sm:$0xff]
                %1539 = vst [vmem:[%s227 + $0x1478] sm:$0xff] %v1538
                %v1540 = vld [vmem:[%s226 + $0x2900] sm:$0xff]
                %1541 = vst [vmem:[%s227 + $0x1480] sm:$0xff] %v1540
                %v1542 = vld [vmem:[%s226 + $0x2908] sm:$0xff]
                %1543 = vst [vmem:[%s227 + $0x1488] sm:$0xff] %v1542
                %v1544 = vld [vmem:[%s226 + $0x2910] sm:$0xff]
                %1545 = vst [vmem:[%s227 + $0x1490] sm:$0xff] %v1544
                %v1546 = vld [vmem:[%s226 + $0x2918] sm:$0xff]
                %1547 = vst [vmem:[%s227 + $0x1498] sm:$0xff] %v1546
                %v1548 = vld [vmem:[%s226 + $0x2940] sm:$0xff]
                %1549 = vst [vmem:[%s227 + $0x14a0] sm:$0xff] %v1548
                %v1550 = vld [vmem:[%s226 + $0x2948] sm:$0xff]
                %1551 = vst [vmem:[%s227 + $0x14a8] sm:$0xff] %v1550
                %v1552 = vld [vmem:[%s226 + $0x2950] sm:$0xff]
                %1553 = vst [vmem:[%s227 + $0x14b0] sm:$0xff] %v1552
                %v1554 = vld [vmem:[%s226 + $0x2958] sm:$0xff]
                %1555 = vst [vmem:[%s227 + $0x14b8] sm:$0xff] %v1554
                %v1556 = vld [vmem:[%s226 + $0x2980] sm:$0xff]
                %1557 = vst [vmem:[%s227 + $0x14c0] sm:$0xff] %v1556
                %v1558 = vld [vmem:[%s226 + $0x2988] sm:$0xff]
                %1559 = vst [vmem:[%s227 + $0x14c8] sm:$0xff] %v1558
                %v1560 = vld [vmem:[%s226 + $0x2990] sm:$0xff]
                %1561 = vst [vmem:[%s227 + $0x14d0] sm:$0xff] %v1560
                %v1562 = vld [vmem:[%s226 + $0x2998] sm:$0xff]
                %1563 = vst [vmem:[%s227 + $0x14d8] sm:$0xff] %v1562
                %v1564 = vld [vmem:[%s226 + $0x29c0] sm:$0xff]
                %1565 = vst [vmem:[%s227 + $0x14e0] sm:$0xff] %v1564
                %v1566 = vld [vmem:[%s226 + $0x29c8] sm:$0xff]
                %1567 = vst [vmem:[%s227 + $0x14e8] sm:$0xff] %v1566
                %v1568 = vld [vmem:[%s226 + $0x29d0] sm:$0xff]
                %1569 = vst [vmem:[%s227 + $0x14f0] sm:$0xff] %v1568
                %v1570 = vld [vmem:[%s226 + $0x29d8] sm:$0xff]
                %1571 = vst [vmem:[%s227 + $0x14f8] sm:$0xff] %v1570
              $region41: #{weigh_estimator6_fwd.3} parent=35 // loop_footer
                %s225 = sadd.s32 1, %s221
              $region42: #{weigh_estimator6_fwd.3} parent=35 // loop_footer_branch
                %220 = sbr.rel target = $region38
              $region43: #{weigh_estimator6_fwd.3} parent=35 // loop_exit
                _
            $region36: #{weigh_estimator6_fwd.3} parent=31 // pred_fallthru
              _
            // Predicated region
            $region44: #{weigh_estimator6_fwd.3} parent=31 // pred_check
              _
            $region45: #{weigh_estimator6_fwd.3} parent=31 // pred_check_branch
              %1573 = sbr.rel target = $region47
            $region46: #{weigh_estimator6_fwd.3} parent=31 // pred_region
              _
            $region47: #{weigh_estimator6_fwd.3} parent=31 // pred_fallthru
              _
          $region32: #{weigh_estimator6_fwd.3} parent=27 // pred_fallthru
            _
          %1574 = vnop
        $region28: #{weigh_estimator6_fwd.3} parent=23 // pred_fallthru
          _
        // Predicated region
        $region48: #{weigh_estimator6_fwd.3} parent=23 // pred_check
          %p1575 = pneg %p97
        $region49: #{weigh_estimator6_fwd.3} parent=23 // pred_check_branch
          %1577 = sbr.rel (%p1575) target = $region51
        $region50: #{weigh_estimator6_fwd.3} parent=23 // pred_region
          %s1578 = smul.u32 4, %s21
          %p1579 = scmp.lt.s32.totalorder %s1578, 7
          %s1580 = scalar_select %p1579, %s1578, 7
          %s1581 = scalar_lea.vmem %s2, %s1580
          %s1582 = smul.u32 4, %s21
        $region51: #{weigh_estimator6_fwd.3} parent=23 // pred_fallthru
          _
        // Predicated region
        $region52: #{weigh_estimator6_fwd.3} parent=23 // pred_check
          %p1583 = pneg %p123
        $region53: #{weigh_estimator6_fwd.3} parent=23 // pred_check_branch
          %1585 = sbr.rel (%p1583) target = $region55
        $region54: #{weigh_estimator6_fwd.3} parent=23 // pred_region
          %s1586 = smul.u32 64, %s21
          %p1587 = scmp.lt.s32.totalorder %s1586, 127
          %s1588 = scalar_select %p1587, %s1586, 127
          %s1589 = smul.addr %s1588, 8
          %s1590 = scalar_lea.vmem %s3, %s1589
          %s1591 = smul.u32 64, %s21
        $region55: #{weigh_estimator6_fwd.3} parent=23 // pred_fallthru
          _
      $region24: #{weigh_estimator6_fwd.3} parent=5 // pred_fallthru
        _
      %p1592 = scmp.le.s32.totalorder 1, %s13
      %p1593 = scmp.lt.s32.totalorder %s13, 3
      %p1594 = pnand %p1592, %p1593
      %p1595 = pneg %p1594
      // Predicated region
      $region56: #{weigh_estimator6_fwd.3} parent=5 // pred_check
        _
      $region57: #{weigh_estimator6_fwd.3} parent=5 // pred_check_branch
        %1597 = sbr.rel (%p1594) target = $region59
      $region58: #{weigh_estimator6_fwd.3} parent=5 // pred_region
        %s1598 = ssub.s32 %s13, 1
        %s1599 = sand.u32 %s64, 1
        %s1600 = sand.u32 %s64, 1
        %s1601 = smul.addr %s1600, 5376
        %s1602 = scalar_lea.vmem [#allocation4], %s1601
        // Predicated region
        $region60: #{weigh_estimator6_fwd.3} parent=58 // pred_check
          %p1603 = pneg %p77
        $region61: #{weigh_estimator6_fwd.3} parent=58 // pred_check_branch
          %1605 = sbr.rel (%p1603) target = $region63
        $region62: #{weigh_estimator6_fwd.3} parent=58 // pred_region
          _
        $region63: #{weigh_estimator6_fwd.3} parent=58 // pred_fallthru
          _
        %p1606 = scmp.lt.s32.totalorder %s22, 0
        %s1607 = scalar_select %p1606, %s22, 0
        %s1608 = smul.addr %s1607, 11
        %s1609 = smul.addr %s1608, 8
        %s1610 = scalar_lea.vmem %s0, %s1609
        %p1611 = pneg %p51
        %p1612 = pneg %p48
        %s1613 = sand.u32 %s64, 1
        %s1614 = sand.u32 %s64, 1
        %s1615 = smul.addr %s1614, 5376
        %s1616 = scalar_lea.vmem [#allocation4], %s1615
        %p1617 = pneg %p77
        %p1618 = pneg %p74
        %s1619 = smul.u32 4, %s23
        %p1620 = scmp.lt.s32.totalorder %s1619, 7
        %s1621 = scalar_select %p1620, %s1619, 7
        %s1622 = scalar_lea.vmem %s2, %s1621
        %p1623 = pneg %p103
        %p1624 = pneg %p100
        %s1625 = smul.u32 64, %s23
        %p1626 = scmp.lt.s32.totalorder %s1625, 127
        %s1627 = scalar_select %p1626, %s1625, 127
        %s1628 = smul.addr %s1627, 8
        %s1629 = scalar_lea.vmem %s3, %s1628
        %p1630 = pneg %p129
        %p1631 = pneg %p126
        %p1632 = pneg %p150
        %p1633 = pneg %p147
        %p1634 = pneg %p176
        %p1635 = pneg %p173
        %p1636 = scmp.lt.s32.totalorder %s22, 0
        %s1637 = scalar_select %p1636, %s22, 0
        %s1638 = smul.addr %s1637, 8
        %s1639 = scalar_lea.vmem %s5, %s1638
        %p1640 = scmp.lt.s32.totalorder %s22, 0
        %s1641 = scalar_select %p1640, %s22, 0
        %s1642 = smul.addr %s1641, 11
        %s1643 = smul.addr %s1642, 8
        %s1644 = scalar_lea.vmem %s0, %s1643
        %s1645 = smul.u32 4, %s23
        %s1646 = smul.u32 4, %s23
        %p1647 = scmp.lt.s32.totalorder %s1646, 7
        %s1648 = scalar_select %p1647, %s1646, 7
        %s1649 = scalar_lea.vmem %s2, %s1648
        %s1650 = smul.u32 4, %s23
        %s1651 = smul.u32 64, %s23
        %p1652 = scmp.lt.s32.totalorder %s1651, 127
        %s1653 = scalar_select %p1652, %s1651, 127
        %s1654 = smul.addr %s1653, 8
        %s1655 = scalar_lea.vmem %s3, %s1654
        %s1656 = smul.u32 64, %s23
        %p1657 = scmp.lt.s32.totalorder %s22, 0
        %s1658 = scalar_select %p1657, %s22, 0
        %s1659 = smul.addr %s1658, 8
        %s1660 = scalar_lea.vmem %s5, %s1659
        %p1661 = scmp.eq.s32.totalorder %s23, 0
        // Predicated region
        $region64: #{weigh_estimator6_fwd.3} parent=58 // pred_check
          %p1662 = pneg %p1661
        $region65: #{weigh_estimator6_fwd.3} parent=58 // pred_check_branch
          %1664 = sbr.rel (%p1662) target = $region67
        $region66: #{weigh_estimator6_fwd.3} parent=58 // pred_region
          %vm1665 = vcmask 7168
          %1666 = vst.msk [vmem:[#allocation2] sm:$0xff] %vm1665, 0.0
        $region67: #{weigh_estimator6_fwd.3} parent=58 // pred_fallthru
          _
        %v1667 = vld [vmem:[%s1644] sm:$0xff]
        %v1668 = vld [vmem:[%s1644 + $0x8] sm:$0xff]
        %v1669 = vld [vmem:[%s1644 + $0x10] sm:$0xff]
        %v1670 = vld [vmem:[%s1644 + $0x18] sm:$0xff]
        %v1671 = vld [vmem:[%s1644 + $0x20] sm:$0xff]
        %v1672 = vld [vmem:[%s1644 + $0x28] sm:$0xff]
        %v1673 = vld [vmem:[%s1644 + $0x30] sm:$0xff]
        %v1674 = vld [vmem:[%s1644 + $0x38] sm:$0xff]
        %v1675 = vld [vmem:[%s1644 + $0x40] sm:$0xff]
        %v1676 = vld [vmem:[%s1644 + $0x48] sm:$0xff]
        %v1677 = vld [vmem:[%s1644 + $0x50] sm:$0xff]
        %v1678 = vld [vmem:[%s1602] sm:$0xff]
        %v1679 = vld [vmem:[%s1602 + $0x8] sm:$0xff]
        %v1680 = vld [vmem:[%s1602 + $0x10] sm:$0xff]
        %v1681 = vld [vmem:[%s1602 + $0x18] sm:$0xff]
        %v1682 = vld [vmem:[%s1602 + $0x20] sm:$0xff]
        %v1683 = vld [vmem:[%s1602 + $0x28] sm:$0xff]
        %v1684 = vld [vmem:[%s1602 + $0x30] sm:$0xff]
        %v1685 = vld [vmem:[%s1602 + $0x38] sm:$0xff]
        %v1686 = vld [vmem:[%s1602 + $0x40] sm:$0xff]
        %v1687 = vld [vmem:[%s1602 + $0x48] sm:$0xff]
        %v1688 = vld [vmem:[%s1602 + $0x50] sm:$0xff]
        %v1689 = vld [vmem:[%s1602 + $0x58] sm:$0xff]
        %v1690 = vld [vmem:[%s1602 + $0x60] sm:$0xff]
        %v1691 = vld [vmem:[%s1602 + $0x68] sm:$0xff]
        %v1692 = vld [vmem:[%s1602 + $0x70] sm:$0xff]
        %v1693 = vld [vmem:[%s1602 + $0x78] sm:$0xff]
        %v1694 = vld [vmem:[%s1602 + $0x80] sm:$0xff]
        %v1695 = vld [vmem:[%s1602 + $0x88] sm:$0xff]
        %v1696 = vld [vmem:[%s1602 + $0x90] sm:$0xff]
        %v1697 = vld [vmem:[%s1602 + $0x98] sm:$0xff]
        %v1698 = vld [vmem:[%s1602 + $0xa0] sm:$0xff]
        %v1699 = vld [vmem:[%s1602 + $0xa8] sm:$0xff]
        %v1700 = vld [vmem:[%s1602 + $0xb0] sm:$0xff]
        %v1701 = vld [vmem:[%s1602 + $0xb8] sm:$0xff]
        %v1702 = vld [vmem:[%s1602 + $0xc0] sm:$0xff]
        %v1703 = vld [vmem:[%s1602 + $0xc8] sm:$0xff]
        %v1704 = vld [vmem:[%s1602 + $0xd0] sm:$0xff]
        %v1705 = vld [vmem:[%s1602 + $0xd8] sm:$0xff]
        %v1706 = vld [vmem:[%s1602 + $0xe0] sm:$0xff]
        %v1707 = vld [vmem:[%s1602 + $0xe8] sm:$0xff]
        %v1708 = vld [vmem:[%s1602 + $0xf0] sm:$0xff]
        %v1709 = vld [vmem:[%s1602 + $0xf8] sm:$0xff]
        %v1710 = vld [vmem:[%s1602 + $0x100] sm:$0xff]
        %v1711 = vld [vmem:[%s1602 + $0x108] sm:$0xff]
        %v1712 = vld [vmem:[%s1602 + $0x110] sm:$0xff]
        %v1713 = vld [vmem:[%s1602 + $0x118] sm:$0xff]
        %v1714 = vld [vmem:[%s1602 + $0x120] sm:$0xff]
        %v1715 = vld [vmem:[%s1602 + $0x128] sm:$0xff]
        %v1716 = vld [vmem:[%s1602 + $0x130] sm:$0xff]
        %v1717 = vld [vmem:[%s1602 + $0x138] sm:$0xff]
        %v1718 = vld [vmem:[%s1602 + $0x140] sm:$0xff]
        %v1719 = vld [vmem:[%s1602 + $0x148] sm:$0xff]
        %v1720 = vld [vmem:[%s1602 + $0x150] sm:$0xff]
        %v1721 = vld [vmem:[%s1602 + $0x158] sm:$0xff]
        %v1722 = vld [vmem:[%s1602 + $0x160] sm:$0xff]
        %v1723 = vld [vmem:[%s1602 + $0x168] sm:$0xff]
        %v1724 = vld [vmem:[%s1602 + $0x170] sm:$0xff]
        %v1725 = vld [vmem:[%s1602 + $0x178] sm:$0xff]
        %v1726 = vld [vmem:[%s1602 + $0x180] sm:$0xff]
        %v1727 = vld [vmem:[%s1602 + $0x188] sm:$0xff]
        %v1728 = vld [vmem:[%s1602 + $0x190] sm:$0xff]
        %v1729 = vld [vmem:[%s1602 + $0x198] sm:$0xff]
        %v1730 = vld [vmem:[%s1602 + $0x1a0] sm:$0xff]
        %v1731 = vld [vmem:[%s1602 + $0x1a8] sm:$0xff]
        %v1732 = vld [vmem:[%s1602 + $0x1b0] sm:$0xff]
        %v1733 = vld [vmem:[%s1602 + $0x1b8] sm:$0xff]
        %v1734 = vld [vmem:[%s1602 + $0x1c0] sm:$0xff]
        %v1735 = vld [vmem:[%s1602 + $0x1c8] sm:$0xff]
        %v1736 = vld [vmem:[%s1602 + $0x1d0] sm:$0xff]
        %v1737 = vld [vmem:[%s1602 + $0x1d8] sm:$0xff]
        %v1738 = vld [vmem:[%s1602 + $0x1e0] sm:$0xff]
        %v1739 = vld [vmem:[%s1602 + $0x1e8] sm:$0xff]
        %v1740 = vld [vmem:[%s1602 + $0x1f0] sm:$0xff]
        %v1741 = vld [vmem:[%s1602 + $0x1f8] sm:$0xff]
        %v1742 = vld [vmem:[%s1602 + $0x200] sm:$0xff]
        %v1743 = vld [vmem:[%s1602 + $0x208] sm:$0xff]
        %v1744 = vld [vmem:[%s1602 + $0x210] sm:$0xff]
        %v1745 = vld [vmem:[%s1602 + $0x218] sm:$0xff]
        %v1746 = vld [vmem:[%s1602 + $0x220] sm:$0xff]
        %v1747 = vld [vmem:[%s1602 + $0x228] sm:$0xff]
        %v1748 = vld [vmem:[%s1602 + $0x230] sm:$0xff]
        %v1749 = vld [vmem:[%s1602 + $0x238] sm:$0xff]
        %v1750 = vld [vmem:[%s1602 + $0x240] sm:$0xff]
        %v1751 = vld [vmem:[%s1602 + $0x248] sm:$0xff]
        %v1752 = vld [vmem:[%s1602 + $0x250] sm:$0xff]
        %v1753 = vld [vmem:[%s1602 + $0x258] sm:$0xff]
        %v1754 = vld [vmem:[%s1602 + $0x260] sm:$0xff]
        %v1755 = vld [vmem:[%s1602 + $0x268] sm:$0xff]
        %v1756 = vld [vmem:[%s1602 + $0x270] sm:$0xff]
        %v1757 = vld [vmem:[%s1602 + $0x278] sm:$0xff]
        %v1758 = vld [vmem:[%s1602 + $0x280] sm:$0xff]
        %v1759 = vld [vmem:[%s1602 + $0x288] sm:$0xff]
        %v1760 = vld [vmem:[%s1602 + $0x290] sm:$0xff]
        %v1761 = vld [vmem:[%s1602 + $0x298] sm:$0xff]
        %v1762 = vld [vmem:[%s1602 + $0x2a0] sm:$0xff]
        %v1763 = vld [vmem:[%s1602 + $0x2a8] sm:$0xff]
        %v1764 = vld [vmem:[%s1602 + $0x2b0] sm:$0xff]
        %v1765 = vld [vmem:[%s1602 + $0x2b8] sm:$0xff]
        %v1766 = vld [vmem:[%s1602 + $0x2c0] sm:$0xff]
        %v1767 = vld [vmem:[%s1602 + $0x2c8] sm:$0xff]
        %v1768 = vld [vmem:[%s1602 + $0x2d0] sm:$0xff]
        %v1769 = vld [vmem:[%s1602 + $0x2d8] sm:$0xff]
        %v1770 = vld [vmem:[%s1602 + $0x2e0] sm:$0xff]
        %v1771 = vld [vmem:[%s1602 + $0x2e8] sm:$0xff]
        %v1772 = vld [vmem:[%s1602 + $0x2f0] sm:$0xff]
        %v1773 = vld [vmem:[%s1602 + $0x2f8] sm:$0xff]
        %v1774 = vld [vmem:[%s1602 + $0x300] sm:$0xff]
        %v1775 = vld [vmem:[%s1602 + $0x308] sm:$0xff]
        %v1776 = vld [vmem:[%s1602 + $0x310] sm:$0xff]
        %v1777 = vld [vmem:[%s1602 + $0x318] sm:$0xff]
        %v1778 = vld [vmem:[%s1602 + $0x320] sm:$0xff]
        %v1779 = vld [vmem:[%s1602 + $0x328] sm:$0xff]
        %v1780 = vld [vmem:[%s1602 + $0x330] sm:$0xff]
        %v1781 = vld [vmem:[%s1602 + $0x338] sm:$0xff]
        %v1782 = vld [vmem:[%s1602 + $0x340] sm:$0xff]
        %v1783 = vld [vmem:[%s1602 + $0x348] sm:$0xff]
        %v1784 = vld [vmem:[%s1602 + $0x350] sm:$0xff]
        %v1785 = vld [vmem:[%s1602 + $0x358] sm:$0xff]
        %v1786 = vld [vmem:[%s1602 + $0x360] sm:$0xff]
        %v1787 = vld [vmem:[%s1602 + $0x368] sm:$0xff]
        %v1788 = vld [vmem:[%s1602 + $0x370] sm:$0xff]
        %v1789 = vld [vmem:[%s1602 + $0x378] sm:$0xff]
        %v1790 = vld [vmem:[%s1602 + $0x380] sm:$0xff]
        %v1791 = vld [vmem:[%s1602 + $0x388] sm:$0xff]
        %v1792 = vld [vmem:[%s1602 + $0x390] sm:$0xff]
        %v1793 = vld [vmem:[%s1602 + $0x398] sm:$0xff]
        %v1794 = vld [vmem:[%s1602 + $0x3a0] sm:$0xff]
        %v1795 = vld [vmem:[%s1602 + $0x3a8] sm:$0xff]
        %v1796 = vld [vmem:[%s1602 + $0x3b0] sm:$0xff]
        %v1797 = vld [vmem:[%s1602 + $0x3b8] sm:$0xff]
        %v1798 = vld [vmem:[%s1602 + $0x3c0] sm:$0xff]
        %v1799 = vld [vmem:[%s1602 + $0x3c8] sm:$0xff]
        %v1800 = vld [vmem:[%s1602 + $0x3d0] sm:$0xff]
        %v1801 = vld [vmem:[%s1602 + $0x3d8] sm:$0xff]
        %v1802 = vld [vmem:[%s1602 + $0x3e0] sm:$0xff]
        %v1803 = vld [vmem:[%s1602 + $0x3e8] sm:$0xff]
        %v1804 = vld [vmem:[%s1602 + $0x3f0] sm:$0xff]
        %v1805 = vld [vmem:[%s1602 + $0x3f8] sm:$0xff]
        %v1806 = vld [vmem:[%s1602 + $0x400] sm:$0xff]
        %v1807 = vld [vmem:[%s1602 + $0x408] sm:$0xff]
        %v1808 = vld [vmem:[%s1602 + $0x410] sm:$0xff]
        %v1809 = vld [vmem:[%s1602 + $0x418] sm:$0xff]
        %v1810 = vld [vmem:[%s1602 + $0x420] sm:$0xff]
        %v1811 = vld [vmem:[%s1602 + $0x428] sm:$0xff]
        %v1812 = vld [vmem:[%s1602 + $0x430] sm:$0xff]
        %v1813 = vld [vmem:[%s1602 + $0x438] sm:$0xff]
        %v1814 = vld [vmem:[%s1602 + $0x440] sm:$0xff]
        %v1815 = vld [vmem:[%s1602 + $0x448] sm:$0xff]
        %v1816 = vld [vmem:[%s1602 + $0x450] sm:$0xff]
        %v1817 = vld [vmem:[%s1602 + $0x458] sm:$0xff]
        %v1818 = vld [vmem:[%s1602 + $0x460] sm:$0xff]
        %v1819 = vld [vmem:[%s1602 + $0x468] sm:$0xff]
        %v1820 = vld [vmem:[%s1602 + $0x470] sm:$0xff]
        %v1821 = vld [vmem:[%s1602 + $0x478] sm:$0xff]
        %v1822 = vld [vmem:[%s1602 + $0x480] sm:$0xff]
        %v1823 = vld [vmem:[%s1602 + $0x488] sm:$0xff]
        %v1824 = vld [vmem:[%s1602 + $0x490] sm:$0xff]
        %v1825 = vld [vmem:[%s1602 + $0x498] sm:$0xff]
        %v1826 = vld [vmem:[%s1602 + $0x4a0] sm:$0xff]
        %v1827 = vld [vmem:[%s1602 + $0x4a8] sm:$0xff]
        %v1828 = vld [vmem:[%s1602 + $0x4b0] sm:$0xff]
        %v1829 = vld [vmem:[%s1602 + $0x4b8] sm:$0xff]
        %v1830 = vld [vmem:[%s1602 + $0x4c0] sm:$0xff]
        %v1831 = vld [vmem:[%s1602 + $0x4c8] sm:$0xff]
        %v1832 = vld [vmem:[%s1602 + $0x4d0] sm:$0xff]
        %v1833 = vld [vmem:[%s1602 + $0x4d8] sm:$0xff]
        %v1834 = vld [vmem:[%s1602 + $0x4e0] sm:$0xff]
        %v1835 = vld [vmem:[%s1602 + $0x4e8] sm:$0xff]
        %v1836 = vld [vmem:[%s1602 + $0x4f0] sm:$0xff]
        %v1837 = vld [vmem:[%s1602 + $0x4f8] sm:$0xff]
        %v1838 = vld [vmem:[%s1602 + $0x500] sm:$0xff]
        %v1839 = vld [vmem:[%s1602 + $0x508] sm:$0xff]
        %v1840 = vld [vmem:[%s1602 + $0x510] sm:$0xff]
        %v1841 = vld [vmem:[%s1602 + $0x518] sm:$0xff]
        %v1842 = vld [vmem:[%s1602 + $0x520] sm:$0xff]
        %v1843 = vld [vmem:[%s1602 + $0x528] sm:$0xff]
        %v1844 = vld [vmem:[%s1602 + $0x530] sm:$0xff]
        %v1845 = vld [vmem:[%s1602 + $0x538] sm:$0xff]
        %v1846 = vld [vmem:[%s1602 + $0x540] sm:$0xff]
        %v1847 = vld [vmem:[%s1602 + $0x548] sm:$0xff]
        %v1848 = vld [vmem:[%s1602 + $0x550] sm:$0xff]
        %v1849 = vld [vmem:[%s1602 + $0x558] sm:$0xff]
        %v1850 = vld [vmem:[%s1602 + $0x560] sm:$0xff]
        %v1851 = vld [vmem:[%s1602 + $0x568] sm:$0xff]
        %v1852 = vld [vmem:[%s1602 + $0x570] sm:$0xff]
        %v1853 = vld [vmem:[%s1602 + $0x578] sm:$0xff]
        %v1854 = vld [vmem:[%s1602 + $0x580] sm:$0xff]
        %v1855 = vld [vmem:[%s1602 + $0x588] sm:$0xff]
        %v1856 = vld [vmem:[%s1602 + $0x590] sm:$0xff]
        %v1857 = vld [vmem:[%s1602 + $0x598] sm:$0xff]
        %v1858 = vld [vmem:[%s1602 + $0x5a0] sm:$0xff]
        %v1859 = vld [vmem:[%s1602 + $0x5a8] sm:$0xff]
        %v1860 = vld [vmem:[%s1602 + $0x5b0] sm:$0xff]
        %v1861 = vld [vmem:[%s1602 + $0x5b8] sm:$0xff]
        %v1862 = vld [vmem:[%s1602 + $0x5c0] sm:$0xff]
        %v1863 = vld [vmem:[%s1602 + $0x5c8] sm:$0xff]
        %v1864 = vld [vmem:[%s1602 + $0x5d0] sm:$0xff]
        %v1865 = vld [vmem:[%s1602 + $0x5d8] sm:$0xff]
        %v1866 = vld [vmem:[%s1602 + $0x5e0] sm:$0xff]
        %v1867 = vld [vmem:[%s1602 + $0x5e8] sm:$0xff]
        %v1868 = vld [vmem:[%s1602 + $0x5f0] sm:$0xff]
        %v1869 = vld [vmem:[%s1602 + $0x5f8] sm:$0xff]
        %v1870 = vld [vmem:[%s1602 + $0x600] sm:$0xff]
        %v1871 = vld [vmem:[%s1602 + $0x608] sm:$0xff]
        %v1872 = vld [vmem:[%s1602 + $0x610] sm:$0xff]
        %v1873 = vld [vmem:[%s1602 + $0x618] sm:$0xff]
        %v1874 = vld [vmem:[%s1602 + $0x620] sm:$0xff]
        %v1875 = vld [vmem:[%s1602 + $0x628] sm:$0xff]
        %v1876 = vld [vmem:[%s1602 + $0x630] sm:$0xff]
        %v1877 = vld [vmem:[%s1602 + $0x638] sm:$0xff]
        %v1878 = vld [vmem:[%s1602 + $0x640] sm:$0xff]
        %v1879 = vld [vmem:[%s1602 + $0x648] sm:$0xff]
        %v1880 = vld [vmem:[%s1602 + $0x650] sm:$0xff]
        %v1881 = vld [vmem:[%s1602 + $0x658] sm:$0xff]
        %v1882 = vld [vmem:[%s1602 + $0x660] sm:$0xff]
        %v1883 = vld [vmem:[%s1602 + $0x668] sm:$0xff]
        %v1884 = vld [vmem:[%s1602 + $0x670] sm:$0xff]
        %v1885 = vld [vmem:[%s1602 + $0x678] sm:$0xff]
        %v1886 = vld [vmem:[%s1602 + $0x680] sm:$0xff]
        %v1887 = vld [vmem:[%s1602 + $0x688] sm:$0xff]
        %v1888 = vld [vmem:[%s1602 + $0x690] sm:$0xff]
        %v1889 = vld [vmem:[%s1602 + $0x698] sm:$0xff]
        %v1890 = vld [vmem:[%s1602 + $0x6a0] sm:$0xff]
        %v1891 = vld [vmem:[%s1602 + $0x6a8] sm:$0xff]
        %v1892 = vld [vmem:[%s1602 + $0x6b0] sm:$0xff]
        %v1893 = vld [vmem:[%s1602 + $0x6b8] sm:$0xff]
        %v1894 = vld [vmem:[%s1602 + $0x6c0] sm:$0xff]
        %v1895 = vld [vmem:[%s1602 + $0x6c8] sm:$0xff]
        %v1896 = vld [vmem:[%s1602 + $0x6d0] sm:$0xff]
        %v1897 = vld [vmem:[%s1602 + $0x6d8] sm:$0xff]
        %v1898 = vld [vmem:[%s1602 + $0x6e0] sm:$0xff]
        %v1899 = vld [vmem:[%s1602 + $0x6e8] sm:$0xff]
        %v1900 = vld [vmem:[%s1602 + $0x6f0] sm:$0xff]
        %v1901 = vld [vmem:[%s1602 + $0x6f8] sm:$0xff]
        %v1902 = vld [vmem:[%s1602 + $0x700] sm:$0xff]
        %v1903 = vld [vmem:[%s1602 + $0x708] sm:$0xff]
        %v1904 = vld [vmem:[%s1602 + $0x710] sm:$0xff]
        %v1905 = vld [vmem:[%s1602 + $0x718] sm:$0xff]
        %v1906 = vld [vmem:[%s1602 + $0x720] sm:$0xff]
        %v1907 = vld [vmem:[%s1602 + $0x728] sm:$0xff]
        %v1908 = vld [vmem:[%s1602 + $0x730] sm:$0xff]
        %v1909 = vld [vmem:[%s1602 + $0x738] sm:$0xff]
        %v1910 = vld [vmem:[%s1602 + $0x740] sm:$0xff]
        %v1911 = vld [vmem:[%s1602 + $0x748] sm:$0xff]
        %v1912 = vld [vmem:[%s1602 + $0x750] sm:$0xff]
        %v1913 = vld [vmem:[%s1602 + $0x758] sm:$0xff]
        %v1914 = vld [vmem:[%s1602 + $0x760] sm:$0xff]
        %v1915 = vld [vmem:[%s1602 + $0x768] sm:$0xff]
        %v1916 = vld [vmem:[%s1602 + $0x770] sm:$0xff]
        %v1917 = vld [vmem:[%s1602 + $0x778] sm:$0xff]
        %v1918 = vld [vmem:[%s1602 + $0x780] sm:$0xff]
        %v1919 = vld [vmem:[%s1602 + $0x788] sm:$0xff]
        %v1920 = vld [vmem:[%s1602 + $0x790] sm:$0xff]
        %v1921 = vld [vmem:[%s1602 + $0x798] sm:$0xff]
        %v1922 = vld [vmem:[%s1602 + $0x7a0] sm:$0xff]
        %v1923 = vld [vmem:[%s1602 + $0x7a8] sm:$0xff]
        %v1924 = vld [vmem:[%s1602 + $0x7b0] sm:$0xff]
        %v1925 = vld [vmem:[%s1602 + $0x7b8] sm:$0xff]
        %v1926 = vld [vmem:[%s1602 + $0x7c0] sm:$0xff]
        %v1927 = vld [vmem:[%s1602 + $0x7c8] sm:$0xff]
        %v1928 = vld [vmem:[%s1602 + $0x7d0] sm:$0xff]
        %v1929 = vld [vmem:[%s1602 + $0x7d8] sm:$0xff]
        %v1930 = vld [vmem:[%s1602 + $0x7e0] sm:$0xff]
        %v1931 = vld [vmem:[%s1602 + $0x7e8] sm:$0xff]
        %v1932 = vld [vmem:[%s1602 + $0x7f0] sm:$0xff]
        %v1933 = vld [vmem:[%s1602 + $0x7f8] sm:$0xff]
        %v1934 = vld [vmem:[%s1602 + $0x800] sm:$0xff]
        %v1935 = vld [vmem:[%s1602 + $0x808] sm:$0xff]
        %v1936 = vld [vmem:[%s1602 + $0x810] sm:$0xff]
        %v1937 = vld [vmem:[%s1602 + $0x818] sm:$0xff]
        %v1938 = vld [vmem:[%s1602 + $0x820] sm:$0xff]
        %v1939 = vld [vmem:[%s1602 + $0x828] sm:$0xff]
        %v1940 = vld [vmem:[%s1602 + $0x830] sm:$0xff]
        %v1941 = vld [vmem:[%s1602 + $0x838] sm:$0xff]
        %v1942 = vld [vmem:[%s1602 + $0x840] sm:$0xff]
        %v1943 = vld [vmem:[%s1602 + $0x848] sm:$0xff]
        %v1944 = vld [vmem:[%s1602 + $0x850] sm:$0xff]
        %v1945 = vld [vmem:[%s1602 + $0x858] sm:$0xff]
        %v1946 = vld [vmem:[%s1602 + $0x860] sm:$0xff]
        %v1947 = vld [vmem:[%s1602 + $0x868] sm:$0xff]
        %v1948 = vld [vmem:[%s1602 + $0x870] sm:$0xff]
        %v1949 = vld [vmem:[%s1602 + $0x878] sm:$0xff]
        %v1950 = vld [vmem:[%s1602 + $0x880] sm:$0xff]
        %v1951 = vld [vmem:[%s1602 + $0x888] sm:$0xff]
        %v1952 = vld [vmem:[%s1602 + $0x890] sm:$0xff]
        %v1953 = vld [vmem:[%s1602 + $0x898] sm:$0xff]
        %v1954 = vld [vmem:[%s1602 + $0x8a0] sm:$0xff]
        %v1955 = vld [vmem:[%s1602 + $0x8a8] sm:$0xff]
        %v1956 = vld [vmem:[%s1602 + $0x8b0] sm:$0xff]
        %v1957 = vld [vmem:[%s1602 + $0x8b8] sm:$0xff]
        %v1958 = vld [vmem:[%s1602 + $0x8c0] sm:$0xff]
        %v1959 = vld [vmem:[%s1602 + $0x8c8] sm:$0xff]
        %v1960 = vld [vmem:[%s1602 + $0x8d0] sm:$0xff]
        %v1961 = vld [vmem:[%s1602 + $0x8d8] sm:$0xff]
        %v1962 = vld [vmem:[%s1602 + $0x8e0] sm:$0xff]
        %v1963 = vld [vmem:[%s1602 + $0x8e8] sm:$0xff]
        %v1964 = vld [vmem:[%s1602 + $0x8f0] sm:$0xff]
        %v1965 = vld [vmem:[%s1602 + $0x8f8] sm:$0xff]
        %v1966 = vld [vmem:[%s1602 + $0x900] sm:$0xff]
        %v1967 = vld [vmem:[%s1602 + $0x908] sm:$0xff]
        %v1968 = vld [vmem:[%s1602 + $0x910] sm:$0xff]
        %v1969 = vld [vmem:[%s1602 + $0x918] sm:$0xff]
        %v1970 = vld [vmem:[%s1602 + $0x920] sm:$0xff]
        %v1971 = vld [vmem:[%s1602 + $0x928] sm:$0xff]
        %v1972 = vld [vmem:[%s1602 + $0x930] sm:$0xff]
        %v1973 = vld [vmem:[%s1602 + $0x938] sm:$0xff]
        %v1974 = vld [vmem:[%s1602 + $0x940] sm:$0xff]
        %v1975 = vld [vmem:[%s1602 + $0x948] sm:$0xff]
        %v1976 = vld [vmem:[%s1602 + $0x950] sm:$0xff]
        %v1977 = vld [vmem:[%s1602 + $0x958] sm:$0xff]
        %v1978 = vld [vmem:[%s1602 + $0x960] sm:$0xff]
        %v1979 = vld [vmem:[%s1602 + $0x968] sm:$0xff]
        %v1980 = vld [vmem:[%s1602 + $0x970] sm:$0xff]
        %v1981 = vld [vmem:[%s1602 + $0x978] sm:$0xff]
        %v1982 = vld [vmem:[%s1602 + $0x980] sm:$0xff]
        %v1983 = vld [vmem:[%s1602 + $0x988] sm:$0xff]
        %v1984 = vld [vmem:[%s1602 + $0x990] sm:$0xff]
        %v1985 = vld [vmem:[%s1602 + $0x998] sm:$0xff]
        %v1986 = vld [vmem:[%s1602 + $0x9a0] sm:$0xff]
        %v1987 = vld [vmem:[%s1602 + $0x9a8] sm:$0xff]
        %v1988 = vld [vmem:[%s1602 + $0x9b0] sm:$0xff]
        %v1989 = vld [vmem:[%s1602 + $0x9b8] sm:$0xff]
        %v1990 = vld [vmem:[%s1602 + $0x9c0] sm:$0xff]
        %v1991 = vld [vmem:[%s1602 + $0x9c8] sm:$0xff]
        %v1992 = vld [vmem:[%s1602 + $0x9d0] sm:$0xff]
        %v1993 = vld [vmem:[%s1602 + $0x9d8] sm:$0xff]
        %v1994 = vld [vmem:[%s1602 + $0x9e0] sm:$0xff]
        %v1995 = vld [vmem:[%s1602 + $0x9e8] sm:$0xff]
        %v1996 = vld [vmem:[%s1602 + $0x9f0] sm:$0xff]
        %v1997 = vld [vmem:[%s1602 + $0x9f8] sm:$0xff]
        %v1998 = vld [vmem:[%s1602 + $0xa00] sm:$0xff]
        %v1999 = vld [vmem:[%s1602 + $0xa08] sm:$0xff]
        %v2000 = vld [vmem:[%s1602 + $0xa10] sm:$0xff]
        %v2001 = vld [vmem:[%s1602 + $0xa18] sm:$0xff]
        %v2002 = vld [vmem:[%s1602 + $0xa20] sm:$0xff]
        %v2003 = vld [vmem:[%s1602 + $0xa28] sm:$0xff]
        %v2004 = vld [vmem:[%s1602 + $0xa30] sm:$0xff]
        %v2005 = vld [vmem:[%s1602 + $0xa38] sm:$0xff]
        %v2006 = vld [vmem:[%s1602 + $0xa40] sm:$0xff]
        %v2007 = vld [vmem:[%s1602 + $0xa48] sm:$0xff]
        %v2008 = vld [vmem:[%s1602 + $0xa50] sm:$0xff]
        %v2009 = vld [vmem:[%s1602 + $0xa58] sm:$0xff]
        %v2010 = vld [vmem:[%s1602 + $0xa60] sm:$0xff]
        %v2011 = vld [vmem:[%s1602 + $0xa68] sm:$0xff]
        %v2012 = vld [vmem:[%s1602 + $0xa70] sm:$0xff]
        %v2013 = vld [vmem:[%s1602 + $0xa78] sm:$0xff]
        %v2014 = vld [vmem:[%s1602 + $0xa80] sm:$0xff]
        %v2015 = vld [vmem:[%s1602 + $0xa88] sm:$0xff]
        %v2016 = vld [vmem:[%s1602 + $0xa90] sm:$0xff]
        %v2017 = vld [vmem:[%s1602 + $0xa98] sm:$0xff]
        %v2018 = vld [vmem:[%s1602 + $0xaa0] sm:$0xff]
        %v2019 = vld [vmem:[%s1602 + $0xaa8] sm:$0xff]
        %v2020 = vld [vmem:[%s1602 + $0xab0] sm:$0xff]
        %v2021 = vld [vmem:[%s1602 + $0xab8] sm:$0xff]
        %v2022 = vld [vmem:[%s1602 + $0xac0] sm:$0xff]
        %v2023 = vld [vmem:[%s1602 + $0xac8] sm:$0xff]
        %v2024 = vld [vmem:[%s1602 + $0xad0] sm:$0xff]
        %v2025 = vld [vmem:[%s1602 + $0xad8] sm:$0xff]
        %v2026 = vld [vmem:[%s1602 + $0xae0] sm:$0xff]
        %v2027 = vld [vmem:[%s1602 + $0xae8] sm:$0xff]
        %v2028 = vld [vmem:[%s1602 + $0xaf0] sm:$0xff]
        %v2029 = vld [vmem:[%s1602 + $0xaf8] sm:$0xff]
        %v2030 = vld [vmem:[%s1602 + $0xb00] sm:$0xff]
        %v2031 = vld [vmem:[%s1602 + $0xb08] sm:$0xff]
        %v2032 = vld [vmem:[%s1602 + $0xb10] sm:$0xff]
        %v2033 = vld [vmem:[%s1602 + $0xb18] sm:$0xff]
        %v2034 = vld [vmem:[%s1602 + $0xb20] sm:$0xff]
        %v2035 = vld [vmem:[%s1602 + $0xb28] sm:$0xff]
        %v2036 = vld [vmem:[%s1602 + $0xb30] sm:$0xff]
        %v2037 = vld [vmem:[%s1602 + $0xb38] sm:$0xff]
        %v2038 = vld [vmem:[%s1602 + $0xb40] sm:$0xff]
        %v2039 = vld [vmem:[%s1602 + $0xb48] sm:$0xff]
        %v2040 = vld [vmem:[%s1602 + $0xb50] sm:$0xff]
        %v2041 = vld [vmem:[%s1602 + $0xb58] sm:$0xff]
        %v2042 = vld [vmem:[%s1602 + $0xb60] sm:$0xff]
        %v2043 = vld [vmem:[%s1602 + $0xb68] sm:$0xff]
        %v2044 = vld [vmem:[%s1602 + $0xb70] sm:$0xff]
        %v2045 = vld [vmem:[%s1602 + $0xb78] sm:$0xff]
        %v2046 = vld [vmem:[%s1602 + $0xb80] sm:$0xff]
        %v2047 = vld [vmem:[%s1602 + $0xb88] sm:$0xff]
        %v2048 = vld [vmem:[%s1602 + $0xb90] sm:$0xff]
        %v2049 = vld [vmem:[%s1602 + $0xb98] sm:$0xff]
        %v2050 = vld [vmem:[%s1602 + $0xba0] sm:$0xff]
        %v2051 = vld [vmem:[%s1602 + $0xba8] sm:$0xff]
        %v2052 = vld [vmem:[%s1602 + $0xbb0] sm:$0xff]
        %v2053 = vld [vmem:[%s1602 + $0xbb8] sm:$0xff]
        %v2054 = vld [vmem:[%s1602 + $0xbc0] sm:$0xff]
        %v2055 = vld [vmem:[%s1602 + $0xbc8] sm:$0xff]
        %v2056 = vld [vmem:[%s1602 + $0xbd0] sm:$0xff]
        %v2057 = vld [vmem:[%s1602 + $0xbd8] sm:$0xff]
        %v2058 = vld [vmem:[%s1602 + $0xbe0] sm:$0xff]
        %v2059 = vld [vmem:[%s1602 + $0xbe8] sm:$0xff]
        %v2060 = vld [vmem:[%s1602 + $0xbf0] sm:$0xff]
        %v2061 = vld [vmem:[%s1602 + $0xbf8] sm:$0xff]
        %v2062 = vld [vmem:[%s1602 + $0xc00] sm:$0xff]
        %v2063 = vld [vmem:[%s1602 + $0xc08] sm:$0xff]
        %v2064 = vld [vmem:[%s1602 + $0xc10] sm:$0xff]
        %v2065 = vld [vmem:[%s1602 + $0xc18] sm:$0xff]
        %v2066 = vld [vmem:[%s1602 + $0xc20] sm:$0xff]
        %v2067 = vld [vmem:[%s1602 + $0xc28] sm:$0xff]
        %v2068 = vld [vmem:[%s1602 + $0xc30] sm:$0xff]
        %v2069 = vld [vmem:[%s1602 + $0xc38] sm:$0xff]
        %v2070 = vld [vmem:[%s1602 + $0xc40] sm:$0xff]
        %v2071 = vld [vmem:[%s1602 + $0xc48] sm:$0xff]
        %v2072 = vld [vmem:[%s1602 + $0xc50] sm:$0xff]
        %v2073 = vld [vmem:[%s1602 + $0xc58] sm:$0xff]
        %v2074 = vld [vmem:[%s1602 + $0xc60] sm:$0xff]
        %v2075 = vld [vmem:[%s1602 + $0xc68] sm:$0xff]
        %v2076 = vld [vmem:[%s1602 + $0xc70] sm:$0xff]
        %v2077 = vld [vmem:[%s1602 + $0xc78] sm:$0xff]
        %v2078 = vld [vmem:[%s1602 + $0xc80] sm:$0xff]
        %v2079 = vld [vmem:[%s1602 + $0xc88] sm:$0xff]
        %v2080 = vld [vmem:[%s1602 + $0xc90] sm:$0xff]
        %v2081 = vld [vmem:[%s1602 + $0xc98] sm:$0xff]
        %v2082 = vld [vmem:[%s1602 + $0xca0] sm:$0xff]
        %v2083 = vld [vmem:[%s1602 + $0xca8] sm:$0xff]
        %v2084 = vld [vmem:[%s1602 + $0xcb0] sm:$0xff]
        %v2085 = vld [vmem:[%s1602 + $0xcb8] sm:$0xff]
        %v2086 = vld [vmem:[%s1602 + $0xcc0] sm:$0xff]
        %v2087 = vld [vmem:[%s1602 + $0xcc8] sm:$0xff]
        %v2088 = vld [vmem:[%s1602 + $0xcd0] sm:$0xff]
        %v2089 = vld [vmem:[%s1602 + $0xcd8] sm:$0xff]
        %v2090 = vld [vmem:[%s1602 + $0xce0] sm:$0xff]
        %v2091 = vld [vmem:[%s1602 + $0xce8] sm:$0xff]
        %v2092 = vld [vmem:[%s1602 + $0xcf0] sm:$0xff]
        %v2093 = vld [vmem:[%s1602 + $0xcf8] sm:$0xff]
        %v2094 = vld [vmem:[%s1602 + $0xd00] sm:$0xff]
        %v2095 = vld [vmem:[%s1602 + $0xd08] sm:$0xff]
        %v2096 = vld [vmem:[%s1602 + $0xd10] sm:$0xff]
        %v2097 = vld [vmem:[%s1602 + $0xd18] sm:$0xff]
        %v2098 = vld [vmem:[%s1602 + $0xd20] sm:$0xff]
        %v2099 = vld [vmem:[%s1602 + $0xd28] sm:$0xff]
        %v2100 = vld [vmem:[%s1602 + $0xd30] sm:$0xff]
        %v2101 = vld [vmem:[%s1602 + $0xd38] sm:$0xff]
        %v2102 = vld [vmem:[%s1602 + $0xd40] sm:$0xff]
        %v2103 = vld [vmem:[%s1602 + $0xd48] sm:$0xff]
        %v2104 = vld [vmem:[%s1602 + $0xd50] sm:$0xff]
        %v2105 = vld [vmem:[%s1602 + $0xd58] sm:$0xff]
        %v2106 = vld [vmem:[%s1602 + $0xd60] sm:$0xff]
        %v2107 = vld [vmem:[%s1602 + $0xd68] sm:$0xff]
        %v2108 = vld [vmem:[%s1602 + $0xd70] sm:$0xff]
        %v2109 = vld [vmem:[%s1602 + $0xd78] sm:$0xff]
        %v2110 = vld [vmem:[%s1602 + $0xd80] sm:$0xff]
        %v2111 = vld [vmem:[%s1602 + $0xd88] sm:$0xff]
        %v2112 = vld [vmem:[%s1602 + $0xd90] sm:$0xff]
        %v2113 = vld [vmem:[%s1602 + $0xd98] sm:$0xff]
        %v2114 = vld [vmem:[%s1602 + $0xda0] sm:$0xff]
        %v2115 = vld [vmem:[%s1602 + $0xda8] sm:$0xff]
        %v2116 = vld [vmem:[%s1602 + $0xdb0] sm:$0xff]
        %v2117 = vld [vmem:[%s1602 + $0xdb8] sm:$0xff]
        %v2118 = vld [vmem:[%s1602 + $0xdc0] sm:$0xff]
        %v2119 = vld [vmem:[%s1602 + $0xdc8] sm:$0xff]
        %v2120 = vld [vmem:[%s1602 + $0xdd0] sm:$0xff]
        %v2121 = vld [vmem:[%s1602 + $0xdd8] sm:$0xff]
        %v2122 = vld [vmem:[%s1602 + $0xde0] sm:$0xff]
        %v2123 = vld [vmem:[%s1602 + $0xde8] sm:$0xff]
        %v2124 = vld [vmem:[%s1602 + $0xdf0] sm:$0xff]
        %v2125 = vld [vmem:[%s1602 + $0xdf8] sm:$0xff]
        %v2126 = vld [vmem:[%s1602 + $0xe00] sm:$0xff]
        %v2127 = vld [vmem:[%s1602 + $0xe08] sm:$0xff]
        %v2128 = vld [vmem:[%s1602 + $0xe10] sm:$0xff]
        %v2129 = vld [vmem:[%s1602 + $0xe18] sm:$0xff]
        %v2130 = vld [vmem:[%s1602 + $0xe20] sm:$0xff]
        %v2131 = vld [vmem:[%s1602 + $0xe28] sm:$0xff]
        %v2132 = vld [vmem:[%s1602 + $0xe30] sm:$0xff]
        %v2133 = vld [vmem:[%s1602 + $0xe38] sm:$0xff]
        %v2134 = vld [vmem:[%s1602 + $0xe40] sm:$0xff]
        %v2135 = vld [vmem:[%s1602 + $0xe48] sm:$0xff]
        %v2136 = vld [vmem:[%s1602 + $0xe50] sm:$0xff]
        %v2137 = vld [vmem:[%s1602 + $0xe58] sm:$0xff]
        %v2138 = vld [vmem:[%s1602 + $0xe60] sm:$0xff]
        %v2139 = vld [vmem:[%s1602 + $0xe68] sm:$0xff]
        %v2140 = vld [vmem:[%s1602 + $0xe70] sm:$0xff]
        %v2141 = vld [vmem:[%s1602 + $0xe78] sm:$0xff]
        %v2142 = vld [vmem:[%s1602 + $0xe80] sm:$0xff]
        %v2143 = vld [vmem:[%s1602 + $0xe88] sm:$0xff]
        %v2144 = vld [vmem:[%s1602 + $0xe90] sm:$0xff]
        %v2145 = vld [vmem:[%s1602 + $0xe98] sm:$0xff]
        %v2146 = vld [vmem:[%s1602 + $0xea0] sm:$0xff]
        %v2147 = vld [vmem:[%s1602 + $0xea8] sm:$0xff]
        %v2148 = vld [vmem:[%s1602 + $0xeb0] sm:$0xff]
        %v2149 = vld [vmem:[%s1602 + $0xeb8] sm:$0xff]
        %v2150 = vld [vmem:[%s1602 + $0xec0] sm:$0xff]
        %v2151 = vld [vmem:[%s1602 + $0xec8] sm:$0xff]
        %v2152 = vld [vmem:[%s1602 + $0xed0] sm:$0xff]
        %v2153 = vld [vmem:[%s1602 + $0xed8] sm:$0xff]
        %v2154 = vld [vmem:[%s1602 + $0xee0] sm:$0xff]
        %v2155 = vld [vmem:[%s1602 + $0xee8] sm:$0xff]
        %v2156 = vld [vmem:[%s1602 + $0xef0] sm:$0xff]
        %v2157 = vld [vmem:[%s1602 + $0xef8] sm:$0xff]
        %v2158 = vld [vmem:[%s1602 + $0xf00] sm:$0xff]
        %v2159 = vld [vmem:[%s1602 + $0xf08] sm:$0xff]
        %v2160 = vld [vmem:[%s1602 + $0xf10] sm:$0xff]
        %v2161 = vld [vmem:[%s1602 + $0xf18] sm:$0xff]
        %v2162 = vld [vmem:[%s1602 + $0xf20] sm:$0xff]
        %v2163 = vld [vmem:[%s1602 + $0xf28] sm:$0xff]
        %v2164 = vld [vmem:[%s1602 + $0xf30] sm:$0xff]
        %v2165 = vld [vmem:[%s1602 + $0xf38] sm:$0xff]
        %v2166 = vld [vmem:[%s1602 + $0xf40] sm:$0xff]
        %v2167 = vld [vmem:[%s1602 + $0xf48] sm:$0xff]
        %v2168 = vld [vmem:[%s1602 + $0xf50] sm:$0xff]
        %v2169 = vld [vmem:[%s1602 + $0xf58] sm:$0xff]
        %v2170 = vld [vmem:[%s1602 + $0xf60] sm:$0xff]
        %v2171 = vld [vmem:[%s1602 + $0xf68] sm:$0xff]
        %v2172 = vld [vmem:[%s1602 + $0xf70] sm:$0xff]
        %v2173 = vld [vmem:[%s1602 + $0xf78] sm:$0xff]
        %v2174 = vld [vmem:[%s1602 + $0xf80] sm:$0xff]
        %v2175 = vld [vmem:[%s1602 + $0xf88] sm:$0xff]
        %v2176 = vld [vmem:[%s1602 + $0xf90] sm:$0xff]
        %v2177 = vld [vmem:[%s1602 + $0xf98] sm:$0xff]
        %v2178 = vld [vmem:[%s1602 + $0xfa0] sm:$0xff]
        %v2179 = vld [vmem:[%s1602 + $0xfa8] sm:$0xff]
        %v2180 = vld [vmem:[%s1602 + $0xfb0] sm:$0xff]
        %v2181 = vld [vmem:[%s1602 + $0xfb8] sm:$0xff]
        %v2182 = vld [vmem:[%s1602 + $0xfc0] sm:$0xff]
        %v2183 = vld [vmem:[%s1602 + $0xfc8] sm:$0xff]
        %v2184 = vld [vmem:[%s1602 + $0xfd0] sm:$0xff]
        %v2185 = vld [vmem:[%s1602 + $0xfd8] sm:$0xff]
        %v2186 = vld [vmem:[%s1602 + $0xfe0] sm:$0xff]
        %v2187 = vld [vmem:[%s1602 + $0xfe8] sm:$0xff]
        %v2188 = vld [vmem:[%s1602 + $0xff0] sm:$0xff]
        %v2189 = vld [vmem:[%s1602 + $0xff8] sm:$0xff]
        %v2190 = vld [vmem:[%s1602 + $0x1000] sm:$0xff]
        %v2191 = vld [vmem:[%s1602 + $0x1008] sm:$0xff]
        %v2192 = vld [vmem:[%s1602 + $0x1010] sm:$0xff]
        %v2193 = vld [vmem:[%s1602 + $0x1018] sm:$0xff]
        %v2194 = vld [vmem:[%s1602 + $0x1020] sm:$0xff]
        %v2195 = vld [vmem:[%s1602 + $0x1028] sm:$0xff]
        %v2196 = vld [vmem:[%s1602 + $0x1030] sm:$0xff]
        %v2197 = vld [vmem:[%s1602 + $0x1038] sm:$0xff]
        %v2198 = vld [vmem:[%s1602 + $0x1040] sm:$0xff]
        %v2199 = vld [vmem:[%s1602 + $0x1048] sm:$0xff]
        %v2200 = vld [vmem:[%s1602 + $0x1050] sm:$0xff]
        %v2201 = vld [vmem:[%s1602 + $0x1058] sm:$0xff]
        %v2202 = vld [vmem:[%s1602 + $0x1060] sm:$0xff]
        %v2203 = vld [vmem:[%s1602 + $0x1068] sm:$0xff]
        %v2204 = vld [vmem:[%s1602 + $0x1070] sm:$0xff]
        %v2205 = vld [vmem:[%s1602 + $0x1078] sm:$0xff]
        %v2206 = vld [vmem:[%s1602 + $0x1080] sm:$0xff]
        %v2207 = vld [vmem:[%s1602 + $0x1088] sm:$0xff]
        %v2208 = vld [vmem:[%s1602 + $0x1090] sm:$0xff]
        %v2209 = vld [vmem:[%s1602 + $0x1098] sm:$0xff]
        %v2210 = vld [vmem:[%s1602 + $0x10a0] sm:$0xff]
        %v2211 = vld [vmem:[%s1602 + $0x10a8] sm:$0xff]
        %v2212 = vld [vmem:[%s1602 + $0x10b0] sm:$0xff]
        %v2213 = vld [vmem:[%s1602 + $0x10b8] sm:$0xff]
        %v2214 = vld [vmem:[%s1602 + $0x10c0] sm:$0xff]
        %v2215 = vld [vmem:[%s1602 + $0x10c8] sm:$0xff]
        %v2216 = vld [vmem:[%s1602 + $0x10d0] sm:$0xff]
        %v2217 = vld [vmem:[%s1602 + $0x10d8] sm:$0xff]
        %v2218 = vld [vmem:[%s1602 + $0x10e0] sm:$0xff]
        %v2219 = vld [vmem:[%s1602 + $0x10e8] sm:$0xff]
        %v2220 = vld [vmem:[%s1602 + $0x10f0] sm:$0xff]
        %v2221 = vld [vmem:[%s1602 + $0x10f8] sm:$0xff]
        %v2222 = vld [vmem:[%s1602 + $0x1100] sm:$0xff]
        %v2223 = vld [vmem:[%s1602 + $0x1108] sm:$0xff]
        %v2224 = vld [vmem:[%s1602 + $0x1110] sm:$0xff]
        %v2225 = vld [vmem:[%s1602 + $0x1118] sm:$0xff]
        %v2226 = vld [vmem:[%s1602 + $0x1120] sm:$0xff]
        %v2227 = vld [vmem:[%s1602 + $0x1128] sm:$0xff]
        %v2228 = vld [vmem:[%s1602 + $0x1130] sm:$0xff]
        %v2229 = vld [vmem:[%s1602 + $0x1138] sm:$0xff]
        %v2230 = vld [vmem:[%s1602 + $0x1140] sm:$0xff]
        %v2231 = vld [vmem:[%s1602 + $0x1148] sm:$0xff]
        %v2232 = vld [vmem:[%s1602 + $0x1150] sm:$0xff]
        %v2233 = vld [vmem:[%s1602 + $0x1158] sm:$0xff]
        %v2234 = vld [vmem:[%s1602 + $0x1160] sm:$0xff]
        %v2235 = vld [vmem:[%s1602 + $0x1168] sm:$0xff]
        %v2236 = vld [vmem:[%s1602 + $0x1170] sm:$0xff]
        %v2237 = vld [vmem:[%s1602 + $0x1178] sm:$0xff]
        %v2238 = vld [vmem:[%s1602 + $0x1180] sm:$0xff]
        %v2239 = vld [vmem:[%s1602 + $0x1188] sm:$0xff]
        %v2240 = vld [vmem:[%s1602 + $0x1190] sm:$0xff]
        %v2241 = vld [vmem:[%s1602 + $0x1198] sm:$0xff]
        %v2242 = vld [vmem:[%s1602 + $0x11a0] sm:$0xff]
        %v2243 = vld [vmem:[%s1602 + $0x11a8] sm:$0xff]
        %v2244 = vld [vmem:[%s1602 + $0x11b0] sm:$0xff]
        %v2245 = vld [vmem:[%s1602 + $0x11b8] sm:$0xff]
        %v2246 = vld [vmem:[%s1602 + $0x11c0] sm:$0xff]
        %v2247 = vld [vmem:[%s1602 + $0x11c8] sm:$0xff]
        %v2248 = vld [vmem:[%s1602 + $0x11d0] sm:$0xff]
        %v2249 = vld [vmem:[%s1602 + $0x11d8] sm:$0xff]
        %v2250 = vld [vmem:[%s1602 + $0x11e0] sm:$0xff]
        %v2251 = vld [vmem:[%s1602 + $0x11e8] sm:$0xff]
        %v2252 = vld [vmem:[%s1602 + $0x11f0] sm:$0xff]
        %v2253 = vld [vmem:[%s1602 + $0x11f8] sm:$0xff]
        %v2254 = vld [vmem:[%s1602 + $0x1200] sm:$0xff]
        %v2255 = vld [vmem:[%s1602 + $0x1208] sm:$0xff]
        %v2256 = vld [vmem:[%s1602 + $0x1210] sm:$0xff]
        %v2257 = vld [vmem:[%s1602 + $0x1218] sm:$0xff]
        %v2258 = vld [vmem:[%s1602 + $0x1220] sm:$0xff]
        %v2259 = vld [vmem:[%s1602 + $0x1228] sm:$0xff]
        %v2260 = vld [vmem:[%s1602 + $0x1230] sm:$0xff]
        %v2261 = vld [vmem:[%s1602 + $0x1238] sm:$0xff]
        %v2262 = vld [vmem:[%s1602 + $0x1240] sm:$0xff]
        %v2263 = vld [vmem:[%s1602 + $0x1248] sm:$0xff]
        %v2264 = vld [vmem:[%s1602 + $0x1250] sm:$0xff]
        %v2265 = vld [vmem:[%s1602 + $0x1258] sm:$0xff]
        %v2266 = vld [vmem:[%s1602 + $0x1260] sm:$0xff]
        %v2267 = vld [vmem:[%s1602 + $0x1268] sm:$0xff]
        %v2268 = vld [vmem:[%s1602 + $0x1270] sm:$0xff]
        %v2269 = vld [vmem:[%s1602 + $0x1278] sm:$0xff]
        %v2270 = vld [vmem:[%s1602 + $0x1280] sm:$0xff]
        %v2271 = vld [vmem:[%s1602 + $0x1288] sm:$0xff]
        %v2272 = vld [vmem:[%s1602 + $0x1290] sm:$0xff]
        %v2273 = vld [vmem:[%s1602 + $0x1298] sm:$0xff]
        %v2274 = vld [vmem:[%s1602 + $0x12a0] sm:$0xff]
        %v2275 = vld [vmem:[%s1602 + $0x12a8] sm:$0xff]
        %v2276 = vld [vmem:[%s1602 + $0x12b0] sm:$0xff]
        %v2277 = vld [vmem:[%s1602 + $0x12b8] sm:$0xff]
        %v2278 = vld [vmem:[%s1602 + $0x12c0] sm:$0xff]
        %v2279 = vld [vmem:[%s1602 + $0x12c8] sm:$0xff]
        %v2280 = vld [vmem:[%s1602 + $0x12d0] sm:$0xff]
        %v2281 = vld [vmem:[%s1602 + $0x12d8] sm:$0xff]
        %v2282 = vld [vmem:[%s1602 + $0x12e0] sm:$0xff]
        %v2283 = vld [vmem:[%s1602 + $0x12e8] sm:$0xff]
        %v2284 = vld [vmem:[%s1602 + $0x12f0] sm:$0xff]
        %v2285 = vld [vmem:[%s1602 + $0x12f8] sm:$0xff]
        %v2286 = vld [vmem:[%s1602 + $0x1300] sm:$0xff]
        %v2287 = vld [vmem:[%s1602 + $0x1308] sm:$0xff]
        %v2288 = vld [vmem:[%s1602 + $0x1310] sm:$0xff]
        %v2289 = vld [vmem:[%s1602 + $0x1318] sm:$0xff]
        %v2290 = vld [vmem:[%s1602 + $0x1320] sm:$0xff]
        %v2291 = vld [vmem:[%s1602 + $0x1328] sm:$0xff]
        %v2292 = vld [vmem:[%s1602 + $0x1330] sm:$0xff]
        %v2293 = vld [vmem:[%s1602 + $0x1338] sm:$0xff]
        %v2294 = vld [vmem:[%s1602 + $0x1340] sm:$0xff]
        %v2295 = vld [vmem:[%s1602 + $0x1348] sm:$0xff]
        %v2296 = vld [vmem:[%s1602 + $0x1350] sm:$0xff]
        %v2297 = vld [vmem:[%s1602 + $0x1358] sm:$0xff]
        %v2298 = vld [vmem:[%s1602 + $0x1360] sm:$0xff]
        %v2299 = vld [vmem:[%s1602 + $0x1368] sm:$0xff]
        %v2300 = vld [vmem:[%s1602 + $0x1370] sm:$0xff]
        %v2301 = vld [vmem:[%s1602 + $0x1378] sm:$0xff]
        %v2302 = vld [vmem:[%s1602 + $0x1380] sm:$0xff]
        %v2303 = vld [vmem:[%s1602 + $0x1388] sm:$0xff]
        %v2304 = vld [vmem:[%s1602 + $0x1390] sm:$0xff]
        %v2305 = vld [vmem:[%s1602 + $0x1398] sm:$0xff]
        %v2306 = vld [vmem:[%s1602 + $0x13a0] sm:$0xff]
        %v2307 = vld [vmem:[%s1602 + $0x13a8] sm:$0xff]
        %v2308 = vld [vmem:[%s1602 + $0x13b0] sm:$0xff]
        %v2309 = vld [vmem:[%s1602 + $0x13b8] sm:$0xff]
        %v2310 = vld [vmem:[%s1602 + $0x13c0] sm:$0xff]
        %v2311 = vld [vmem:[%s1602 + $0x13c8] sm:$0xff]
        %v2312 = vld [vmem:[%s1602 + $0x13d0] sm:$0xff]
        %v2313 = vld [vmem:[%s1602 + $0x13d8] sm:$0xff]
        %v2314 = vld [vmem:[%s1602 + $0x13e0] sm:$0xff]
        %v2315 = vld [vmem:[%s1602 + $0x13e8] sm:$0xff]
        %v2316 = vld [vmem:[%s1602 + $0x13f0] sm:$0xff]
        %v2317 = vld [vmem:[%s1602 + $0x13f8] sm:$0xff]
        %v2318 = vld [vmem:[%s1602 + $0x1400] sm:$0xff]
        %v2319 = vld [vmem:[%s1602 + $0x1408] sm:$0xff]
        %v2320 = vld [vmem:[%s1602 + $0x1410] sm:$0xff]
        %v2321 = vld [vmem:[%s1602 + $0x1418] sm:$0xff]
        %v2322 = vld [vmem:[%s1602 + $0x1420] sm:$0xff]
        %v2323 = vld [vmem:[%s1602 + $0x1428] sm:$0xff]
        %v2324 = vld [vmem:[%s1602 + $0x1430] sm:$0xff]
        %v2325 = vld [vmem:[%s1602 + $0x1438] sm:$0xff]
        %v2326 = vld [vmem:[%s1602 + $0x1440] sm:$0xff]
        %v2327 = vld [vmem:[%s1602 + $0x1448] sm:$0xff]
        %v2328 = vld [vmem:[%s1602 + $0x1450] sm:$0xff]
        %v2329 = vld [vmem:[%s1602 + $0x1458] sm:$0xff]
        %v2330 = vld [vmem:[%s1602 + $0x1460] sm:$0xff]
        %v2331 = vld [vmem:[%s1602 + $0x1468] sm:$0xff]
        %v2332 = vld [vmem:[%s1602 + $0x1470] sm:$0xff]
        %v2333 = vld [vmem:[%s1602 + $0x1478] sm:$0xff]
        %v2334 = vld [vmem:[%s1602 + $0x1480] sm:$0xff]
        %v2335 = vld [vmem:[%s1602 + $0x1488] sm:$0xff]
        %v2336 = vld [vmem:[%s1602 + $0x1490] sm:$0xff]
        %v2337 = vld [vmem:[%s1602 + $0x1498] sm:$0xff]
        %v2338 = vld [vmem:[%s1602 + $0x14a0] sm:$0xff]
        %v2339 = vld [vmem:[%s1602 + $0x14a8] sm:$0xff]
        %v2340 = vld [vmem:[%s1602 + $0x14b0] sm:$0xff]
        %v2341 = vld [vmem:[%s1602 + $0x14b8] sm:$0xff]
        %v2342 = vld [vmem:[%s1602 + $0x14c0] sm:$0xff]
        %v2343 = vld [vmem:[%s1602 + $0x14c8] sm:$0xff]
        %v2344 = vld [vmem:[%s1602 + $0x14d0] sm:$0xff]
        %v2345 = vld [vmem:[%s1602 + $0x14d8] sm:$0xff]
        %v2346 = vld [vmem:[%s1602 + $0x14e0] sm:$0xff]
        %v2347 = vld [vmem:[%s1602 + $0x14e8] sm:$0xff]
        %v2348 = vld [vmem:[%s1602 + $0x14f0] sm:$0xff]
        %v2349 = vld [vmem:[%s1602 + $0x14f8] sm:$0xff]
        %v2350 = vld [vmem:[%s1649] sm:$0xf]
        %v2352 = vlaneseq
        %v2353 = vshrl.u32 %v2352, 7
        %v2354 = vsub.s32 0, %v2353
        %v2355 = vrot.slane %v2350, %v2354
        %v2356 = vlaneseq
        %v2357 = vshrl.u32 %v2356, 7
        %v2358 = vsub.s32 1, %v2357
        %v2359 = vrot.slane %v2350, %v2358
        %v2360 = vlaneseq
        %v2361 = vshrl.u32 %v2360, 7
        %v2362 = vsub.s32 2, %v2361
        %v2363 = vrot.slane %v2350, %v2362
        %v2364 = vlaneseq
        %v2365 = vshrl.u32 %v2364, 7
        %v2366 = vsub.s32 3, %v2365
        %v2367 = vrot.slane %v2350, %v2366
        %vm2372 = vcmask 523264
        %v2374 = vsel %vm2372, %v1677, 0
        %2376 = vmatprep.subr.mxu0 %v1679
        %2377 = vmatpush1.msra.mxu0 %v1678
        %2378 = vmatprep.subr.mxu0 %v1683
        %2379 = vmatpush1.msra.mxu0 %v1682
        %2380 = vmatprep.subr.mxu0 %v1687
        %2381 = vmatpush1.msra.mxu0 %v1686
        %2382 = vmatprep.subr.mxu0 %v1691
        %2383 = vmatpush1.msra.mxu0 %v1690
        %2384 = vmatprep.subr.mxu0 %v1695
        %2385 = vmatpush1.msra.mxu0 %v1694
        %2386 = vmatprep.subr.mxu0 %v1699
        %2387 = vmatpush1.msra.mxu0 %v1698
        %2388 = vmatprep.subr.mxu0 %v1703
        %2389 = vmatpush1.msra.mxu0 %v1702
        %2390 = vmatprep.subr.mxu0 %v1707
        %2391 = vmatpush1.msra.mxu0 %v1706
        %2392 = vmatprep.subr.mxu0 %v1711
        %2393 = vmatpush1.msra.mxu0 %v1710
        %2394 = vmatprep.subr.mxu0 %v1715
        %2395 = vmatpush1.msra.mxu0 %v1714
        %2396 = vmatprep.subr.mxu0 %v1719
        %2397 = vmatpush1.msra.mxu0 %v1718
        %2398 = vmatprep.subr.mxu0 %v1723
        %2399 = vmatpush1.msra.mxu0 %v1722
        %2400 = vmatprep.subr.mxu0 %v1727
        %2401 = vmatpush1.msra.mxu0 %v1726
        %2402 = vmatprep.subr.mxu0 %v1731
        %2403 = vmatpush1.msra.mxu0 %v1730
        %2404 = vmatprep.subr.mxu0 %v1735
        %2405 = vmatpush1.msra.mxu0 %v1734
        %2406 = vmatprep.subr.mxu0 %v1739
        %2407 = vmatpush1.msra.mxu0 %v1738
        %2408 = vmatprep.subr.mxu0 %v1743
        %2409 = vmatpush1.msra.mxu0 %v1742
        %2410 = vmatprep.subr.mxu0 %v1747
        %2411 = vmatpush1.msra.mxu0 %v1746
        %2412 = vmatprep.subr.mxu0 %v1751
        %2413 = vmatpush1.msra.mxu0 %v1750
        %2414 = vmatprep.subr.mxu0 %v1755
        %2415 = vmatpush1.msra.mxu0 %v1754
        %2416 = vmatprep.subr.mxu0 %v1759
        %2417 = vmatpush1.msra.mxu0 %v1758
        %2418 = vmatprep.subr.mxu0 %v1763
        %2419 = vmatpush1.msra.mxu0 %v1762
        %2420 = vmatprep.subr.mxu0 %v1767
        %2421 = vmatpush1.msra.mxu0 %v1766
        %2422 = vmatprep.subr.mxu0 %v1771
        %2423 = vmatpush1.msra.mxu0 %v1770
        %2424 = vmatprep.subr.mxu0 %v1775
        %2425 = vmatpush1.msra.mxu0 %v1774
        %2426 = vmatprep.subr.mxu0 %v1779
        %2427 = vmatpush1.msra.mxu0 %v1778
        %2428 = vmatprep.subr.mxu0 %v1783
        %2429 = vmatpush1.msra.mxu0 %v1782
        %2430 = vmatprep.subr.mxu0 %v1787
        %2431 = vmatpush1.msra.mxu0 %v1786
        %2432 = vmatprep.subr.mxu0 %v1791
        %2433 = vmatpush1.msra.mxu0 %v1790
        %2434 = vmatprep.subr.mxu0 %v1795
        %2435 = vmatpush1.msra.mxu0 %v1794
        %2436 = vmatprep.subr.mxu0 %v1799
        %2437 = vmatpush1.msra.mxu0 %v1798
        %2438 = vmatprep.subr.mxu0 %v1803
        %2439 = vmatpush1.msra.mxu0 %v1802
        %2440 = vmatprep.mubr.f32.mxu0 %v1668
        %2441 = vmatmul.mubr.f32.gmra.mrb[0].mxu0 %v1667
        %v2442 = vpop.f32.mrb[0].mxu0
        %v2443 = vadd.f32 %v2355, %v2442
        %v2444 = vpop.f32.mrb[0].mxu0
        %v2445 = vadd.f32 %v2359, %v2444
        %2446 = vdwg.mxu0
        %2447 = vmatprep.subr.mxu0 %v1807
        %2448 = vmatpush1.msra.mxu0 %v1806
        %2449 = vmatprep.subr.mxu0 %v1811
        %2450 = vmatpush1.msra.mxu0 %v1810
        %2451 = vmatprep.subr.mxu0 %v1815
        %2452 = vmatpush1.msra.mxu0 %v1814
        %2453 = vmatprep.subr.mxu0 %v1819
        %2454 = vmatpush1.msra.mxu0 %v1818
        %2455 = vmatprep.subr.mxu0 %v1823
        %2456 = vmatpush1.msra.mxu0 %v1822
        %2457 = vmatprep.subr.mxu0 %v1827
        %2458 = vmatpush1.msra.mxu0 %v1826
        %2459 = vmatprep.subr.mxu0 %v1831
        %2460 = vmatpush1.msra.mxu0 %v1830
        %2461 = vmatprep.subr.mxu0 %v1835
        %2462 = vmatpush1.msra.mxu0 %v1834
        %2463 = vmatprep.subr.mxu0 %v1839
        %2464 = vmatpush1.msra.mxu0 %v1838
        %2465 = vmatprep.subr.mxu0 %v1843
        %2466 = vmatpush1.msra.mxu0 %v1842
        %2467 = vmatprep.subr.mxu0 %v1847
        %2468 = vmatpush1.msra.mxu0 %v1846
        %2469 = vmatprep.subr.mxu0 %v1851
        %2470 = vmatpush1.msra.mxu0 %v1850
        %2471 = vmatprep.subr.mxu0 %v1855
        %2472 = vmatpush1.msra.mxu0 %v1854
        %2473 = vmatprep.subr.mxu0 %v1859
        %2474 = vmatpush1.msra.mxu0 %v1858
        %2475 = vmatprep.subr.mxu0 %v1863
        %2476 = vmatpush1.msra.mxu0 %v1862
        %2477 = vmatprep.subr.mxu0 %v1867
        %2478 = vmatpush1.msra.mxu0 %v1866
        %2479 = vmatprep.subr.mxu0 %v1871
        %2480 = vmatpush1.msra.mxu0 %v1870
        %2481 = vmatprep.subr.mxu0 %v1875
        %2482 = vmatpush1.msra.mxu0 %v1874
        %2483 = vmatprep.subr.mxu0 %v1879
        %2484 = vmatpush1.msra.mxu0 %v1878
        %2485 = vmatprep.subr.mxu0 %v1883
        %2486 = vmatpush1.msra.mxu0 %v1882
        %2487 = vmatprep.subr.mxu0 %v1887
        %2488 = vmatpush1.msra.mxu0 %v1886
        %2489 = vmatprep.subr.mxu0 %v1891
        %2490 = vmatpush1.msra.mxu0 %v1890
        %2491 = vmatprep.subr.mxu0 %v1895
        %2492 = vmatpush1.msra.mxu0 %v1894
        %2493 = vmatprep.subr.mxu0 %v1899
        %2494 = vmatpush1.msra.mxu0 %v1898
        %2495 = vmatprep.subr.mxu0 %v1903
        %2496 = vmatpush1.msra.mxu0 %v1902
        %2497 = vmatprep.subr.mxu0 %v1907
        %2498 = vmatpush1.msra.mxu0 %v1906
        %2499 = vmatprep.subr.mxu0 %v1911
        %2500 = vmatpush1.msra.mxu0 %v1910
        %2501 = vmatprep.subr.mxu0 %v1915
        %2502 = vmatpush1.msra.mxu0 %v1914
        %2503 = vmatprep.subr.mxu0 %v1919
        %2504 = vmatpush1.msra.mxu0 %v1918
        %2505 = vmatprep.subr.mxu0 %v1923
        %2506 = vmatpush1.msra.mxu0 %v1922
        %2507 = vmatprep.subr.mxu0 %v1927
        %2508 = vmatpush1.msra.mxu0 %v1926
        %2509 = vmatprep.subr.mxu0 %v1931
        %2510 = vmatpush1.msra.mxu0 %v1930
        %2511 = vmatprep.mubr.f32.mxu0 %v1670
        %2512 = vmatmul.mubr.f32.gmra.mrb[0].mxu0 %v1669
        %v2513 = vpop.f32.mrb[0].mxu0
        %v2514 = vadd.f32 %v2443, %v2513
        %v2515 = vpop.f32.mrb[0].mxu0
        %v2516 = vadd.f32 %v2445, %v2515
        %2517 = vdwg.mxu0
        %2518 = vmatprep.subr.mxu0 %v1935
        %2519 = vmatpush1.msra.mxu0 %v1934
        %2520 = vmatprep.subr.mxu0 %v1939
        %2521 = vmatpush1.msra.mxu0 %v1938
        %2522 = vmatprep.subr.mxu0 %v1943
        %2523 = vmatpush1.msra.mxu0 %v1942
        %2524 = vmatprep.subr.mxu0 %v1947
        %2525 = vmatpush1.msra.mxu0 %v1946
        %2526 = vmatprep.subr.mxu0 %v1951
        %2527 = vmatpush1.msra.mxu0 %v1950
        %2528 = vmatprep.subr.mxu0 %v1955
        %2529 = vmatpush1.msra.mxu0 %v1954
        %2530 = vmatprep.subr.mxu0 %v1959
        %2531 = vmatpush1.msra.mxu0 %v1958
        %2532 = vmatprep.subr.mxu0 %v1963
        %2533 = vmatpush1.msra.mxu0 %v1962
        %2534 = vmatprep.subr.mxu0 %v1967
        %2535 = vmatpush1.msra.mxu0 %v1966
        %2536 = vmatprep.subr.mxu0 %v1971
        %2537 = vmatpush1.msra.mxu0 %v1970
        %2538 = vmatprep.subr.mxu0 %v1975
        %2539 = vmatpush1.msra.mxu0 %v1974
        %2540 = vmatprep.subr.mxu0 %v1979
        %2541 = vmatpush1.msra.mxu0 %v1978
        %2542 = vmatprep.subr.mxu0 %v1983
        %2543 = vmatpush1.msra.mxu0 %v1982
        %2544 = vmatprep.subr.mxu0 %v1987
        %2545 = vmatpush1.msra.mxu0 %v1986
        %2546 = vmatprep.subr.mxu0 %v1991
        %2547 = vmatpush1.msra.mxu0 %v1990
        %2548 = vmatprep.subr.mxu0 %v1995
        %2549 = vmatpush1.msra.mxu0 %v1994
        %2550 = vmatprep.subr.mxu0 %v1999
        %2551 = vmatpush1.msra.mxu0 %v1998
        %2552 = vmatprep.subr.mxu0 %v2003
        %2553 = vmatpush1.msra.mxu0 %v2002
        %2554 = vmatprep.subr.mxu0 %v2007
        %2555 = vmatpush1.msra.mxu0 %v2006
        %2556 = vmatprep.subr.mxu0 %v2011
        %2557 = vmatpush1.msra.mxu0 %v2010
        %2558 = vmatprep.subr.mxu0 %v2015
        %2559 = vmatpush1.msra.mxu0 %v2014
        %2560 = vmatprep.subr.mxu0 %v2019
        %2561 = vmatpush1.msra.mxu0 %v2018
        %2562 = vmatprep.subr.mxu0 %v2023
        %2563 = vmatpush1.msra.mxu0 %v2022
        %2564 = vmatprep.subr.mxu0 %v2027
        %2565 = vmatpush1.msra.mxu0 %v2026
        %2566 = vmatprep.subr.mxu0 %v2031
        %2567 = vmatpush1.msra.mxu0 %v2030
        %2568 = vmatprep.subr.mxu0 %v2035
        %2569 = vmatpush1.msra.mxu0 %v2034
        %2570 = vmatprep.subr.mxu0 %v2039
        %2571 = vmatpush1.msra.mxu0 %v2038
        %2572 = vmatprep.subr.mxu0 %v2043
        %2573 = vmatpush1.msra.mxu0 %v2042
        %2574 = vmatprep.subr.mxu0 %v2047
        %2575 = vmatpush1.msra.mxu0 %v2046
        %2576 = vmatprep.subr.mxu0 %v2051
        %2577 = vmatpush1.msra.mxu0 %v2050
        %2578 = vmatprep.subr.mxu0 %v2055
        %2579 = vmatpush1.msra.mxu0 %v2054
        %2580 = vmatprep.subr.mxu0 %v2059
        %2581 = vmatpush1.msra.mxu0 %v2058
        %2582 = vmatprep.mubr.f32.mxu0 %v1672
        %2583 = vmatmul.mubr.f32.gmra.mrb[0].mxu0 %v1671
        %v2584 = vpop.f32.mrb[0].mxu0
        %v2585 = vadd.f32 %v2514, %v2584
        %v2586 = vpop.f32.mrb[0].mxu0
        %v2587 = vadd.f32 %v2516, %v2586
        %2588 = vdwg.mxu0
        %2589 = vmatprep.subr.mxu0 %v2063
        %2590 = vmatpush1.msra.mxu0 %v2062
        %2591 = vmatprep.subr.mxu0 %v2067
        %2592 = vmatpush1.msra.mxu0 %v2066
        %2593 = vmatprep.subr.mxu0 %v2071
        %2594 = vmatpush1.msra.mxu0 %v2070
        %2595 = vmatprep.subr.mxu0 %v2075
        %2596 = vmatpush1.msra.mxu0 %v2074
        %2597 = vmatprep.subr.mxu0 %v2079
        %2598 = vmatpush1.msra.mxu0 %v2078
        %2599 = vmatprep.subr.mxu0 %v2083
        %2600 = vmatpush1.msra.mxu0 %v2082
        %2601 = vmatprep.subr.mxu0 %v2087
        %2602 = vmatpush1.msra.mxu0 %v2086
        %2603 = vmatprep.subr.mxu0 %v2091
        %2604 = vmatpush1.msra.mxu0 %v2090
        %2605 = vmatprep.subr.mxu0 %v2095
        %2606 = vmatpush1.msra.mxu0 %v2094
        %2607 = vmatprep.subr.mxu0 %v2099
        %2608 = vmatpush1.msra.mxu0 %v2098
        %2609 = vmatprep.subr.mxu0 %v2103
        %2610 = vmatpush1.msra.mxu0 %v2102
        %2611 = vmatprep.subr.mxu0 %v2107
        %2612 = vmatpush1.msra.mxu0 %v2106
        %2613 = vmatprep.subr.mxu0 %v2111
        %2614 = vmatpush1.msra.mxu0 %v2110
        %2615 = vmatprep.subr.mxu0 %v2115
        %2616 = vmatpush1.msra.mxu0 %v2114
        %2617 = vmatprep.subr.mxu0 %v2119
        %2618 = vmatpush1.msra.mxu0 %v2118
        %2619 = vmatprep.subr.mxu0 %v2123
        %2620 = vmatpush1.msra.mxu0 %v2122
        %2621 = vmatprep.subr.mxu0 %v2127
        %2622 = vmatpush1.msra.mxu0 %v2126
        %2623 = vmatprep.subr.mxu0 %v2131
        %2624 = vmatpush1.msra.mxu0 %v2130
        %2625 = vmatprep.subr.mxu0 %v2135
        %2626 = vmatpush1.msra.mxu0 %v2134
        %2627 = vmatprep.subr.mxu0 %v2139
        %2628 = vmatpush1.msra.mxu0 %v2138
        %2629 = vmatprep.subr.mxu0 %v2143
        %2630 = vmatpush1.msra.mxu0 %v2142
        %2631 = vmatprep.subr.mxu0 %v2147
        %2632 = vmatpush1.msra.mxu0 %v2146
        %2633 = vmatprep.subr.mxu0 %v2151
        %2634 = vmatpush1.msra.mxu0 %v2150
        %2635 = vmatprep.subr.mxu0 %v2155
        %2636 = vmatpush1.msra.mxu0 %v2154
        %2637 = vmatprep.subr.mxu0 %v2159
        %2638 = vmatpush1.msra.mxu0 %v2158
        %2639 = vmatprep.subr.mxu0 %v2163
        %2640 = vmatpush1.msra.mxu0 %v2162
        %2641 = vmatprep.subr.mxu0 %v2167
        %2642 = vmatpush1.msra.mxu0 %v2166
        %2643 = vmatprep.subr.mxu0 %v2171
        %2644 = vmatpush1.msra.mxu0 %v2170
        %2645 = vmatprep.subr.mxu0 %v2175
        %2646 = vmatpush1.msra.mxu0 %v2174
        %2647 = vmatprep.subr.mxu0 %v2179
        %2648 = vmatpush1.msra.mxu0 %v2178
        %2649 = vmatprep.subr.mxu0 %v2183
        %2650 = vmatpush1.msra.mxu0 %v2182
        %2651 = vmatprep.subr.mxu0 %v2187
        %2652 = vmatpush1.msra.mxu0 %v2186
        %2653 = vmatprep.mubr.f32.mxu0 %v1674
        %2654 = vmatmul.mubr.f32.gmra.mrb[0].mxu0 %v1673
        %v2655 = vpop.f32.mrb[0].mxu0
        %v2656 = vadd.f32 %v2585, %v2655
        %v2657 = vpop.f32.mrb[0].mxu0
        %v2658 = vadd.f32 %v2587, %v2657
        %2659 = vdwg.mxu0
        %2660 = vmatprep.subr.mxu0 %v2191
        %2661 = vmatpush1.msra.mxu0 %v2190
        %2662 = vmatprep.subr.mxu0 %v2195
        %2663 = vmatpush1.msra.mxu0 %v2194
        %2664 = vmatprep.subr.mxu0 %v2199
        %2665 = vmatpush1.msra.mxu0 %v2198
        %2666 = vmatprep.subr.mxu0 %v2203
        %2667 = vmatpush1.msra.mxu0 %v2202
        %2668 = vmatprep.subr.mxu0 %v2207
        %2669 = vmatpush1.msra.mxu0 %v2206
        %2670 = vmatprep.subr.mxu0 %v2211
        %2671 = vmatpush1.msra.mxu0 %v2210
        %2672 = vmatprep.subr.mxu0 %v2215
        %2673 = vmatpush1.msra.mxu0 %v2214
        %2674 = vmatprep.subr.mxu0 %v2219
        %2675 = vmatpush1.msra.mxu0 %v2218
        %2676 = vmatprep.subr.mxu0 %v2223
        %2677 = vmatpush1.msra.mxu0 %v2222
        %2678 = vmatprep.subr.mxu0 %v2227
        %2679 = vmatpush1.msra.mxu0 %v2226
        %2680 = vmatprep.subr.mxu0 %v2231
        %2681 = vmatpush1.msra.mxu0 %v2230
        %2682 = vmatprep.subr.mxu0 %v2235
        %2683 = vmatpush1.msra.mxu0 %v2234
        %2684 = vmatprep.subr.mxu0 %v2239
        %2685 = vmatpush1.msra.mxu0 %v2238
        %2686 = vmatprep.subr.mxu0 %v2243
        %2687 = vmatpush1.msra.mxu0 %v2242
        %2688 = vmatprep.subr.mxu0 %v2247
        %2689 = vmatpush1.msra.mxu0 %v2246
        %2690 = vmatprep.subr.mxu0 %v2251
        %2691 = vmatpush1.msra.mxu0 %v2250
        %2692 = vmatprep.subr.mxu0 %v2255
        %2693 = vmatpush1.msra.mxu0 %v2254
        %2694 = vmatprep.subr.mxu0 %v2259
        %2695 = vmatpush1.msra.mxu0 %v2258
        %2696 = vmatprep.subr.mxu0 %v2263
        %2697 = vmatpush1.msra.mxu0 %v2262
        %2698 = vmatprep.subr.mxu0 %v2267
        %2699 = vmatpush1.msra.mxu0 %v2266
        %2700 = vmatprep.subr.mxu0 %v2271
        %2701 = vmatpush1.msra.mxu0 %v2270
        %2702 = vmatprep.subr.mxu0 %v2275
        %2703 = vmatpush1.msra.mxu0 %v2274
        %2704 = vmatprep.subr.mxu0 %v2279
        %2705 = vmatpush1.msra.mxu0 %v2278
        %2706 = vmatprep.subr.mxu0 %v2283
        %2707 = vmatpush1.msra.mxu0 %v2282
        %2708 = vmatprep.subr.mxu0 %v2287
        %2709 = vmatpush1.msra.mxu0 %v2286
        %2710 = vmatprep.subr.mxu0 %v2291
        %2711 = vmatpush1.msra.mxu0 %v2290
        %2712 = vmatprep.subr.mxu0 %v2295
        %2713 = vmatpush1.msra.mxu0 %v2294
        %2714 = vmatprep.subr.mxu0 %v2299
        %2715 = vmatpush1.msra.mxu0 %v2298
        %2716 = vmatprep.subr.mxu0 %v2303
        %2717 = vmatpush1.msra.mxu0 %v2302
        %2718 = vmatprep.subr.mxu0 %v2307
        %2719 = vmatpush1.msra.mxu0 %v2306
        %2720 = vmatprep.subr.mxu0 %v2311
        %2721 = vmatpush1.msra.mxu0 %v2310
        %2722 = vmatprep.subr.mxu0 %v2315
        %2723 = vmatpush1.msra.mxu0 %v2314
        %2724 = vmatprep.mubr.f32.mxu0 %v1676
        %2725 = vmatmul.mubr.f32.gmra.mrb[0].mxu0 %v1675
        %v2726 = vpop.f32.mrb[0].mxu0
        %v2727 = vadd.f32 %v2656, %v2726
        %v2728 = vpop.f32.mrb[0].mxu0
        %v2729 = vadd.f32 %v2658, %v2728
        %2730 = vdwg.mxu0
        %2731 = vmatprep.subr.mxu0 %v2319
        %2732 = vmatpush1.msra.mxu0 %v2318
        %2733 = vmatprep.subr.mxu0 %v2323
        %2734 = vmatpush1.msra.mxu0 %v2322
        %2735 = vmatprep.subr.mxu0 %v2327
        %2736 = vmatpush1.msra.mxu0 %v2326
        %2737 = vmatprep.subr.mxu0 %v2331
        %2738 = vmatpush1.msra.mxu0 %v2330
        %2739 = vmatprep.subr.mxu0 %v2335
        %2740 = vmatpush1.msra.mxu0 %v2334
        %2741 = vmatprep.subr.mxu0 %v2339
        %2742 = vmatpush1.msra.mxu0 %v2338
        %2743 = vmatprep.subr.mxu0 %v2343
        %2744 = vmatpush1.msra.mxu0 %v2342
        %2745 = vmatprep.subr.mxu0 %v2347
        %2746 = vmatpush1.msra.mxu0 %v2346
        %2747 = vmatprep.subr.mxu0 0.0
        %2748 = vmatpush1.msra.mxu0 0.0
        %2749 = vmatprep.subr.mxu0 0.0
        %2750 = vmatpush1.msra.mxu0 0.0
        %2751 = vmatprep.subr.mxu0 0.0
        %2752 = vmatpush1.msra.mxu0 0.0
        %2753 = vmatprep.subr.mxu0 0.0
        %2754 = vmatpush1.msra.mxu0 0.0
        %2755 = vmatprep.subr.mxu0 0.0
        %2756 = vmatpush1.msra.mxu0 0.0
        %2757 = vmatprep.subr.mxu0 0.0
        %2758 = vmatpush1.msra.mxu0 0.0
        %2759 = vmatprep.subr.mxu0 0.0
        %2760 = vmatpush1.msra.mxu0 0.0
        %2761 = vmatprep.subr.mxu0 0.0
        %2762 = vmatpush1.msra.mxu0 0.0
        %2763 = vmatprep.subr.mxu0 0.0
        %2764 = vmatpush1.msra.mxu0 0.0
        %2765 = vmatprep.subr.mxu0 0.0
        %2766 = vmatpush1.msra.mxu0 0.0
        %2767 = vmatprep.subr.mxu0 0.0
        %2768 = vmatpush1.msra.mxu0 0.0
        %2769 = vmatprep.subr.mxu0 0.0
        %2770 = vmatpush1.msra.mxu0 0.0
        %2771 = vmatprep.subr.mxu0 0.0
        %2772 = vmatpush1.msra.mxu0 0.0
        %2773 = vmatprep.subr.mxu0 0.0
        %2774 = vmatpush1.msra.mxu0 0.0
        %2775 = vmatprep.subr.mxu0 0.0
        %2776 = vmatpush1.msra.mxu0 0.0
        %2777 = vmatprep.subr.mxu0 0.0
        %2778 = vmatpush1.msra.mxu0 0.0
        %2779 = vmatprep.subr.mxu0 0.0
        %2780 = vmatpush1.msra.mxu0 0.0
        %2781 = vmatprep.subr.mxu0 0.0
        %2782 = vmatpush1.msra.mxu0 0.0
        %2783 = vmatprep.subr.mxu0 0.0
        %2784 = vmatpush1.msra.mxu0 0.0
        %2785 = vmatprep.subr.mxu0 0.0
        %2786 = vmatpush1.msra.mxu0 0.0
        %2787 = vmatprep.subr.mxu0 0.0
        %2788 = vmatpush1.msra.mxu0 0.0
        %2789 = vmatprep.subr.mxu0 0.0
        %2790 = vmatpush1.msra.mxu0 0.0
        %2791 = vmatprep.subr.mxu0 0.0
        %2792 = vmatpush1.msra.mxu0 0.0
        %2793 = vmatprep.subr.mxu0 0.0
        %2794 = vmatpush1.msra.mxu0 0.0
        %2795 = vmatprep.mubr.f32.mxu0 0.0
        %2796 = vmatmul.mubr.f32.gmra.mrb[0].mxu0 %v2374
        %v2797 = vpop.f32.mrb[0].mxu0
        %v2798 = vadd.f32 %v2727, %v2797
        %v2799 = vpop.f32.mrb[0].mxu0
        %v2800 = vadd.f32 %v2729, %v2799
        %2801 = vdwg.mxu0
        %2802 = vmatprep.subr.mxu0 %v1681
        %2803 = vmatpush1.msra.mxu0 %v1680
        %2804 = vmatprep.subr.mxu0 %v1685
        %2805 = vmatpush1.msra.mxu0 %v1684
        %2806 = vmatprep.subr.mxu0 %v1689
        %2807 = vmatpush1.msra.mxu0 %v1688
        %2808 = vmatprep.subr.mxu0 %v1693
        %2809 = vmatpush1.msra.mxu0 %v1692
        %2810 = vmatprep.subr.mxu0 %v1697
        %2811 = vmatpush1.msra.mxu0 %v1696
        %2812 = vmatprep.subr.mxu0 %v1701
        %2813 = vmatpush1.msra.mxu0 %v1700
        %2814 = vmatprep.subr.mxu0 %v1705
        %2815 = vmatpush1.msra.mxu0 %v1704
        %2816 = vmatprep.subr.mxu0 %v1709
        %2817 = vmatpush1.msra.mxu0 %v1708
        %2818 = vmatprep.subr.mxu0 %v1713
        %2819 = vmatpush1.msra.mxu0 %v1712
        %2820 = vmatprep.subr.mxu0 %v1717
        %2821 = vmatpush1.msra.mxu0 %v1716
        %2822 = vmatprep.subr.mxu0 %v1721
        %2823 = vmatpush1.msra.mxu0 %v1720
        %2824 = vmatprep.subr.mxu0 %v1725
        %2825 = vmatpush1.msra.mxu0 %v1724
        %2826 = vmatprep.subr.mxu0 %v1729
        %2827 = vmatpush1.msra.mxu0 %v1728
        %2828 = vmatprep.subr.mxu0 %v1733
        %2829 = vmatpush1.msra.mxu0 %v1732
        %2830 = vmatprep.subr.mxu0 %v1737
        %2831 = vmatpush1.msra.mxu0 %v1736
        %2832 = vmatprep.subr.mxu0 %v1741
        %2833 = vmatpush1.msra.mxu0 %v1740
        %2834 = vmatprep.subr.mxu0 %v1745
        %2835 = vmatpush1.msra.mxu0 %v1744
        %2836 = vmatprep.subr.mxu0 %v1749
        %2837 = vmatpush1.msra.mxu0 %v1748
        %2838 = vmatprep.subr.mxu0 %v1753
        %2839 = vmatpush1.msra.mxu0 %v1752
        %2840 = vmatprep.subr.mxu0 %v1757
        %2841 = vmatpush1.msra.mxu0 %v1756
        %2842 = vmatprep.subr.mxu0 %v1761
        %2843 = vmatpush1.msra.mxu0 %v1760
        %2844 = vmatprep.subr.mxu0 %v1765
        %2845 = vmatpush1.msra.mxu0 %v1764
        %2846 = vmatprep.subr.mxu0 %v1769
        %2847 = vmatpush1.msra.mxu0 %v1768
        %2848 = vmatprep.subr.mxu0 %v1773
        %2849 = vmatpush1.msra.mxu0 %v1772
        %2850 = vmatprep.subr.mxu0 %v1777
        %2851 = vmatpush1.msra.mxu0 %v1776
        %2852 = vmatprep.subr.mxu0 %v1781
        %2853 = vmatpush1.msra.mxu0 %v1780
        %2854 = vmatprep.subr.mxu0 %v1785
        %2855 = vmatpush1.msra.mxu0 %v1784
        %2856 = vmatprep.subr.mxu0 %v1789
        %2857 = vmatpush1.msra.mxu0 %v1788
        %2858 = vmatprep.subr.mxu0 %v1793
        %2859 = vmatpush1.msra.mxu0 %v1792
        %2860 = vmatprep.subr.mxu0 %v1797
        %2861 = vmatpush1.msra.mxu0 %v1796
        %2862 = vmatprep.subr.mxu0 %v1801
        %2863 = vmatpush1.msra.mxu0 %v1800
        %2864 = vmatprep.subr.mxu0 %v1805
        %2865 = vmatpush1.msra.mxu0 %v1804
        %2866 = vmatprep.mubr.f32.mxu0 %v1668
        %2867 = vmatmul.mubr.f32.gmra.mrb[0].mxu0 %v1667
        %v2868 = vpop.f32.mrb[0].mxu0
        %v2869 = vadd.f32 %v2363, %v2868
        %v2870 = vpop.f32.mrb[0].mxu0
        %v2871 = vadd.f32 %v2367, %v2870
        %2872 = vdwg.mxu0
        %2873 = vmatprep.subr.mxu0 %v1809
        %2874 = vmatpush1.msra.mxu0 %v1808
        %2875 = vmatprep.subr.mxu0 %v1813
        %2876 = vmatpush1.msra.mxu0 %v1812
        %2877 = vmatprep.subr.mxu0 %v1817
        %2878 = vmatpush1.msra.mxu0 %v1816
        %2879 = vmatprep.subr.mxu0 %v1821
        %2880 = vmatpush1.msra.mxu0 %v1820
        %2881 = vmatprep.subr.mxu0 %v1825
        %2882 = vmatpush1.msra.mxu0 %v1824
        %2883 = vmatprep.subr.mxu0 %v1829
        %2884 = vmatpush1.msra.mxu0 %v1828
        %2885 = vmatprep.subr.mxu0 %v1833
        %2886 = vmatpush1.msra.mxu0 %v1832
        %2887 = vmatprep.subr.mxu0 %v1837
        %2888 = vmatpush1.msra.mxu0 %v1836
        %2889 = vmatprep.subr.mxu0 %v1841
        %2890 = vmatpush1.msra.mxu0 %v1840
        %2891 = vmatprep.subr.mxu0 %v1845
        %2892 = vmatpush1.msra.mxu0 %v1844
        %2893 = vmatprep.subr.mxu0 %v1849
        %2894 = vmatpush1.msra.mxu0 %v1848
        %2895 = vmatprep.subr.mxu0 %v1853
        %2896 = vmatpush1.msra.mxu0 %v1852
        %2897 = vmatprep.subr.mxu0 %v1857
        %2898 = vmatpush1.msra.mxu0 %v1856
        %2899 = vmatprep.subr.mxu0 %v1861
        %2900 = vmatpush1.msra.mxu0 %v1860
        %2901 = vmatprep.subr.mxu0 %v1865
        %2902 = vmatpush1.msra.mxu0 %v1864
        %2903 = vmatprep.subr.mxu0 %v1869
        %2904 = vmatpush1.msra.mxu0 %v1868
        %2905 = vmatprep.subr.mxu0 %v1873
        %2906 = vmatpush1.msra.mxu0 %v1872
        %2907 = vmatprep.subr.mxu0 %v1877
        %2908 = vmatpush1.msra.mxu0 %v1876
        %2909 = vmatprep.subr.mxu0 %v1881
        %2910 = vmatpush1.msra.mxu0 %v1880
        %2911 = vmatprep.subr.mxu0 %v1885
        %2912 = vmatpush1.msra.mxu0 %v1884
        %2913 = vmatprep.subr.mxu0 %v1889
        %2914 = vmatpush1.msra.mxu0 %v1888
        %2915 = vmatprep.subr.mxu0 %v1893
        %2916 = vmatpush1.msra.mxu0 %v1892
        %2917 = vmatprep.subr.mxu0 %v1897
        %2918 = vmatpush1.msra.mxu0 %v1896
        %2919 = vmatprep.subr.mxu0 %v1901
        %2920 = vmatpush1.msra.mxu0 %v1900
        %2921 = vmatprep.subr.mxu0 %v1905
        %2922 = vmatpush1.msra.mxu0 %v1904
        %2923 = vmatprep.subr.mxu0 %v1909
        %2924 = vmatpush1.msra.mxu0 %v1908
        %2925 = vmatprep.subr.mxu0 %v1913
        %2926 = vmatpush1.msra.mxu0 %v1912
        %2927 = vmatprep.subr.mxu0 %v1917
        %2928 = vmatpush1.msra.mxu0 %v1916
        %2929 = vmatprep.subr.mxu0 %v1921
        %2930 = vmatpush1.msra.mxu0 %v1920
        %2931 = vmatprep.subr.mxu0 %v1925
        %2932 = vmatpush1.msra.mxu0 %v1924
        %2933 = vmatprep.subr.mxu0 %v1929
        %2934 = vmatpush1.msra.mxu0 %v1928
        %2935 = vmatprep.subr.mxu0 %v1933
        %2936 = vmatpush1.msra.mxu0 %v1932
        %2937 = vmatprep.mubr.f32.mxu0 %v1670
        %2938 = vmatmul.mubr.f32.gmra.mrb[0].mxu0 %v1669
        %v2939 = vpop.f32.mrb[0].mxu0
        %v2940 = vadd.f32 %v2869, %v2939
        %v2941 = vpop.f32.mrb[0].mxu0
        %v2942 = vadd.f32 %v2871, %v2941
        %2943 = vdwg.mxu0
        %2944 = vmatprep.subr.mxu0 %v1937
        %2945 = vmatpush1.msra.mxu0 %v1936
        %2946 = vmatprep.subr.mxu0 %v1941
        %2947 = vmatpush1.msra.mxu0 %v1940
        %2948 = vmatprep.subr.mxu0 %v1945
        %2949 = vmatpush1.msra.mxu0 %v1944
        %2950 = vmatprep.subr.mxu0 %v1949
        %2951 = vmatpush1.msra.mxu0 %v1948
        %2952 = vmatprep.subr.mxu0 %v1953
        %2953 = vmatpush1.msra.mxu0 %v1952
        %2954 = vmatprep.subr.mxu0 %v1957
        %2955 = vmatpush1.msra.mxu0 %v1956
        %2956 = vmatprep.subr.mxu0 %v1961
        %2957 = vmatpush1.msra.mxu0 %v1960
        %2958 = vmatprep.subr.mxu0 %v1965
        %2959 = vmatpush1.msra.mxu0 %v1964
        %2960 = vmatprep.subr.mxu0 %v1969
        %2961 = vmatpush1.msra.mxu0 %v1968
        %2962 = vmatprep.subr.mxu0 %v1973
        %2963 = vmatpush1.msra.mxu0 %v1972
        %2964 = vmatprep.subr.mxu0 %v1977
        %2965 = vmatpush1.msra.mxu0 %v1976
        %2966 = vmatprep.subr.mxu0 %v1981
        %2967 = vmatpush1.msra.mxu0 %v1980
        %2968 = vmatprep.subr.mxu0 %v1985
        %2969 = vmatpush1.msra.mxu0 %v1984
        %2970 = vmatprep.subr.mxu0 %v1989
        %2971 = vmatpush1.msra.mxu0 %v1988
        %2972 = vmatprep.subr.mxu0 %v1993
        %2973 = vmatpush1.msra.mxu0 %v1992
        %2974 = vmatprep.subr.mxu0 %v1997
        %2975 = vmatpush1.msra.mxu0 %v1996
        %2976 = vmatprep.subr.mxu0 %v2001
        %2977 = vmatpush1.msra.mxu0 %v2000
        %2978 = vmatprep.subr.mxu0 %v2005
        %2979 = vmatpush1.msra.mxu0 %v2004
        %2980 = vmatprep.subr.mxu0 %v2009
        %2981 = vmatpush1.msra.mxu0 %v2008
        %2982 = vmatprep.subr.mxu0 %v2013
        %2983 = vmatpush1.msra.mxu0 %v2012
        %2984 = vmatprep.subr.mxu0 %v2017
        %2985 = vmatpush1.msra.mxu0 %v2016
        %2986 = vmatprep.subr.mxu0 %v2021
        %2987 = vmatpush1.msra.mxu0 %v2020
        %2988 = vmatprep.subr.mxu0 %v2025
        %2989 = vmatpush1.msra.mxu0 %v2024
        %2990 = vmatprep.subr.mxu0 %v2029
        %2991 = vmatpush1.msra.mxu0 %v2028
        %2992 = vmatprep.subr.mxu0 %v2033
        %2993 = vmatpush1.msra.mxu0 %v2032
        %2994 = vmatprep.subr.mxu0 %v2037
        %2995 = vmatpush1.msra.mxu0 %v2036
        %2996 = vmatprep.subr.mxu0 %v2041
        %2997 = vmatpush1.msra.mxu0 %v2040
        %2998 = vmatprep.subr.mxu0 %v2045
        %2999 = vmatpush1.msra.mxu0 %v2044
        %3000 = vmatprep.subr.mxu0 %v2049
        %3001 = vmatpush1.msra.mxu0 %v2048
        %3002 = vmatprep.subr.mxu0 %v2053
        %3003 = vmatpush1.msra.mxu0 %v2052
        %3004 = vmatprep.subr.mxu0 %v2057
        %3005 = vmatpush1.msra.mxu0 %v2056
        %3006 = vmatprep.subr.mxu0 %v2061
        %3007 = vmatpush1.msra.mxu0 %v2060
        %3008 = vmatprep.mubr.f32.mxu0 %v1672
        %3009 = vmatmul.mubr.f32.gmra.mrb[0].mxu0 %v1671
        %v3010 = vpop.f32.mrb[0].mxu0
        %v3011 = vadd.f32 %v2940, %v3010
        %v3012 = vpop.f32.mrb[0].mxu0
        %v3013 = vadd.f32 %v2942, %v3012
        %3014 = vdwg.mxu0
        %3015 = vmatprep.subr.mxu0 %v2065
        %3016 = vmatpush1.msra.mxu0 %v2064
        %3017 = vmatprep.subr.mxu0 %v2069
        %3018 = vmatpush1.msra.mxu0 %v2068
        %3019 = vmatprep.subr.mxu0 %v2073
        %3020 = vmatpush1.msra.mxu0 %v2072
        %3021 = vmatprep.subr.mxu0 %v2077
        %3022 = vmatpush1.msra.mxu0 %v2076
        %3023 = vmatprep.subr.mxu0 %v2081
        %3024 = vmatpush1.msra.mxu0 %v2080
        %3025 = vmatprep.subr.mxu0 %v2085
        %3026 = vmatpush1.msra.mxu0 %v2084
        %3027 = vmatprep.subr.mxu0 %v2089
        %3028 = vmatpush1.msra.mxu0 %v2088
        %3029 = vmatprep.subr.mxu0 %v2093
        %3030 = vmatpush1.msra.mxu0 %v2092
        %3031 = vmatprep.subr.mxu0 %v2097
        %3032 = vmatpush1.msra.mxu0 %v2096
        %3033 = vmatprep.subr.mxu0 %v2101
        %3034 = vmatpush1.msra.mxu0 %v2100
        %3035 = vmatprep.subr.mxu0 %v2105
        %3036 = vmatpush1.msra.mxu0 %v2104
        %3037 = vmatprep.subr.mxu0 %v2109
        %3038 = vmatpush1.msra.mxu0 %v2108
        %3039 = vmatprep.subr.mxu0 %v2113
        %3040 = vmatpush1.msra.mxu0 %v2112
        %3041 = vmatprep.subr.mxu0 %v2117
        %3042 = vmatpush1.msra.mxu0 %v2116
        %3043 = vmatprep.subr.mxu0 %v2121
        %3044 = vmatpush1.msra.mxu0 %v2120
        %3045 = vmatprep.subr.mxu0 %v2125
        %3046 = vmatpush1.msra.mxu0 %v2124
        %3047 = vmatprep.subr.mxu0 %v2129
        %3048 = vmatpush1.msra.mxu0 %v2128
        %3049 = vmatprep.subr.mxu0 %v2133
        %3050 = vmatpush1.msra.mxu0 %v2132
        %3051 = vmatprep.subr.mxu0 %v2137
        %3052 = vmatpush1.msra.mxu0 %v2136
        %3053 = vmatprep.subr.mxu0 %v2141
        %3054 = vmatpush1.msra.mxu0 %v2140
        %3055 = vmatprep.subr.mxu0 %v2145
        %3056 = vmatpush1.msra.mxu0 %v2144
        %3057 = vmatprep.subr.mxu0 %v2149
        %3058 = vmatpush1.msra.mxu0 %v2148
        %3059 = vmatprep.subr.mxu0 %v2153
        %3060 = vmatpush1.msra.mxu0 %v2152
        %3061 = vmatprep.subr.mxu0 %v2157
        %3062 = vmatpush1.msra.mxu0 %v2156
        %3063 = vmatprep.subr.mxu0 %v2161
        %3064 = vmatpush1.msra.mxu0 %v2160
        %3065 = vmatprep.subr.mxu0 %v2165
        %3066 = vmatpush1.msra.mxu0 %v2164
        %3067 = vmatprep.subr.mxu0 %v2169
        %3068 = vmatpush1.msra.mxu0 %v2168
        %3069 = vmatprep.subr.mxu0 %v2173
        %3070 = vmatpush1.msra.mxu0 %v2172
        %3071 = vmatprep.subr.mxu0 %v2177
        %3072 = vmatpush1.msra.mxu0 %v2176
        %3073 = vmatprep.subr.mxu0 %v2181
        %3074 = vmatpush1.msra.mxu0 %v2180
        %3075 = vmatprep.subr.mxu0 %v2185
        %3076 = vmatpush1.msra.mxu0 %v2184
        %3077 = vmatprep.subr.mxu0 %v2189
        %3078 = vmatpush1.msra.mxu0 %v2188
        %3079 = vmatprep.mubr.f32.mxu0 %v1674
        %3080 = vmatmul.mubr.f32.gmra.mrb[0].mxu0 %v1673
        %v3081 = vpop.f32.mrb[0].mxu0
        %v3082 = vadd.f32 %v3011, %v3081
        %v3083 = vpop.f32.mrb[0].mxu0
        %v3084 = vadd.f32 %v3013, %v3083
        %3085 = vdwg.mxu0
        %3086 = vmatprep.subr.mxu0 %v2193
        %3087 = vmatpush1.msra.mxu0 %v2192
        %3088 = vmatprep.subr.mxu0 %v2197
        %3089 = vmatpush1.msra.mxu0 %v2196
        %3090 = vmatprep.subr.mxu0 %v2201
        %3091 = vmatpush1.msra.mxu0 %v2200
        %3092 = vmatprep.subr.mxu0 %v2205
        %3093 = vmatpush1.msra.mxu0 %v2204
        %3094 = vmatprep.subr.mxu0 %v2209
        %3095 = vmatpush1.msra.mxu0 %v2208
        %3096 = vmatprep.subr.mxu0 %v2213
        %3097 = vmatpush1.msra.mxu0 %v2212
        %3098 = vmatprep.subr.mxu0 %v2217
        %3099 = vmatpush1.msra.mxu0 %v2216
        %3100 = vmatprep.subr.mxu0 %v2221
        %3101 = vmatpush1.msra.mxu0 %v2220
        %3102 = vmatprep.subr.mxu0 %v2225
        %3103 = vmatpush1.msra.mxu0 %v2224
        %3104 = vmatprep.subr.mxu0 %v2229
        %3105 = vmatpush1.msra.mxu0 %v2228
        %3106 = vmatprep.subr.mxu0 %v2233
        %3107 = vmatpush1.msra.mxu0 %v2232
        %3108 = vmatprep.subr.mxu0 %v2237
        %3109 = vmatpush1.msra.mxu0 %v2236
        %3110 = vmatprep.subr.mxu0 %v2241
        %3111 = vmatpush1.msra.mxu0 %v2240
        %3112 = vmatprep.subr.mxu0 %v2245
        %3113 = vmatpush1.msra.mxu0 %v2244
        %3114 = vmatprep.subr.mxu0 %v2249
        %3115 = vmatpush1.msra.mxu0 %v2248
        %3116 = vmatprep.subr.mxu0 %v2253
        %3117 = vmatpush1.msra.mxu0 %v2252
        %3118 = vmatprep.subr.mxu0 %v2257
        %3119 = vmatpush1.msra.mxu0 %v2256
        %3120 = vmatprep.subr.mxu0 %v2261
        %3121 = vmatpush1.msra.mxu0 %v2260
        %3122 = vmatprep.subr.mxu0 %v2265
        %3123 = vmatpush1.msra.mxu0 %v2264
        %3124 = vmatprep.subr.mxu0 %v2269
        %3125 = vmatpush1.msra.mxu0 %v2268
        %3126 = vmatprep.subr.mxu0 %v2273
        %3127 = vmatpush1.msra.mxu0 %v2272
        %3128 = vmatprep.subr.mxu0 %v2277
        %3129 = vmatpush1.msra.mxu0 %v2276
        %3130 = vmatprep.subr.mxu0 %v2281
        %3131 = vmatpush1.msra.mxu0 %v2280
        %3132 = vmatprep.subr.mxu0 %v2285
        %3133 = vmatpush1.msra.mxu0 %v2284
        %3134 = vmatprep.subr.mxu0 %v2289
        %3135 = vmatpush1.msra.mxu0 %v2288
        %3136 = vmatprep.subr.mxu0 %v2293
        %3137 = vmatpush1.msra.mxu0 %v2292
        %3138 = vmatprep.subr.mxu0 %v2297
        %3139 = vmatpush1.msra.mxu0 %v2296
        %3140 = vmatprep.subr.mxu0 %v2301
        %3141 = vmatpush1.msra.mxu0 %v2300
        %3142 = vmatprep.subr.mxu0 %v2305
        %3143 = vmatpush1.msra.mxu0 %v2304
        %3144 = vmatprep.subr.mxu0 %v2309
        %3145 = vmatpush1.msra.mxu0 %v2308
        %3146 = vmatprep.subr.mxu0 %v2313
        %3147 = vmatpush1.msra.mxu0 %v2312
        %3148 = vmatprep.subr.mxu0 %v2317
        %3149 = vmatpush1.msra.mxu0 %v2316
        %3150 = vmatprep.mubr.f32.mxu0 %v1676
        %3151 = vmatmul.mubr.f32.gmra.mrb[0].mxu0 %v1675
        %v3152 = vpop.f32.mrb[0].mxu0
        %v3153 = vadd.f32 %v3082, %v3152
        %v3154 = vpop.f32.mrb[0].mxu0
        %v3155 = vadd.f32 %v3084, %v3154
        %3156 = vdwg.mxu0
        %3157 = vmatprep.subr.mxu0 %v2321
        %3158 = vmatpush1.msra.mxu0 %v2320
        %3159 = vmatprep.subr.mxu0 %v2325
        %3160 = vmatpush1.msra.mxu0 %v2324
        %3161 = vmatprep.subr.mxu0 %v2329
        %3162 = vmatpush1.msra.mxu0 %v2328
        %3163 = vmatprep.subr.mxu0 %v2333
        %3164 = vmatpush1.msra.mxu0 %v2332
        %3165 = vmatprep.subr.mxu0 %v2337
        %3166 = vmatpush1.msra.mxu0 %v2336
        %3167 = vmatprep.subr.mxu0 %v2341
        %3168 = vmatpush1.msra.mxu0 %v2340
        %3169 = vmatprep.subr.mxu0 %v2345
        %3170 = vmatpush1.msra.mxu0 %v2344
        %3171 = vmatprep.subr.mxu0 %v2349
        %3172 = vmatpush1.msra.mxu0 %v2348
        %3173 = vmatprep.subr.mxu0 0.0
        %3174 = vmatpush1.msra.mxu0 0.0
        %3175 = vmatprep.subr.mxu0 0.0
        %3176 = vmatpush1.msra.mxu0 0.0
        %3177 = vmatprep.subr.mxu0 0.0
        %3178 = vmatpush1.msra.mxu0 0.0
        %3179 = vmatprep.subr.mxu0 0.0
        %3180 = vmatpush1.msra.mxu0 0.0
        %3181 = vmatprep.subr.mxu0 0.0
        %3182 = vmatpush1.msra.mxu0 0.0
        %3183 = vmatprep.subr.mxu0 0.0
        %3184 = vmatpush1.msra.mxu0 0.0
        %3185 = vmatprep.subr.mxu0 0.0
        %3186 = vmatpush1.msra.mxu0 0.0
        %3187 = vmatprep.subr.mxu0 0.0
        %3188 = vmatpush1.msra.mxu0 0.0
        %3189 = vmatprep.subr.mxu0 0.0
        %3190 = vmatpush1.msra.mxu0 0.0
        %3191 = vmatprep.subr.mxu0 0.0
        %3192 = vmatpush1.msra.mxu0 0.0
        %3193 = vmatprep.subr.mxu0 0.0
        %3194 = vmatpush1.msra.mxu0 0.0
        %3195 = vmatprep.subr.mxu0 0.0
        %3196 = vmatpush1.msra.mxu0 0.0
        %3197 = vmatprep.subr.mxu0 0.0
        %3198 = vmatpush1.msra.mxu0 0.0
        %3199 = vmatprep.subr.mxu0 0.0
        %3200 = vmatpush1.msra.mxu0 0.0
        %3201 = vmatprep.subr.mxu0 0.0
        %3202 = vmatpush1.msra.mxu0 0.0
        %3203 = vmatprep.subr.mxu0 0.0
        %3204 = vmatpush1.msra.mxu0 0.0
        %3205 = vmatprep.subr.mxu0 0.0
        %3206 = vmatpush1.msra.mxu0 0.0
        %3207 = vmatprep.subr.mxu0 0.0
        %3208 = vmatpush1.msra.mxu0 0.0
        %3209 = vmatprep.subr.mxu0 0.0
        %3210 = vmatpush1.msra.mxu0 0.0
        %3211 = vmatprep.subr.mxu0 0.0
        %3212 = vmatpush1.msra.mxu0 0.0
        %3213 = vmatprep.subr.mxu0 0.0
        %3214 = vmatpush1.msra.mxu0 0.0
        %3215 = vmatprep.subr.mxu0 0.0
        %3216 = vmatpush1.msra.mxu0 0.0
        %3217 = vmatprep.subr.mxu0 0.0
        %3218 = vmatpush1.msra.mxu0 0.0
        %3219 = vmatprep.subr.mxu0 0.0
        %3220 = vmatpush1.msra.mxu0 0.0
        %3221 = vmatprep.mubr.f32.mxu0 0.0
        %3222 = vmatmul.mubr.f32.gmra.mrb[0].mxu0 %v2374
        %v3223 = vpop.f32.mrb[0].mxu0
        %v3224 = vadd.f32 %v3153, %v3223
        %v3225 = vpop.f32.mrb[0].mxu0
        %v3226 = vadd.f32 %v3155, %v3225
        %3227 = vdwg.mxu0
        %v3228 = vmax.f32 %v2798, 0.0
        %v3229 = vmax.f32 %v2800, 0.0
        %v3230 = vmax.f32 %v3224, 0.0
        %v3231 = vmax.f32 %v3226, 0.0
        %v3232 = vld [vmem:[#allocation2] sm:$0xff]
        %v3233 = vld [vmem:[%s1655] sm:$0xff]
        %v3234 = vld [vmem:[%s1655 + $0x8] sm:$0xff]
        %v3235 = vld [vmem:[%s1655 + $0x10] sm:$0xff]
        %v3236 = vld [vmem:[%s1655 + $0x18] sm:$0xff]
        %v3237 = vld [vmem:[%s1655 + $0x20] sm:$0xff]
        %v3238 = vld [vmem:[%s1655 + $0x28] sm:$0xff]
        %v3239 = vld [vmem:[%s1655 + $0x30] sm:$0xff]
        %v3240 = vld [vmem:[%s1655 + $0x38] sm:$0xff]
        %v3241 = vld [vmem:[%s1655 + $0x40] sm:$0xff]
        %v3242 = vld [vmem:[%s1655 + $0x48] sm:$0xff]
        %v3243 = vld [vmem:[%s1655 + $0x50] sm:$0xff]
        %v3244 = vld [vmem:[%s1655 + $0x58] sm:$0xff]
        %v3245 = vld [vmem:[%s1655 + $0x60] sm:$0xff]
        %v3246 = vld [vmem:[%s1655 + $0x68] sm:$0xff]
        %v3247 = vld [vmem:[%s1655 + $0x70] sm:$0xff]
        %v3248 = vld [vmem:[%s1655 + $0x78] sm:$0xff]
        %v3249 = vld [vmem:[%s1655 + $0x80] sm:$0xff]
        %v3250 = vld [vmem:[%s1655 + $0x88] sm:$0xff]
        %v3251 = vld [vmem:[%s1655 + $0x90] sm:$0xff]
        %v3252 = vld [vmem:[%s1655 + $0x98] sm:$0xff]
        %v3253 = vld [vmem:[%s1655 + $0xa0] sm:$0xff]
        %v3254 = vld [vmem:[%s1655 + $0xa8] sm:$0xff]
        %v3255 = vld [vmem:[%s1655 + $0xb0] sm:$0xff]
        %v3256 = vld [vmem:[%s1655 + $0xb8] sm:$0xff]
        %v3257 = vld [vmem:[%s1655 + $0xc0] sm:$0xff]
        %v3258 = vld [vmem:[%s1655 + $0xc8] sm:$0xff]
        %v3259 = vld [vmem:[%s1655 + $0xd0] sm:$0xff]
        %v3260 = vld [vmem:[%s1655 + $0xd8] sm:$0xff]
        %v3261 = vld [vmem:[%s1655 + $0xe0] sm:$0xff]
        %v3262 = vld [vmem:[%s1655 + $0xe8] sm:$0xff]
        %v3263 = vld [vmem:[%s1655 + $0xf0] sm:$0xff]
        %v3264 = vld [vmem:[%s1655 + $0xf8] sm:$0xff]
        %v3265 = vld [vmem:[%s1655 + $0x100] sm:$0xff]
        %v3266 = vld [vmem:[%s1655 + $0x108] sm:$0xff]
        %v3267 = vld [vmem:[%s1655 + $0x110] sm:$0xff]
        %v3268 = vld [vmem:[%s1655 + $0x118] sm:$0xff]
        %v3269 = vld [vmem:[%s1655 + $0x120] sm:$0xff]
        %v3270 = vld [vmem:[%s1655 + $0x128] sm:$0xff]
        %v3271 = vld [vmem:[%s1655 + $0x130] sm:$0xff]
        %v3272 = vld [vmem:[%s1655 + $0x138] sm:$0xff]
        %v3273 = vld [vmem:[%s1655 + $0x140] sm:$0xff]
        %v3274 = vld [vmem:[%s1655 + $0x148] sm:$0xff]
        %v3275 = vld [vmem:[%s1655 + $0x150] sm:$0xff]
        %v3276 = vld [vmem:[%s1655 + $0x158] sm:$0xff]
        %v3277 = vld [vmem:[%s1655 + $0x160] sm:$0xff]
        %v3278 = vld [vmem:[%s1655 + $0x168] sm:$0xff]
        %v3279 = vld [vmem:[%s1655 + $0x170] sm:$0xff]
        %v3280 = vld [vmem:[%s1655 + $0x178] sm:$0xff]
        %v3281 = vld [vmem:[%s1655 + $0x180] sm:$0xff]
        %v3282 = vld [vmem:[%s1655 + $0x188] sm:$0xff]
        %v3283 = vld [vmem:[%s1655 + $0x190] sm:$0xff]
        %v3284 = vld [vmem:[%s1655 + $0x198] sm:$0xff]
        %v3285 = vld [vmem:[%s1655 + $0x1a0] sm:$0xff]
        %v3286 = vld [vmem:[%s1655 + $0x1a8] sm:$0xff]
        %v3287 = vld [vmem:[%s1655 + $0x1b0] sm:$0xff]
        %v3288 = vld [vmem:[%s1655 + $0x1b8] sm:$0xff]
        %v3289 = vld [vmem:[%s1655 + $0x1c0] sm:$0xff]
        %v3290 = vld [vmem:[%s1655 + $0x1c8] sm:$0xff]
        %v3291 = vld [vmem:[%s1655 + $0x1d0] sm:$0xff]
        %v3292 = vld [vmem:[%s1655 + $0x1d8] sm:$0xff]
        %v3293 = vld [vmem:[%s1655 + $0x1e0] sm:$0xff]
        %v3294 = vld [vmem:[%s1655 + $0x1e8] sm:$0xff]
        %v3295 = vld [vmem:[%s1655 + $0x1f0] sm:$0xff]
        %v3296 = vld [vmem:[%s1655 + $0x1f8] sm:$0xff]
        %3297 = vmatprep.subr.mxu0 0.0
        %3298 = vmatpush1.msra.mxu0 %v3233
        %3299 = vmatprep.subr.mxu0 0.0
        %3300 = vmatpush1.msra.mxu0 %v3234
        %3301 = vmatprep.subr.mxu0 0.0
        %3302 = vmatpush1.msra.mxu0 %v3235
        %3303 = vmatprep.subr.mxu0 0.0
        %3304 = vmatpush1.msra.mxu0 %v3236
        %3305 = vmatprep.subr.mxu0 0.0
        %3306 = vmatpush1.msra.mxu0 %v3237
        %3307 = vmatprep.subr.mxu0 0.0
        %3308 = vmatpush1.msra.mxu0 %v3238
        %3309 = vmatprep.subr.mxu0 0.0
        %3310 = vmatpush1.msra.mxu0 %v3239
        %3311 = vmatprep.subr.mxu0 0.0
        %3312 = vmatpush1.msra.mxu0 %v3240
        %3313 = vmatprep.subr.mxu0 0.0
        %3314 = vmatpush1.msra.mxu0 %v3241
        %3315 = vmatprep.subr.mxu0 0.0
        %3316 = vmatpush1.msra.mxu0 %v3242
        %3317 = vmatprep.subr.mxu0 0.0
        %3318 = vmatpush1.msra.mxu0 %v3243
        %3319 = vmatprep.subr.mxu0 0.0
        %3320 = vmatpush1.msra.mxu0 %v3244
        %3321 = vmatprep.subr.mxu0 0.0
        %3322 = vmatpush1.msra.mxu0 %v3245
        %3323 = vmatprep.subr.mxu0 0.0
        %3324 = vmatpush1.msra.mxu0 %v3246
        %3325 = vmatprep.subr.mxu0 0.0
        %3326 = vmatpush1.msra.mxu0 %v3247
        %3327 = vmatprep.subr.mxu0 0.0
        %3328 = vmatpush1.msra.mxu0 %v3248
        %3329 = vmatprep.subr.mxu0 0.0
        %3330 = vmatpush1.msra.mxu0 %v3249
        %3331 = vmatprep.subr.mxu0 0.0
        %3332 = vmatpush1.msra.mxu0 %v3250
        %3333 = vmatprep.subr.mxu0 0.0
        %3334 = vmatpush1.msra.mxu0 %v3251
        %3335 = vmatprep.subr.mxu0 0.0
        %3336 = vmatpush1.msra.mxu0 %v3252
        %3337 = vmatprep.subr.mxu0 0.0
        %3338 = vmatpush1.msra.mxu0 %v3253
        %3339 = vmatprep.subr.mxu0 0.0
        %3340 = vmatpush1.msra.mxu0 %v3254
        %3341 = vmatprep.subr.mxu0 0.0
        %3342 = vmatpush1.msra.mxu0 %v3255
        %3343 = vmatprep.subr.mxu0 0.0
        %3344 = vmatpush1.msra.mxu0 %v3256
        %3345 = vmatprep.subr.mxu0 0.0
        %3346 = vmatpush1.msra.mxu0 %v3257
        %3347 = vmatprep.subr.mxu0 0.0
        %3348 = vmatpush1.msra.mxu0 %v3258
        %3349 = vmatprep.subr.mxu0 0.0
        %3350 = vmatpush1.msra.mxu0 %v3259
        %3351 = vmatprep.subr.mxu0 0.0
        %3352 = vmatpush1.msra.mxu0 %v3260
        %3353 = vmatprep.subr.mxu0 0.0
        %3354 = vmatpush1.msra.mxu0 %v3261
        %3355 = vmatprep.subr.mxu0 0.0
        %3356 = vmatpush1.msra.mxu0 %v3262
        %3357 = vmatprep.subr.mxu0 0.0
        %3358 = vmatpush1.msra.mxu0 %v3263
        %3359 = vmatprep.subr.mxu0 0.0
        %3360 = vmatpush1.msra.mxu0 %v3264
        %3361 = vmatprep.mubr.f32.mxu0 %v3229
        %3362 = vmatmul.mubr.f32.gmra.mrb[0].mxu0 %v3228
        %v3363 = vpop.f32.mrb[0].mxu0
        %v3364 = vadd.f32 0.0, %v3363
        %v3365 = vpop.f32.mrb[0].mxu0
        %3366 = vdwg.mxu0
        %3367 = vmatprep.subr.mxu0 0.0
        %3368 = vmatpush1.msra.mxu0 %v3265
        %3369 = vmatprep.subr.mxu0 0.0
        %3370 = vmatpush1.msra.mxu0 %v3266
        %3371 = vmatprep.subr.mxu0 0.0
        %3372 = vmatpush1.msra.mxu0 %v3267
        %3373 = vmatprep.subr.mxu0 0.0
        %3374 = vmatpush1.msra.mxu0 %v3268
        %3375 = vmatprep.subr.mxu0 0.0
        %3376 = vmatpush1.msra.mxu0 %v3269
        %3377 = vmatprep.subr.mxu0 0.0
        %3378 = vmatpush1.msra.mxu0 %v3270
        %3379 = vmatprep.subr.mxu0 0.0
        %3380 = vmatpush1.msra.mxu0 %v3271
        %3381 = vmatprep.subr.mxu0 0.0
        %3382 = vmatpush1.msra.mxu0 %v3272
        %3383 = vmatprep.subr.mxu0 0.0
        %3384 = vmatpush1.msra.mxu0 %v3273
        %3385 = vmatprep.subr.mxu0 0.0
        %3386 = vmatpush1.msra.mxu0 %v3274
        %3387 = vmatprep.subr.mxu0 0.0
        %3388 = vmatpush1.msra.mxu0 %v3275
        %3389 = vmatprep.subr.mxu0 0.0
        %3390 = vmatpush1.msra.mxu0 %v3276
        %3391 = vmatprep.subr.mxu0 0.0
        %3392 = vmatpush1.msra.mxu0 %v3277
        %3393 = vmatprep.subr.mxu0 0.0
        %3394 = vmatpush1.msra.mxu0 %v3278
        %3395 = vmatprep.subr.mxu0 0.0
        %3396 = vmatpush1.msra.mxu0 %v3279
        %3397 = vmatprep.subr.mxu0 0.0
        %3398 = vmatpush1.msra.mxu0 %v3280
        %3399 = vmatprep.subr.mxu0 0.0
        %3400 = vmatpush1.msra.mxu0 %v3281
        %3401 = vmatprep.subr.mxu0 0.0
        %3402 = vmatpush1.msra.mxu0 %v3282
        %3403 = vmatprep.subr.mxu0 0.0
        %3404 = vmatpush1.msra.mxu0 %v3283
        %3405 = vmatprep.subr.mxu0 0.0
        %3406 = vmatpush1.msra.mxu0 %v3284
        %3407 = vmatprep.subr.mxu0 0.0
        %3408 = vmatpush1.msra.mxu0 %v3285
        %3409 = vmatprep.subr.mxu0 0.0
        %3410 = vmatpush1.msra.mxu0 %v3286
        %3411 = vmatprep.subr.mxu0 0.0
        %3412 = vmatpush1.msra.mxu0 %v3287
        %3413 = vmatprep.subr.mxu0 0.0
        %3414 = vmatpush1.msra.mxu0 %v3288
        %3415 = vmatprep.subr.mxu0 0.0
        %3416 = vmatpush1.msra.mxu0 %v3289
        %3417 = vmatprep.subr.mxu0 0.0
        %3418 = vmatpush1.msra.mxu0 %v3290
        %3419 = vmatprep.subr.mxu0 0.0
        %3420 = vmatpush1.msra.mxu0 %v3291
        %3421 = vmatprep.subr.mxu0 0.0
        %3422 = vmatpush1.msra.mxu0 %v3292
        %3423 = vmatprep.subr.mxu0 0.0
        %3424 = vmatpush1.msra.mxu0 %v3293
        %3425 = vmatprep.subr.mxu0 0.0
        %3426 = vmatpush1.msra.mxu0 %v3294
        %3427 = vmatprep.subr.mxu0 0.0
        %3428 = vmatpush1.msra.mxu0 %v3295
        %3429 = vmatprep.subr.mxu0 0.0
        %3430 = vmatpush1.msra.mxu0 %v3296
        %3431 = vmatprep.mubr.f32.mxu0 %v3231
        %3432 = vmatmul.mubr.f32.gmra.mrb[0].mxu0 %v3230
        %v3433 = vpop.f32.mrb[0].mxu0
        %v3434 = vadd.f32 %v3364, %v3433
        %v3435 = vpop.f32.mrb[0].mxu0
        %3436 = vdwg.mxu0
        %v3437 = vadd.f32 %v3232, %v3434
        %vm3438 = vcmask 7168
        %3439 = vst.msk [vmem:[#allocation2] sm:$0xff] %vm3438, %v3437
        %p3440 = scmp.eq.s32.totalorder %s23, 1
        // Predicated region
        $region68: #{weigh_estimator6_fwd.3} parent=58 // pred_check
          %p3441 = pneg %p3440
        $region69: #{weigh_estimator6_fwd.3} parent=58 // pred_check_branch
          %3443 = sbr.rel (%p3441) target = $region71
        $region70: #{weigh_estimator6_fwd.3} parent=58 // pred_region
          %v3444 = vld [vmem:[#allocation2] sm:$0xff]
          %v3445 = vld [vmem:[#allocation3] sm:$0x1]
          %v3447 = vlaneseq
          %v3448 = vshrl.u32 %v3447, 7
          %v3449 = vsub.s32 0, %v3448
          %v3450 = vrot.slane %v3445, %v3449
          %v3452 = vadd.f32 %v3444, %v3450
          %v3453 = vsub.f32 0.0, %v3452
          %v3454 = vmul.f32 %v3453, 1.442695
          %v3455 = vpow.pop %v3454
          %v3456 = vadd.f32 %v3455, 1.0
          %v3457 = vrcp.pop %v3456
          %v3458 = vmul.f32 1.0, %v3457
          %3459 = vst.msk [vmem:[%s1660] sm:$0xff] %vm3438, %v3458
        $region71: #{weigh_estimator6_fwd.3} parent=58 // pred_fallthru
          _
        %p3460 = scmp.lt.s32.totalorder %s22, 0
        %s3461 = scalar_select %p3460, %s22, 0
        %s3462 = smul.addr %s3461, 8
        %s3463 = scalar_lea.vmem %s5, %s3462
        // Predicated region
        $region72: #{weigh_estimator6_fwd.3} parent=58 // pred_check
          %p3464 = pneg %p173
        $region73: #{weigh_estimator6_fwd.3} parent=58 // pred_check_branch
          %3466 = sbr.rel (%p3464) target = $region75
        $region74: #{weigh_estimator6_fwd.3} parent=58 // pred_region
          _
        $region75: #{weigh_estimator6_fwd.3} parent=58 // pred_fallthru
          _
        // Predicated region
        $region76: #{weigh_estimator6_fwd.3} parent=58 // pred_check
          %p3467 = pneg %p173
        $region77: #{weigh_estimator6_fwd.3} parent=58 // pred_check_branch
          %3469 = sbr.rel (%p3467) target = $region79
        $region78: #{weigh_estimator6_fwd.3} parent=58 // pred_region
          %p3470 = scmp.lt.s32.totalorder %s22, 0
          %s3471 = scalar_select %p3470, %s22, 0
          %s3472 = smul.addr %s3471, 8
          %s3473 = scalar_lea.vmem %s5, %s3472
        $region79: #{weigh_estimator6_fwd.3} parent=58 // pred_fallthru
          _
      $region59: #{weigh_estimator6_fwd.3} parent=5 // pred_fallthru
        _
      %p3474 = scmp.le.s32.totalorder 2, %s13
      // Predicated region
      $region80: #{weigh_estimator6_fwd.3} parent=5 // pred_check
        %p3475 = pneg %p3474
      $region81: #{weigh_estimator6_fwd.3} parent=5 // pred_check_branch
        %3477 = sbr.rel (%p3475) target = $region83
      $region82: #{weigh_estimator6_fwd.3} parent=5 // pred_region
        %s3478 = ssub.s32 %s13, 2
      $region83: #{weigh_estimator6_fwd.3} parent=5 // pred_fallthru
        _
    $region6: #{weigh_estimator6_fwd.3} parent=1 // loop_footer
      %s17 = sadd.s32 1, %s13
    $region7: #{weigh_estimator6_fwd.3} parent=1 // loop_footer_branch
      %12 = sbr.rel target = $region3
    $region8: #{weigh_estimator6_fwd.3} parent=1 // loop_exit
      _

</llo_original>
